<compile_context>
chip_gen: v7x
topology: tpu7x:2x2x1
jax: 0.10.0
libtpu: 0.0.40
codegen_flags: <defaults>
</compile_context>

<pallas_src>
import math

import jax
import jax.numpy as jnp
from jax.experimental import pallas as pl
from jax.experimental.pallas import tpu as pltpu

# ---- model hyperparameters (small-shape version of the module) -------------
BATCH = 2          # module uses 32; small shapes per instructions
D_MODEL = 96
H = 8
D_K = D_MODEL // H   # 12
D_V = D_MODEL // H   # 12
SEQ = 16

_INV_SQRT_DK = 1.0 / math.sqrt(D_K)


def _self_attention_kernel(x_ref, wq_ref, wk_ref, wv_ref, wo_ref, o_ref):
    bblk, S, D = x_ref.shape
    _, nh, dk, _ = wq_ref.shape
    dv = wv_ref.shape[2]
    n_out = wo_ref.shape[3]
    BH = bblk * nh

    f32 = jnp.float32
    bf16 = jnp.bfloat16

    # x^T block: (bblk, S, D) bf16.  Replicate across heads along a *leading*
    # axis (pure tile copies, no relayout) so every contraction below is a
    # plain batched 3-D dot_general over the merged (batch, head) axis.
    x = x_ref[...]
    xh = jnp.broadcast_to(x[:, None], (bblk, nh, S, D)).reshape(BH, S, D)

    wq = wq_ref[...].reshape(BH, dk, D)
    wk = wk_ref[...].reshape(BH, dk, D)
    wv = wv_ref[...].reshape(BH, dv, D)
    wo = wo_ref[...].reshape(BH, dv, n_out)          # wo[x, v, o]

    # Q/K/V projections: contract over d_model (bf16 x bf16 -> f32 accumulate).
    q = jnp.einsum('xsd,xkd->xsk', xh, wq, preferred_element_type=f32)   # (BH,S,dk)
    k = jnp.einsum('xsd,xkd->xsk', xh, wk, preferred_element_type=f32)   # (BH,S,dk)
    v = jnp.einsum('xsd,xvd->xsv', xh, wv, preferred_element_type=f32)   # (BH,S,dv)

    # Scores stored transposed: st[x, j, i] = <q_i, k_j> / sqrt(d_k), so the
    # softmax axis (the *query* index i, i.e. torch F.softmax(dim=1)) is the
    # minor/lane axis.  Kept in f32 for softmax accuracy (and v5e VPU/EUP).
    st = jnp.einsum('xjc,xic->xji', k, q, preferred_element_type=f32) * _INV_SQRT_DK
    st = st - jnp.max(st, axis=-1, keepdims=True)
    p = jnp.exp(st)
    p = p * pl.reciprocal(jnp.sum(p, axis=-1, keepdims=True), approx=True)

    # head^T[x, j, v] = sum_i p[x, i, j] * V[x, v, i]
    ht = jnp.einsum('xji,xiv->xjv', p.astype(bf16), v.astype(bf16),
                    preferred_element_type=f32)                          # (BH,S,dv)

    # Output projection: per-head partial (contract d_v), then reduce over the
    # head axis along the leading dim (replaces the 12-row-axis concat).
    part = jnp.einsum('xjv,xvo->xjo', ht.astype(bf16), wo,
                      preferred_element_type=f32)                        # (BH,S,n_out)
    o_ref[...] = part.reshape(bblk, nh, S, n_out).sum(axis=1)


@jax.jit
def self_attention(x, wq, wk, wv, wo):
    """x: (B, d_model, S);  wq/wk/wv: (B, H, d_k, d_model);  wo: (B, h*d_v, d_model).
    Returns (B, h*d_v(=d_model), S) float32, matching the PyTorch module output."""
    B, dm, S = x.shape
    assert dm == D_MODEL
    n_out = wo.shape[1]                     # h*d_v (== d_model here)

    # Lane-dense working layout + bf16 at the HBM boundary (halves weight DMA).
    xT = jnp.swapaxes(x, 1, 2).astype(jnp.bfloat16)                       # (B,S,D)
    wq_b = wq.astype(jnp.bfloat16)                                        # (B,H,dk,D)
    wk_b = wk.astype(jnp.bfloat16)
    wv_b = wv.astype(jnp.bfloat16)
    # torch bmm(Wo, head) contracts Wo's last (d_model-sized) axis against the
    # concatenated (head, d_v) axis of `head`; re-layout it head-major:
    #   woT[b, h, v, o] = Wo[b, o, h*d_v + v]
    woT = jnp.swapaxes(wo, 1, 2).reshape(B, H, D_V, n_out).astype(jnp.bfloat16)

    # Batch block per grid step: amortize the ~0.35us/step overhead while keeping
    # at least 2 grid steps so both v7x TensorCores get work.
    bblk = 1
    if B > 2:
        for cand in (8, 4, 2):
            if B % cand == 0 and B // cand >= 2:
                bblk = cand
                break

    def spec(*shape):
        nd = len(shape)
        return pl.BlockSpec((bblk,) + shape, lambda b, _n=nd: (b,) + (0,) * _n)

    out_t = pl.pallas_call(
        _self_attention_kernel,
        out_shape=jax.ShapeDtypeStruct((B, S, n_out), jnp.float32),
        grid_spec=pltpu.PrefetchScalarGridSpec(
            num_scalar_prefetch=0,
            grid=(B // bblk,),
            in_specs=[
                spec(S, dm),             # x^T           (lane dim = d_model)
                spec(H, D_K, dm),        # Wq  (head-leading, tile-aligned views)
                spec(H, D_K, dm),        # Wk
                spec(H, D_V, dm),        # Wv
                spec(H, D_V, n_out),     # Wo^T (head-leading)
            ],
            out_specs=spec(S, n_out),
        ),
        compiler_params=pltpu.CompilerParams(
            dimension_semantics=("parallel",)),
    )(xT, wq_b, wk_b, wv_b, woT)

    return jnp.swapaxes(out_t, 1, 2)        # back to (B, d_model, S)


# ---- pure-JAX reference (mirrors the PyTorch forward exactly, in f32) -------
def reference(x, wq4, wk4, wv4, wo):
    B, _, S = x.shape
    Q = jnp.einsum('bhkd,bds->bhks', wq4, x)
    K = jnp.einsum('bhkd,bds->bhks', wk4, x)
    V = jnp.einsum('bhkd,bds->bhks', wv4, x)
    s = jnp.einsum('bhki,bhkj->bhij', Q, K) / math.sqrt(D_K)
    p = jax.nn.softmax(s, axis=2)                  # == torch F.softmax(dim=1) per head
    head = jnp.einsum('bhvi,bhij->bhvj', V, p)     # (B, H, d_v, S)
    head = head.reshape(B, H * D_V, S)             # cat(heads, dim=1)
    return jnp.einsum('boc,bcs->bos', wo, head)    # bmm(Wo, head)


def _xavier_normal(key, shape, fan_in, fan_out):
    std = math.sqrt(2.0 / (fan_in + fan_out))
    return std * jax.random.normal(key, shape, dtype=jnp.float32)


if __name__ == "__main__":
    key = jax.random.PRNGKey(0)
    kx, kq, kk, kv, ko = jax.random.split(key, 5)

    x = jax.random.normal(kx, (BATCH, D_MODEL, SEQ), dtype=jnp.float32)

    # Per-head projection weights with the head as an explicit leading axis.
    wq = _xavier_normal(kq, (BATCH, H, D_K, D_MODEL), D_MODEL, D_K)
    wk = _xavier_normal(kk, (BATCH, H, D_K, D_MODEL), D_MODEL, D_K)
    wv = _xavier_normal(kv, (BATCH, H, D_V, D_MODEL), D_MODEL, D_V)
    # Wo exactly as in the PyTorch module: (B, h*d_v, d_model).
    wo = _xavier_normal(ko, (BATCH, H * D_V, D_MODEL), D_MODEL, H * D_V)

    out = self_attention(x, wq, wk, wv, wo)
    out = jax.block_until_ready(out)
    assert out.shape == (BATCH, D_MODEL, SEQ)

    # Compare against an f32 reference computed from the same bf16-rounded inputs
    # the kernel consumes (the bf16 boundary cast is a deliberate optimization).
    bf = lambda a: a.astype(jnp.bfloat16).astype(jnp.float32)
    ref = reference(bf(x), bf(wq), bf(wk), bf(wv), bf(wo))

    max_err = jnp.max(jnp.abs(out - ref))
    assert jnp.allclose(out, ref, atol=3e-2, rtol=3e-2), f"max abs err {max_err}"
    print("KERNEL_OK")
</pallas_src>

<mosaic_0001>
module attributes {stable_mosaic.version = 11 : i64} {
  func.func @_self_attention_kernel(%arg0: i32, %arg1: memref<1x16x96xbf16, #tpu.memory_space<vmem>>, %arg2: memref<1x8x12x96xbf16, #tpu.memory_space<vmem>>, %arg3: memref<1x8x12x96xbf16, #tpu.memory_space<vmem>>, %arg4: memref<1x8x12x96xbf16, #tpu.memory_space<vmem>>, %arg5: memref<1x8x12x96xbf16, #tpu.memory_space<vmem>>, %arg6: memref<1x16x96xf32, #tpu.memory_space<vmem>>) attributes {dimension_semantics = [#tpu.dimension_semantics<parallel>], iteration_bounds = array<i64: 2>, scalar_prefetch = 0 : i64, scratch_operands = 0 : i64, tpu.core_type = #tpu.core_type<tc>, window_params = [{transform_indices = @transform_0, window_bounds = array<i64: 1, 16, 96>}, {transform_indices = @transform_1, window_bounds = array<i64: 1, 8, 12, 96>}, {transform_indices = @transform_2, window_bounds = array<i64: 1, 8, 12, 96>}, {transform_indices = @transform_3, window_bounds = array<i64: 1, 8, 12, 96>}, {transform_indices = @transform_4, window_bounds = array<i64: 1, 8, 12, 96>}, {transform_indices = @transform_5, window_bounds = array<i64: 1, 16, 96>}]} {
    %c0 = arith.constant 0 : index
    %c0_0 = arith.constant 0 : index
    %c0_1 = arith.constant 0 : index
    %0 = vector.load %arg1[%c0, %c0_0, %c0_1] : memref<1x16x96xbf16, #tpu.memory_space<vmem>>, vector<1x16x96xbf16>
    %1 = vector.shape_cast %0 : vector<1x16x96xbf16> to vector<1x1x16x96xbf16>
    %2 = vector.shape_cast %1 : vector<1x1x16x96xbf16> to vector<1x1x16x96xbf16>
    %3 = vector.broadcast %2 : vector<1x1x16x96xbf16> to vector<1x8x16x96xbf16>
    %4 = vector.shape_cast %3 : vector<1x8x16x96xbf16> to vector<8x16x96xbf16>
    %c0_2 = arith.constant 0 : index
    %c0_3 = arith.constant 0 : index
    %c0_4 = arith.constant 0 : index
    %c0_5 = arith.constant 0 : index
    %5 = vector.load %arg2[%c0_2, %c0_3, %c0_4, %c0_5] : memref<1x8x12x96xbf16, #tpu.memory_space<vmem>>, vector<1x8x12x96xbf16>
    %6 = vector.shape_cast %5 : vector<1x8x12x96xbf16> to vector<8x12x96xbf16>
    %c0_6 = arith.constant 0 : index
    %c0_7 = arith.constant 0 : index
    %c0_8 = arith.constant 0 : index
    %c0_9 = arith.constant 0 : index
    %7 = vector.load %arg3[%c0_6, %c0_7, %c0_8, %c0_9] : memref<1x8x12x96xbf16, #tpu.memory_space<vmem>>, vector<1x8x12x96xbf16>
    %8 = vector.shape_cast %7 : vector<1x8x12x96xbf16> to vector<8x12x96xbf16>
    %c0_10 = arith.constant 0 : index
    %c0_11 = arith.constant 0 : index
    %c0_12 = arith.constant 0 : index
    %c0_13 = arith.constant 0 : index
    %9 = vector.load %arg4[%c0_10, %c0_11, %c0_12, %c0_13] : memref<1x8x12x96xbf16, #tpu.memory_space<vmem>>, vector<1x8x12x96xbf16>
    %10 = vector.shape_cast %9 : vector<1x8x12x96xbf16> to vector<8x12x96xbf16>
    %c0_14 = arith.constant 0 : index
    %c0_15 = arith.constant 0 : index
    %c0_16 = arith.constant 0 : index
    %c0_17 = arith.constant 0 : index
    %11 = vector.load %arg5[%c0_14, %c0_15, %c0_16, %c0_17] : memref<1x8x12x96xbf16, #tpu.memory_space<vmem>>, vector<1x8x12x96xbf16>
    %12 = vector.shape_cast %11 : vector<1x8x12x96xbf16> to vector<8x12x96xbf16>
    "tpu.trace_start"() <{level = 10 : i32, message = "xsd,xkd->xsk"}> : () -> ()
    %cst = arith.constant dense<0.000000e+00> : vector<8x16x12xf32>
    %13 = tpu.matmul %4, %6, %cst {dimension_numbers = #tpu.dot_dimension_numbers<[2], [2], [1], [1], [0, 0, 0, 1, 1, 1], [0], [0]>} : vector<8x16x96xbf16>, vector<8x12x96xbf16>, vector<8x16x12xf32> -> vector<8x16x12xf32>
    %cst_18 = arith.constant dense<0.000000e+00> : vector<8x16x12xf32>
    %14 = tpu.matmul %4, %8, %cst_18 {dimension_numbers = #tpu.dot_dimension_numbers<[2], [2], [1], [1], [0, 0, 0, 1, 1, 1], [0], [0]>} : vector<8x16x96xbf16>, vector<8x12x96xbf16>, vector<8x16x12xf32> -> vector<8x16x12xf32>
    "tpu.trace_stop"() : () -> ()
    "tpu.trace_start"() <{level = 10 : i32, message = "xsd,xvd->xsv"}> : () -> ()
    %cst_19 = arith.constant dense<0.000000e+00> : vector<8x16x12xf32>
    %15 = tpu.matmul %4, %10, %cst_19 {dimension_numbers = #tpu.dot_dimension_numbers<[2], [2], [1], [1], [0, 0, 0, 1, 1, 1], [0], [0]>} : vector<8x16x96xbf16>, vector<8x12x96xbf16>, vector<8x16x12xf32> -> vector<8x16x12xf32>
    "tpu.trace_stop"() : () -> ()
    "tpu.trace_start"() <{level = 10 : i32, message = "xjc,xic->xji"}> : () -> ()
    %cst_20 = arith.constant dense<0.000000e+00> : vector<8x16x16xf32>
    %16 = tpu.matmul %14, %13, %cst_20 {dimension_numbers = #tpu.dot_dimension_numbers<[2], [2], [1], [1], [0, 0, 0, 1, 1, 1], [0], [0]>} : vector<8x16x12xf32>, vector<8x16x12xf32>, vector<8x16x16xf32> -> vector<8x16x16xf32>
    "tpu.trace_stop"() : () -> ()
    %cst_21 = arith.constant 0.288675129 : f32
    %17 = vector.broadcast %cst_21 : f32 to vector<8x16x16xf32>
    %18 = arith.mulf %16, %17 : vector<8x16x16xf32>
    %cst_22 = arith.constant dense<0xFF800000> : vector<8x16xf32>
    %19 = vector.multi_reduction <maximumf>, %18, %cst_22 [2] : vector<8x16x16xf32> to vector<8x16xf32>
    %20 = vector.shape_cast %19 : vector<8x16xf32> to vector<8x16x1xf32>
    %21 = vector.broadcast %20 : vector<8x16x1xf32> to vector<8x16x16xf32>
    %22 = arith.subf %18, %21 : vector<8x16x16xf32>
    %23 = math.exp %22 : vector<8x16x16xf32>
    %cst_23 = arith.constant dense<0.000000e+00> : vector<8x16xf32>
    %24 = vector.multi_reduction <add>, %23, %cst_23 [2] : vector<8x16x16xf32> to vector<8x16xf32>
    %25 = vector.shape_cast %24 : vector<8x16xf32> to vector<8x16x1xf32>
    %26 = tpu.reciprocal %25 {approx = true} : vector<8x16x1xf32> -> vector<8x16x1xf32>
    %27 = vector.broadcast %26 : vector<8x16x1xf32> to vector<8x16x16xf32>
    %28 = arith.mulf %23, %27 : vector<8x16x16xf32>
    %29 = arith.truncf %28 : vector<8x16x16xf32> to vector<8x16x16xbf16>
    %30 = arith.truncf %15 : vector<8x16x12xf32> to vector<8x16x12xbf16>
    "tpu.trace_start"() <{level = 10 : i32, message = "xji,xiv->xjv"}> : () -> ()
    %cst_24 = arith.constant dense<0.000000e+00> : vector<8x16x12xf32>
    %31 = tpu.matmul %29, %30, %cst_24 {dimension_numbers = #tpu.dot_dimension_numbers<[2], [1], [1], [2], [0, 0, 0, 1, 1, 2], [0], [0]>} : vector<8x16x16xbf16>, vector<8x16x12xbf16>, vector<8x16x12xf32> -> vector<8x16x12xf32>
    "tpu.trace_stop"() : () -> ()
    %32 = arith.truncf %31 : vector<8x16x12xf32> to vector<8x16x12xbf16>
    "tpu.trace_start"() <{level = 10 : i32, message = "xjv,xvo->xjo"}> : () -> ()
    %cst_25 = arith.constant dense<0.000000e+00> : vector<8x16x96xf32>
    %33 = tpu.matmul %32, %12, %cst_25 {dimension_numbers = #tpu.dot_dimension_numbers<[2], [1], [1], [2], [0, 0, 0, 1, 1, 2], [0], [0]>} : vector<8x16x12xbf16>, vector<8x12x96xbf16>, vector<8x16x96xf32> -> vector<8x16x96xf32>
    "tpu.trace_stop"() : () -> ()
    %34 = vector.shape_cast %33 : vector<8x16x96xf32> to vector<1x8x16x96xf32>
    %cst_26 = arith.constant dense<0.000000e+00> : vector<1x16x96xf32>
    %35 = vector.multi_reduction <add>, %34, %cst_26 [1] : vector<1x8x16x96xf32> to vector<1x16x96xf32>
    %c0_27 = arith.constant 0 : index
    %c0_28 = arith.constant 0 : index
    %c0_29 = arith.constant 0 : index
    %36 = vector.load %arg6[%c0_27, %c0_28, %c0_29] : memref<1x16x96xf32, #tpu.memory_space<vmem>>, vector<1x16x96xf32>
    tpu.vector_store %arg6[%c0_27, %c0_28, %c0_29], %35 {strides = array<i32>} : memref<1x16x96xf32, #tpu.memory_space<vmem>>, vector<1x16x96xf32>,
    return
  }
  func.func @transform_0(%arg0: i32) -> (i32, i32, i32) {
    %c0_i32 = arith.constant 0 : i32
    %c0_i32_0 = arith.constant 0 : i32
    %c0_i32_1 = arith.constant 0 : i32
    return %arg0, %c0_i32, %c0_i32_0 : i32, i32, i32
  }
  func.func @transform_1(%arg0: i32) -> (i32, i32, i32, i32) {
    %c0_i32 = arith.constant 0 : i32
    %c0_i32_0 = arith.constant 0 : i32
    %c0_i32_1 = arith.constant 0 : i32
    %c0_i32_2 = arith.constant 0 : i32
    return %arg0, %c0_i32, %c0_i32_0, %c0_i32_1 : i32, i32, i32, i32
  }
  func.func @transform_2(%arg0: i32) -> (i32, i32, i32, i32) {
    %c0_i32 = arith.constant 0 : i32
    %c0_i32_0 = arith.constant 0 : i32
    %c0_i32_1 = arith.constant 0 : i32
    %c0_i32_2 = arith.constant 0 : i32
    return %arg0, %c0_i32, %c0_i32_0, %c0_i32_1 : i32, i32, i32, i32
  }
  func.func @transform_3(%arg0: i32) -> (i32, i32, i32, i32) {
    %c0_i32 = arith.constant 0 : i32
    %c0_i32_0 = arith.constant 0 : i32
    %c0_i32_1 = arith.constant 0 : i32
    %c0_i32_2 = arith.constant 0 : i32
    return %arg0, %c0_i32, %c0_i32_0, %c0_i32_1 : i32, i32, i32, i32
  }
  func.func @transform_4(%arg0: i32) -> (i32, i32, i32, i32) {
    %c0_i32 = arith.constant 0 : i32
    %c0_i32_0 = arith.constant 0 : i32
    %c0_i32_1 = arith.constant 0 : i32
    %c0_i32_2 = arith.constant 0 : i32
    return %arg0, %c0_i32, %c0_i32_0, %c0_i32_1 : i32, i32, i32, i32
  }
  func.func @transform_5(%arg0: i32) -> (i32, i32, i32) {
    %c0_i32 = arith.constant 0 : i32
    %c0_i32_0 = arith.constant 0 : i32
    %c0_i32_1 = arith.constant 0 : i32
    return %arg0, %c0_i32, %c0_i32_0 : i32, i32, i32
  }
}

</mosaic_0001>

<llo_original>
// kernel: self_attention.1
$region0: #{self_attention.1}
  #allocation0 [shape = 'u32[]', space=smem, size = 0x4, offset = 0x4, fixed_abs, tag = 'smem constant byte address 0x4 - core index']
  #allocation1 [shape = 'u32[144,128]{1,0:T(1,128)}', space=vmem, size = 0x12000, scoped, tag = 'internal scratch']
  %s0 = inlined_call_operand.vmem [shape: bf16[2,16,96], index: 0, kind: input, shape index: {}]
  %s1 = inlined_call_operand.vmem [shape: bf16[2,8,12,96], index: 1, kind: input, shape index: {}]
  %s2 = inlined_call_operand.vmem [shape: bf16[2,8,12,96], index: 2, kind: input, shape index: {}]
  %s3 = inlined_call_operand.vmem [shape: bf16[2,8,12,96], index: 3, kind: input, shape index: {}]
  %s4 = inlined_call_operand.vmem [shape: bf16[2,8,12,96], index: 4, kind: input, shape index: {}]
  %s5 = inlined_call_operand.hbm [shape: f32[2,16,96], index: 5, kind: output, shape index: {}]
  %s6 = sld [smem:[#allocation0]]
  $region53: #{self_attention.1} parent=0
    _
  %s8 = ssub.s32 1, %s6
  %s9 = scalar_select 0, %s8, %s6
  $region1: #{self_attention.1} parent=0
    #allocation2 [shape = 'u8[16384]{0}', space=vmem, size = 0x4000, scoped, tag = 'output window, operand 0']
    #allocation3 [shape = 's32[2]{0}', space=sflag, size = 0x8, scoped, tag = 'scoped memory for self_attention.1']
    %10 = vsyncpa [#allocation3], 0
    %s11 = scalar_lea.sflag [#allocation3], 1
    %12 = vsyncpa %s11, 0
    loop: start=0, step=1, limit=4
    $region2: #{self_attention.1} parent=1 // loop_pre_header
      _
    $region3: #{self_attention.1} parent=1 // loop_header
      %s14 = sphi 0, %s18
      %p15 = scmp.ge.s32.totalorder %s14, 4
      %s24 = sphi 0, %s26
      %s27 = sphi 0, %s24
      %s28 = sphi 0, %s27
      %s44 = sphi 0, %s28
      %s50 = sphi 0, %s52
      %s53 = sphi 0, %s50
      %s54 = sphi 0, %s53
      %s70 = sphi 0, %s54
      %s76 = sphi 0, %s78
      %s79 = sphi 0, %s76
      %s80 = sphi 0, %s79
      %s96 = sphi 0, %s80
      %s102 = sphi 0, %s104
      %s105 = sphi 0, %s102
      %s106 = sphi 0, %s105
      %s122 = sphi 0, %s106
      %s128 = sphi 0, %s130
      %s131 = sphi 0, %s128
      %s132 = sphi 0, %s131
      %s148 = sphi 0, %s132
      %s154 = sphi 0, %s156
      %s157 = sphi 0, %s154
      %s158 = sphi 0, %s157
      %s174 = sphi 0, %s158
    $region4: #{self_attention.1} parent=1 // loop_header_branch
      %17 = sbr.rel (%p15) target = $region8
    $region5: #{self_attention.1} parent=1 // loop_body
      %s19 = ssub.s32 %s14, 1
      %s20 = ssub.s32 %s14, 2
      %s21 = sadd.s32 %s14, 1
      %s22 = ssub.s32 %s14, %s21
      %p23 = scmp.eq.s32.totalorder %s22, 0
      %s25 = sadd.s32 %s24, 1
      %s26 = scalar_select %p23, %s24, %s25
      %p29 = pneg %p23
      %p30 = scmp.eq.s32.totalorder %s14, 1
      %p31 = por %p29, %p30
      %p32 = scmp.ne.s32.totalorder %s24, %s27
      %p33 = scmp.eq.s32.totalorder %s14, 0
      %p34 = por %p32, %p33
      %p35 = scmp.ne.s32.totalorder %s24, %s27
      %p36 = scmp.eq.s32.totalorder %s19, 1
      %p37 = por %p35, %p36
      %p38 = scmp.ne.s32.totalorder %s27, %s28
      %p39 = scmp.eq.s32.totalorder %s19, 0
      %p40 = por %p38, %p39
      %p41 = scmp.ne.s32.totalorder %s27, %s28
      %p42 = scmp.eq.s32.totalorder %s20, 1
      %p43 = por %p41, %p42
      %p45 = scmp.ne.s32.totalorder %s28, %s44
      %p46 = scmp.eq.s32.totalorder %s20, 0
      %p47 = por %p45, %p46
      %s48 = ssub.s32 %s14, %s21
      %p49 = scmp.eq.s32.totalorder %s48, 0
      %s51 = sadd.s32 %s50, 1
      %s52 = scalar_select %p49, %s50, %s51
      %p55 = pneg %p49
      %p56 = scmp.eq.s32.totalorder %s14, 1
      %p57 = por %p55, %p56
      %p58 = scmp.ne.s32.totalorder %s50, %s53
      %p59 = scmp.eq.s32.totalorder %s14, 0
      %p60 = por %p58, %p59
      %p61 = scmp.ne.s32.totalorder %s50, %s53
      %p62 = scmp.eq.s32.totalorder %s19, 1
      %p63 = por %p61, %p62
      %p64 = scmp.ne.s32.totalorder %s53, %s54
      %p65 = scmp.eq.s32.totalorder %s19, 0
      %p66 = por %p64, %p65
      %p67 = scmp.ne.s32.totalorder %s53, %s54
      %p68 = scmp.eq.s32.totalorder %s20, 1
      %p69 = por %p67, %p68
      %p71 = scmp.ne.s32.totalorder %s54, %s70
      %p72 = scmp.eq.s32.totalorder %s20, 0
      %p73 = por %p71, %p72
      %s74 = ssub.s32 %s14, %s21
      %p75 = scmp.eq.s32.totalorder %s74, 0
      %s77 = sadd.s32 %s76, 1
      %s78 = scalar_select %p75, %s76, %s77
      %p81 = pneg %p75
      %p82 = scmp.eq.s32.totalorder %s14, 1
      %p83 = por %p81, %p82
      %p84 = scmp.ne.s32.totalorder %s76, %s79
      %p85 = scmp.eq.s32.totalorder %s14, 0
      %p86 = por %p84, %p85
      %p87 = scmp.ne.s32.totalorder %s76, %s79
      %p88 = scmp.eq.s32.totalorder %s19, 1
      %p89 = por %p87, %p88
      %p90 = scmp.ne.s32.totalorder %s79, %s80
      %p91 = scmp.eq.s32.totalorder %s19, 0
      %p92 = por %p90, %p91
      %p93 = scmp.ne.s32.totalorder %s79, %s80
      %p94 = scmp.eq.s32.totalorder %s20, 1
      %p95 = por %p93, %p94
      %p97 = scmp.ne.s32.totalorder %s80, %s96
      %p98 = scmp.eq.s32.totalorder %s20, 0
      %p99 = por %p97, %p98
      %s100 = ssub.s32 %s14, %s21
      %p101 = scmp.eq.s32.totalorder %s100, 0
      %s103 = sadd.s32 %s102, 1
      %s104 = scalar_select %p101, %s102, %s103
      %p107 = pneg %p101
      %p108 = scmp.eq.s32.totalorder %s14, 1
      %p109 = por %p107, %p108
      %p110 = scmp.ne.s32.totalorder %s102, %s105
      %p111 = scmp.eq.s32.totalorder %s14, 0
      %p112 = por %p110, %p111
      %p113 = scmp.ne.s32.totalorder %s102, %s105
      %p114 = scmp.eq.s32.totalorder %s19, 1
      %p115 = por %p113, %p114
      %p116 = scmp.ne.s32.totalorder %s105, %s106
      %p117 = scmp.eq.s32.totalorder %s19, 0
      %p118 = por %p116, %p117
      %p119 = scmp.ne.s32.totalorder %s105, %s106
      %p120 = scmp.eq.s32.totalorder %s20, 1
      %p121 = por %p119, %p120
      %p123 = scmp.ne.s32.totalorder %s106, %s122
      %p124 = scmp.eq.s32.totalorder %s20, 0
      %p125 = por %p123, %p124
      %s126 = ssub.s32 %s14, %s21
      %p127 = scmp.eq.s32.totalorder %s126, 0
      %s129 = sadd.s32 %s128, 1
      %s130 = scalar_select %p127, %s128, %s129
      %p133 = pneg %p127
      %p134 = scmp.eq.s32.totalorder %s14, 1
      %p135 = por %p133, %p134
      %p136 = scmp.ne.s32.totalorder %s128, %s131
      %p137 = scmp.eq.s32.totalorder %s14, 0
      %p138 = por %p136, %p137
      %p139 = scmp.ne.s32.totalorder %s128, %s131
      %p140 = scmp.eq.s32.totalorder %s19, 1
      %p141 = por %p139, %p140
      %p142 = scmp.ne.s32.totalorder %s131, %s132
      %p143 = scmp.eq.s32.totalorder %s19, 0
      %p144 = por %p142, %p143
      %p145 = scmp.ne.s32.totalorder %s131, %s132
      %p146 = scmp.eq.s32.totalorder %s20, 1
      %p147 = por %p145, %p146
      %p149 = scmp.ne.s32.totalorder %s132, %s148
      %p150 = scmp.eq.s32.totalorder %s20, 0
      %p151 = por %p149, %p150
      %s152 = ssub.s32 %s14, %s21
      %p153 = scmp.eq.s32.totalorder %s152, 0
      %s155 = sadd.s32 %s154, 1
      %s156 = scalar_select %p153, %s154, %s155
      %p159 = pneg %p153
      %p160 = scmp.eq.s32.totalorder %s14, 1
      %p161 = por %p159, %p160
      %p162 = scmp.ne.s32.totalorder %s154, %s157
      %p163 = scmp.eq.s32.totalorder %s14, 0
      %p164 = por %p162, %p163
      %p165 = scmp.ne.s32.totalorder %s154, %s157
      %p166 = scmp.eq.s32.totalorder %s19, 1
      %p167 = por %p165, %p166
      %p168 = scmp.ne.s32.totalorder %s157, %s158
      %p169 = scmp.eq.s32.totalorder %s19, 0
      %p170 = por %p168, %p169
      %p171 = scmp.ne.s32.totalorder %s157, %s158
      %p172 = scmp.eq.s32.totalorder %s20, 1
      %p173 = por %p171, %p172
      %p175 = scmp.ne.s32.totalorder %s158, %s174
      %p176 = scmp.eq.s32.totalorder %s20, 0
      %p177 = por %p175, %p176
      %p178 = scmp.le.s32.totalorder 1, %s14
      %p179 = scmp.lt.s32.totalorder %s14, 3
      %p180 = pnand %p178, %p179
      %p181 = pneg %p180
      // Predicated region
      $region9: #{self_attention.1} parent=5 // pred_check
        _
      $region10: #{self_attention.1} parent=5 // pred_check_branch
        %183 = sbr.rel (%p180) target = $region12
      $region11: #{self_attention.1} parent=5 // pred_region
        %s184 = ssub.s32 %s14, 1
      $region12: #{self_attention.1} parent=5 // pred_fallthru
        _
      %p185 = scmp.lt.s32.totalorder %s14, 2
      // Predicated region
      $region13: #{self_attention.1} parent=5 // pred_check
        %p186 = pneg %p185
      $region14: #{self_attention.1} parent=5 // pred_check_branch
        %188 = sbr.rel (%p186) target = $region16
      $region15: #{self_attention.1} parent=5 // pred_region
        // Predicated region
        $region17: #{self_attention.1} parent=15 // pred_check
          %p189 = pneg %p34
        $region18: #{self_attention.1} parent=15 // pred_check_branch
          %191 = sbr.rel (%p189) target = $region20
        $region19: #{self_attention.1} parent=15 // pred_region
          %p192 = scmp.lt.s32.totalorder %s14, 1
          %s193 = scalar_select %p192, %s14, 1
          %s194 = smul.addr %s193, 2
          %s195 = smul.addr %s194, 4
          %s196 = scalar_lea.vmem %s0, %s195
        $region20: #{self_attention.1} parent=15 // pred_fallthru
          _
        // Predicated region
        $region21: #{self_attention.1} parent=15 // pred_check
          %p197 = pneg %p60
        $region22: #{self_attention.1} parent=15 // pred_check_branch
          %199 = sbr.rel (%p197) target = $region24
        $region23: #{self_attention.1} parent=15 // pred_region
          %p200 = scmp.lt.s32.totalorder %s14, 1
          %s201 = scalar_select %p200, %s14, 1
          %s202 = smul.addr %s201, 16
          %s203 = smul.addr %s202, 4
          %s204 = scalar_lea.vmem %s1, %s203
        $region24: #{self_attention.1} parent=15 // pred_fallthru
          _
        // Predicated region
        $region25: #{self_attention.1} parent=15 // pred_check
          %p205 = pneg %p86
        $region26: #{self_attention.1} parent=15 // pred_check_branch
          %207 = sbr.rel (%p205) target = $region28
        $region27: #{self_attention.1} parent=15 // pred_region
          %p208 = scmp.lt.s32.totalorder %s14, 1
          %s209 = scalar_select %p208, %s14, 1
          %s210 = smul.addr %s209, 16
          %s211 = smul.addr %s210, 4
          %s212 = scalar_lea.vmem %s2, %s211
        $region28: #{self_attention.1} parent=15 // pred_fallthru
          _
        // Predicated region
        $region29: #{self_attention.1} parent=15 // pred_check
          %p213 = pneg %p112
        $region30: #{self_attention.1} parent=15 // pred_check_branch
          %215 = sbr.rel (%p213) target = $region32
        $region31: #{self_attention.1} parent=15 // pred_region
          %p216 = scmp.lt.s32.totalorder %s14, 1
          %s217 = scalar_select %p216, %s14, 1
          %s218 = smul.addr %s217, 16
          %s219 = smul.addr %s218, 4
          %s220 = scalar_lea.vmem %s3, %s219
        $region32: #{self_attention.1} parent=15 // pred_fallthru
          _
        // Predicated region
        $region33: #{self_attention.1} parent=15 // pred_check
          %p221 = pneg %p138
        $region34: #{self_attention.1} parent=15 // pred_check_branch
          %223 = sbr.rel (%p221) target = $region36
        $region35: #{self_attention.1} parent=15 // pred_region
          %p224 = scmp.lt.s32.totalorder %s14, 1
          %s225 = scalar_select %p224, %s14, 1
          %s226 = smul.addr %s225, 16
          %s227 = smul.addr %s226, 4
          %s228 = scalar_lea.vmem %s4, %s227
        $region36: #{self_attention.1} parent=15 // pred_fallthru
          _
      $region16: #{self_attention.1} parent=5 // pred_fallthru
        _
      %p229 = scmp.le.s32.totalorder 1, %s14
      %p230 = scmp.lt.s32.totalorder %s14, 3
      %p231 = pnand %p229, %p230
      %p232 = pneg %p231
      // Predicated region
      $region37: #{self_attention.1} parent=5 // pred_check
        _
      $region38: #{self_attention.1} parent=5 // pred_check_branch
        %234 = sbr.rel (%p231) target = $region40
      $region39: #{self_attention.1} parent=5 // pred_region
        %s235 = ssub.s32 %s14, 1
        %p236 = scmp.lt.s32.totalorder %s19, 1
        %s237 = scalar_select %p236, %s19, 1
        %s238 = smul.addr %s237, 2
        %s239 = smul.addr %s238, 4
        %s240 = scalar_lea.vmem %s0, %s239
        %p241 = pneg %p40
        %p242 = pneg %p37
        %p243 = scmp.lt.s32.totalorder %s19, 1
        %s244 = scalar_select %p243, %s19, 1
        %s245 = smul.addr %s244, 16
        %s246 = smul.addr %s245, 4
        %s247 = scalar_lea.vmem %s1, %s246
        %p248 = pneg %p66
        %p249 = pneg %p63
        %p250 = scmp.lt.s32.totalorder %s19, 1
        %s251 = scalar_select %p250, %s19, 1
        %s252 = smul.addr %s251, 16
        %s253 = smul.addr %s252, 4
        %s254 = scalar_lea.vmem %s2, %s253
        %p255 = pneg %p92
        %p256 = pneg %p89
        %p257 = scmp.lt.s32.totalorder %s19, 1
        %s258 = scalar_select %p257, %s19, 1
        %s259 = smul.addr %s258, 16
        %s260 = smul.addr %s259, 4
        %s261 = scalar_lea.vmem %s3, %s260
        %p262 = pneg %p118
        %p263 = pneg %p115
        %p264 = scmp.lt.s32.totalorder %s19, 1
        %s265 = scalar_select %p264, %s19, 1
        %s266 = smul.addr %s265, 16
        %s267 = smul.addr %s266, 4
        %s268 = scalar_lea.vmem %s4, %s267
        %p269 = pneg %p144
        %p270 = pneg %p141
        %p271 = pneg %p170
        %p272 = pneg %p167
        %s273 = sand.u32 %s157, 1
        %s274 = scalar_lea.sflag [#allocation3], %s273
        %s275 = sand.u32 %s157, 1
        %s276 = smul.addr %s275, 16
        %s277 = scalar_lea.vmem [#allocation2], %s276
        %p278 = scmp.lt.s32.totalorder %s19, 1
        %s279 = scalar_select %p278, %s19, 1
        %s280 = smul.addr %s279, 2
        %s281 = smul.addr %s280, 4
        %s282 = scalar_lea.vmem %s0, %s281
        %p283 = scmp.lt.s32.totalorder %s19, 1
        %s284 = scalar_select %p283, %s19, 1
        %s285 = smul.addr %s284, 16
        %s286 = smul.addr %s285, 4
        %s287 = scalar_lea.vmem %s1, %s286
        %p288 = scmp.lt.s32.totalorder %s19, 1
        %s289 = scalar_select %p288, %s19, 1
        %s290 = smul.addr %s289, 16
        %s291 = smul.addr %s290, 4
        %s292 = scalar_lea.vmem %s2, %s291
        %p293 = scmp.lt.s32.totalorder %s19, 1
        %s294 = scalar_select %p293, %s19, 1
        %s295 = smul.addr %s294, 16
        %s296 = smul.addr %s295, 4
        %s297 = scalar_lea.vmem %s3, %s296
        %p298 = scmp.lt.s32.totalorder %s19, 1
        %s299 = scalar_select %p298, %s19, 1
        %s300 = smul.addr %s299, 16
        %s301 = smul.addr %s300, 4
        %s302 = scalar_lea.vmem %s4, %s301
        %v304 = vld [vmem:[%s282] sm:$0xf]
        %v305 = vld [vmem:[%s282 + $0x4] sm:$0xf]
        %v306 = vld [vmem:[%s287] sm:$0xf]
        %v307 = vld [vmem:[%s287 + $0x4] sm:$0x3]
        %v308 = vld [vmem:[%s287 + $0x8] sm:$0xf]
        %v309 = vld [vmem:[%s287 + $0xc] sm:$0x3]
        %v310 = vld [vmem:[%s287 + $0x10] sm:$0xf]
        %v311 = vld [vmem:[%s287 + $0x14] sm:$0x3]
        %v312 = vld [vmem:[%s287 + $0x18] sm:$0xf]
        %v313 = vld [vmem:[%s287 + $0x1c] sm:$0x3]
        %v314 = vld [vmem:[%s287 + $0x20] sm:$0xf]
        %v315 = vld [vmem:[%s287 + $0x24] sm:$0x3]
        %v316 = vld [vmem:[%s287 + $0x28] sm:$0xf]
        %v317 = vld [vmem:[%s287 + $0x2c] sm:$0x3]
        %v318 = vld [vmem:[%s287 + $0x30] sm:$0xf]
        %v319 = vld [vmem:[%s287 + $0x34] sm:$0x3]
        %v320 = vld [vmem:[%s287 + $0x38] sm:$0xf]
        %v321 = vld [vmem:[%s287 + $0x3c] sm:$0x3]
        %v322 = vld [vmem:[%s292] sm:$0xf]
        %v323 = vld [vmem:[%s292 + $0x4] sm:$0x3]
        %v324 = vld [vmem:[%s292 + $0x8] sm:$0xf]
        %v325 = vld [vmem:[%s292 + $0xc] sm:$0x3]
        %v326 = vld [vmem:[%s292 + $0x10] sm:$0xf]
        %v327 = vld [vmem:[%s292 + $0x14] sm:$0x3]
        %v328 = vld [vmem:[%s292 + $0x18] sm:$0xf]
        %v329 = vld [vmem:[%s292 + $0x1c] sm:$0x3]
        %v330 = vld [vmem:[%s292 + $0x20] sm:$0xf]
        %v331 = vld [vmem:[%s292 + $0x24] sm:$0x3]
        %v332 = vld [vmem:[%s292 + $0x28] sm:$0xf]
        %v333 = vld [vmem:[%s292 + $0x2c] sm:$0x3]
        %v334 = vld [vmem:[%s292 + $0x30] sm:$0xf]
        %v335 = vld [vmem:[%s292 + $0x34] sm:$0x3]
        %v336 = vld [vmem:[%s292 + $0x38] sm:$0xf]
        %v337 = vld [vmem:[%s292 + $0x3c] sm:$0x3]
        %v338 = vld [vmem:[%s297] sm:$0xf]
        %v339 = vld [vmem:[%s297 + $0x4] sm:$0x3]
        %v340 = vld [vmem:[%s297 + $0x8] sm:$0xf]
        %v341 = vld [vmem:[%s297 + $0xc] sm:$0x3]
        %v342 = vld [vmem:[%s297 + $0x10] sm:$0xf]
        %v343 = vld [vmem:[%s297 + $0x14] sm:$0x3]
        %v344 = vld [vmem:[%s297 + $0x18] sm:$0xf]
        %v345 = vld [vmem:[%s297 + $0x1c] sm:$0x3]
        %v346 = vld [vmem:[%s297 + $0x20] sm:$0xf]
        %v347 = vld [vmem:[%s297 + $0x24] sm:$0x3]
        %v348 = vld [vmem:[%s297 + $0x28] sm:$0xf]
        %v349 = vld [vmem:[%s297 + $0x2c] sm:$0x3]
        %v350 = vld [vmem:[%s297 + $0x30] sm:$0xf]
        %v351 = vld [vmem:[%s297 + $0x34] sm:$0x3]
        %v352 = vld [vmem:[%s297 + $0x38] sm:$0xf]
        %v353 = vld [vmem:[%s297 + $0x3c] sm:$0x3]
        %v354 = vld [vmem:[%s302] sm:$0xf]
        %v355 = vld [vmem:[%s302 + $0x4] sm:$0x3]
        %v356 = vld [vmem:[%s302 + $0x8] sm:$0xf]
        %v357 = vld [vmem:[%s302 + $0xc] sm:$0x3]
        %v358 = vld [vmem:[%s302 + $0x10] sm:$0xf]
        %v359 = vld [vmem:[%s302 + $0x14] sm:$0x3]
        %v360 = vld [vmem:[%s302 + $0x18] sm:$0xf]
        %v361 = vld [vmem:[%s302 + $0x1c] sm:$0x3]
        %v362 = vld [vmem:[%s302 + $0x20] sm:$0xf]
        %v363 = vld [vmem:[%s302 + $0x24] sm:$0x3]
        %v364 = vld [vmem:[%s302 + $0x28] sm:$0xf]
        %v365 = vld [vmem:[%s302 + $0x2c] sm:$0x3]
        %v366 = vld [vmem:[%s302 + $0x30] sm:$0xf]
        %v367 = vld [vmem:[%s302 + $0x34] sm:$0x3]
        %v368 = vld [vmem:[%s302 + $0x38] sm:$0xf]
        %v369 = vld [vmem:[%s302 + $0x3c] sm:$0x3]
        %v372 = vunpack.c.l.b16 %v304
        %v373 = vunpack.c.l.b16 %v305
        %v374 = vpack.c.b16 %v373, %v372
        %v377 = vunpack.c.l.b16 %v306
        %v378 = vunpack.c.l.b16 %v307
        %v379 = vpack.c.b16 %v378, %v377
        %vm380 = vcmask 785408
        %v382 = vsel %vm380, %v374, 0
        %v385 = vsel %vm380, %v379, 0
        %387 = vmatprep.subr.bf16.mxu0 0
        %388 = vmatpush1.bf16.xpose.msra.mxu0 %v385
        %389 = vmatprep.subr.bf16.mxu0 0
        %390 = vmatpush1.bf16.xpose.msra.mxu0 0
        %391 = vmatprep.subr.bf16.mxu0 0
        %392 = vmatpush1.bf16.xpose.msra.mxu0 0
        %393 = vmatprep.subr.bf16.mxu0 0
        %394 = vmatpush1.bf16.xpose.msra.mxu0 0
        %395 = vmatprep.subr.bf16.mxu0 0
        %396 = vmatpush1.bf16.xpose.msra.mxu0 0
        %397 = vmatprep.subr.bf16.mxu0 0
        %398 = vmatpush1.bf16.xpose.msra.mxu0 0
        %399 = vmatprep.subr.bf16.mxu0 0
        %400 = vmatpush1.bf16.xpose.msra.mxu0 0
        %401 = vmatprep.subr.bf16.mxu0 0
        %402 = vmatpush1.bf16.xpose.msra.mxu0 0
        %403 = vmatprep.subr.bf16.mxu0 0
        %404 = vmatpush1.bf16.xpose.msra.mxu0 0
        %405 = vmatprep.subr.bf16.mxu0 0
        %406 = vmatpush1.bf16.xpose.msra.mxu0 0
        %407 = vmatprep.subr.bf16.mxu0 0
        %408 = vmatpush1.bf16.xpose.msra.mxu0 0
        %409 = vmatprep.subr.bf16.mxu0 0
        %410 = vmatpush1.bf16.xpose.msra.mxu0 0
        %411 = vmatprep.subr.bf16.mxu0 0
        %412 = vmatpush1.bf16.xpose.msra.mxu0 0
        %413 = vmatprep.subr.bf16.mxu0 0
        %414 = vmatpush1.bf16.xpose.msra.mxu0 0
        %415 = vmatprep.subr.bf16.mxu0 0
        %416 = vmatpush1.bf16.xpose.msra.mxu0 0
        %417 = vmatprep.subr.bf16.mxu0 0
        %418 = vmatpush1.bf16.xpose.msra.mxu0 0
        %419 = vmatprep.mubr.bf16.mxu0 0
        %420 = vmatmul.mubr.bf16.gmra.mrb[0].mxu0 %v382
        %v421 = vpop.f32.mrb[0].mxu0
        %v422 = vadd.f32 0.0, %v421
        %v423 = vpop.f32.mrb[0].mxu0
        %v424 = vpop.f32.mrb[0].mxu0
        %v425 = vadd.f32 0.0, %v424
        %v426 = vpop.f32.mrb[0].mxu0
        %427 = vdwg.mxu0
        %v430 = vunpack.c.l.b16 %v308
        %v431 = vunpack.c.l.b16 %v309
        %v432 = vpack.c.b16 %v431, %v430
        %v434 = vsel %vm380, %v432, 0
        %436 = vmatprep.subr.bf16.mxu0 0
        %437 = vmatpush1.bf16.xpose.msra.mxu0 %v434
        %438 = vmatprep.subr.bf16.mxu0 0
        %439 = vmatpush1.bf16.xpose.msra.mxu0 0
        %440 = vmatprep.subr.bf16.mxu0 0
        %441 = vmatpush1.bf16.xpose.msra.mxu0 0
        %442 = vmatprep.subr.bf16.mxu0 0
        %443 = vmatpush1.bf16.xpose.msra.mxu0 0
        %444 = vmatprep.subr.bf16.mxu0 0
        %445 = vmatpush1.bf16.xpose.msra.mxu0 0
        %446 = vmatprep.subr.bf16.mxu0 0
        %447 = vmatpush1.bf16.xpose.msra.mxu0 0
        %448 = vmatprep.subr.bf16.mxu0 0
        %449 = vmatpush1.bf16.xpose.msra.mxu0 0
        %450 = vmatprep.subr.bf16.mxu0 0
        %451 = vmatpush1.bf16.xpose.msra.mxu0 0
        %452 = vmatprep.subr.bf16.mxu0 0
        %453 = vmatpush1.bf16.xpose.msra.mxu0 0
        %454 = vmatprep.subr.bf16.mxu0 0
        %455 = vmatpush1.bf16.xpose.msra.mxu0 0
        %456 = vmatprep.subr.bf16.mxu0 0
        %457 = vmatpush1.bf16.xpose.msra.mxu0 0
        %458 = vmatprep.subr.bf16.mxu0 0
        %459 = vmatpush1.bf16.xpose.msra.mxu0 0
        %460 = vmatprep.subr.bf16.mxu0 0
        %461 = vmatpush1.bf16.xpose.msra.mxu0 0
        %462 = vmatprep.subr.bf16.mxu0 0
        %463 = vmatpush1.bf16.xpose.msra.mxu0 0
        %464 = vmatprep.subr.bf16.mxu0 0
        %465 = vmatpush1.bf16.xpose.msra.mxu0 0
        %466 = vmatprep.subr.bf16.mxu0 0
        %467 = vmatpush1.bf16.xpose.msra.mxu0 0
        %468 = vmatprep.mubr.bf16.mxu0 0
        %469 = vmatmul.mubr.bf16.gmra.mrb[0].mxu0 %v382
        %v470 = vpop.f32.mrb[0].mxu0
        %v471 = vadd.f32 0.0, %v470
        %v472 = vpop.f32.mrb[0].mxu0
        %v473 = vpop.f32.mrb[0].mxu0
        %v474 = vadd.f32 0.0, %v473
        %v475 = vpop.f32.mrb[0].mxu0
        %476 = vdwg.mxu0
        %v479 = vunpack.c.l.b16 %v310
        %v480 = vunpack.c.l.b16 %v311
        %v481 = vpack.c.b16 %v480, %v479
        %v483 = vsel %vm380, %v481, 0
        %485 = vmatprep.subr.bf16.mxu0 0
        %486 = vmatpush1.bf16.xpose.msra.mxu0 %v483
        %487 = vmatprep.subr.bf16.mxu0 0
        %488 = vmatpush1.bf16.xpose.msra.mxu0 0
        %489 = vmatprep.subr.bf16.mxu0 0
        %490 = vmatpush1.bf16.xpose.msra.mxu0 0
        %491 = vmatprep.subr.bf16.mxu0 0
        %492 = vmatpush1.bf16.xpose.msra.mxu0 0
        %493 = vmatprep.subr.bf16.mxu0 0
        %494 = vmatpush1.bf16.xpose.msra.mxu0 0
        %495 = vmatprep.subr.bf16.mxu0 0
        %496 = vmatpush1.bf16.xpose.msra.mxu0 0
        %497 = vmatprep.subr.bf16.mxu0 0
        %498 = vmatpush1.bf16.xpose.msra.mxu0 0
        %499 = vmatprep.subr.bf16.mxu0 0
        %500 = vmatpush1.bf16.xpose.msra.mxu0 0
        %501 = vmatprep.subr.bf16.mxu0 0
        %502 = vmatpush1.bf16.xpose.msra.mxu0 0
        %503 = vmatprep.subr.bf16.mxu0 0
        %504 = vmatpush1.bf16.xpose.msra.mxu0 0
        %505 = vmatprep.subr.bf16.mxu0 0
        %506 = vmatpush1.bf16.xpose.msra.mxu0 0
        %507 = vmatprep.subr.bf16.mxu0 0
        %508 = vmatpush1.bf16.xpose.msra.mxu0 0
        %509 = vmatprep.subr.bf16.mxu0 0
        %510 = vmatpush1.bf16.xpose.msra.mxu0 0
        %511 = vmatprep.subr.bf16.mxu0 0
        %512 = vmatpush1.bf16.xpose.msra.mxu0 0
        %513 = vmatprep.subr.bf16.mxu0 0
        %514 = vmatpush1.bf16.xpose.msra.mxu0 0
        %515 = vmatprep.subr.bf16.mxu0 0
        %516 = vmatpush1.bf16.xpose.msra.mxu0 0
        %517 = vmatprep.mubr.bf16.mxu0 0
        %518 = vmatmul.mubr.bf16.gmra.mrb[0].mxu0 %v382
        %v519 = vpop.f32.mrb[0].mxu0
        %v520 = vadd.f32 0.0, %v519
        %v521 = vpop.f32.mrb[0].mxu0
        %v522 = vpop.f32.mrb[0].mxu0
        %v523 = vadd.f32 0.0, %v522
        %v524 = vpop.f32.mrb[0].mxu0
        %525 = vdwg.mxu0
        %v528 = vunpack.c.l.b16 %v312
        %v529 = vunpack.c.l.b16 %v313
        %v530 = vpack.c.b16 %v529, %v528
        %v532 = vsel %vm380, %v530, 0
        %534 = vmatprep.subr.bf16.mxu0 0
        %535 = vmatpush1.bf16.xpose.msra.mxu0 %v532
        %536 = vmatprep.subr.bf16.mxu0 0
        %537 = vmatpush1.bf16.xpose.msra.mxu0 0
        %538 = vmatprep.subr.bf16.mxu0 0
        %539 = vmatpush1.bf16.xpose.msra.mxu0 0
        %540 = vmatprep.subr.bf16.mxu0 0
        %541 = vmatpush1.bf16.xpose.msra.mxu0 0
        %542 = vmatprep.subr.bf16.mxu0 0
        %543 = vmatpush1.bf16.xpose.msra.mxu0 0
        %544 = vmatprep.subr.bf16.mxu0 0
        %545 = vmatpush1.bf16.xpose.msra.mxu0 0
        %546 = vmatprep.subr.bf16.mxu0 0
        %547 = vmatpush1.bf16.xpose.msra.mxu0 0
        %548 = vmatprep.subr.bf16.mxu0 0
        %549 = vmatpush1.bf16.xpose.msra.mxu0 0
        %550 = vmatprep.subr.bf16.mxu0 0
        %551 = vmatpush1.bf16.xpose.msra.mxu0 0
        %552 = vmatprep.subr.bf16.mxu0 0
        %553 = vmatpush1.bf16.xpose.msra.mxu0 0
        %554 = vmatprep.subr.bf16.mxu0 0
        %555 = vmatpush1.bf16.xpose.msra.mxu0 0
        %556 = vmatprep.subr.bf16.mxu0 0
        %557 = vmatpush1.bf16.xpose.msra.mxu0 0
        %558 = vmatprep.subr.bf16.mxu0 0
        %559 = vmatpush1.bf16.xpose.msra.mxu0 0
        %560 = vmatprep.subr.bf16.mxu0 0
        %561 = vmatpush1.bf16.xpose.msra.mxu0 0
        %562 = vmatprep.subr.bf16.mxu0 0
        %563 = vmatpush1.bf16.xpose.msra.mxu0 0
        %564 = vmatprep.subr.bf16.mxu0 0
        %565 = vmatpush1.bf16.xpose.msra.mxu0 0
        %566 = vmatprep.mubr.bf16.mxu0 0
        %567 = vmatmul.mubr.bf16.gmra.mrb[0].mxu0 %v382
        %v568 = vpop.f32.mrb[0].mxu0
        %v569 = vadd.f32 0.0, %v568
        %v570 = vpop.f32.mrb[0].mxu0
        %v571 = vpop.f32.mrb[0].mxu0
        %v572 = vadd.f32 0.0, %v571
        %v573 = vpop.f32.mrb[0].mxu0
        %574 = vdwg.mxu0
        %v577 = vunpack.c.l.b16 %v314
        %v578 = vunpack.c.l.b16 %v315
        %v579 = vpack.c.b16 %v578, %v577
        %v581 = vsel %vm380, %v579, 0
        %583 = vmatprep.subr.bf16.mxu0 0
        %584 = vmatpush1.bf16.xpose.msra.mxu0 %v581
        %585 = vmatprep.subr.bf16.mxu0 0
        %586 = vmatpush1.bf16.xpose.msra.mxu0 0
        %587 = vmatprep.subr.bf16.mxu0 0
        %588 = vmatpush1.bf16.xpose.msra.mxu0 0
        %589 = vmatprep.subr.bf16.mxu0 0
        %590 = vmatpush1.bf16.xpose.msra.mxu0 0
        %591 = vmatprep.subr.bf16.mxu0 0
        %592 = vmatpush1.bf16.xpose.msra.mxu0 0
        %593 = vmatprep.subr.bf16.mxu0 0
        %594 = vmatpush1.bf16.xpose.msra.mxu0 0
        %595 = vmatprep.subr.bf16.mxu0 0
        %596 = vmatpush1.bf16.xpose.msra.mxu0 0
        %597 = vmatprep.subr.bf16.mxu0 0
        %598 = vmatpush1.bf16.xpose.msra.mxu0 0
        %599 = vmatprep.subr.bf16.mxu0 0
        %600 = vmatpush1.bf16.xpose.msra.mxu0 0
        %601 = vmatprep.subr.bf16.mxu0 0
        %602 = vmatpush1.bf16.xpose.msra.mxu0 0
        %603 = vmatprep.subr.bf16.mxu0 0
        %604 = vmatpush1.bf16.xpose.msra.mxu0 0
        %605 = vmatprep.subr.bf16.mxu0 0
        %606 = vmatpush1.bf16.xpose.msra.mxu0 0
        %607 = vmatprep.subr.bf16.mxu0 0
        %608 = vmatpush1.bf16.xpose.msra.mxu0 0
        %609 = vmatprep.subr.bf16.mxu0 0
        %610 = vmatpush1.bf16.xpose.msra.mxu0 0
        %611 = vmatprep.subr.bf16.mxu0 0
        %612 = vmatpush1.bf16.xpose.msra.mxu0 0
        %613 = vmatprep.subr.bf16.mxu0 0
        %614 = vmatpush1.bf16.xpose.msra.mxu0 0
        %615 = vmatprep.mubr.bf16.mxu0 0
        %616 = vmatmul.mubr.bf16.gmra.mrb[0].mxu0 %v382
        %v617 = vpop.f32.mrb[0].mxu0
        %v618 = vadd.f32 0.0, %v617
        %v619 = vpop.f32.mrb[0].mxu0
        %v620 = vpop.f32.mrb[0].mxu0
        %v621 = vadd.f32 0.0, %v620
        %v622 = vpop.f32.mrb[0].mxu0
        %623 = vdwg.mxu0
        %v626 = vunpack.c.l.b16 %v316
        %v627 = vunpack.c.l.b16 %v317
        %v628 = vpack.c.b16 %v627, %v626
        %v630 = vsel %vm380, %v628, 0
        %632 = vmatprep.subr.bf16.mxu0 0
        %633 = vmatpush1.bf16.xpose.msra.mxu0 %v630
        %634 = vmatprep.subr.bf16.mxu0 0
        %635 = vmatpush1.bf16.xpose.msra.mxu0 0
        %636 = vmatprep.subr.bf16.mxu0 0
        %637 = vmatpush1.bf16.xpose.msra.mxu0 0
        %638 = vmatprep.subr.bf16.mxu0 0
        %639 = vmatpush1.bf16.xpose.msra.mxu0 0
        %640 = vmatprep.subr.bf16.mxu0 0
        %641 = vmatpush1.bf16.xpose.msra.mxu0 0
        %642 = vmatprep.subr.bf16.mxu0 0
        %643 = vmatpush1.bf16.xpose.msra.mxu0 0
        %644 = vmatprep.subr.bf16.mxu0 0
        %645 = vmatpush1.bf16.xpose.msra.mxu0 0
        %646 = vmatprep.subr.bf16.mxu0 0
        %647 = vmatpush1.bf16.xpose.msra.mxu0 0
        %648 = vmatprep.subr.bf16.mxu0 0
        %649 = vmatpush1.bf16.xpose.msra.mxu0 0
        %650 = vmatprep.subr.bf16.mxu0 0
        %651 = vmatpush1.bf16.xpose.msra.mxu0 0
        %652 = vmatprep.subr.bf16.mxu0 0
        %653 = vmatpush1.bf16.xpose.msra.mxu0 0
        %654 = vmatprep.subr.bf16.mxu0 0
        %655 = vmatpush1.bf16.xpose.msra.mxu0 0
        %656 = vmatprep.subr.bf16.mxu0 0
        %657 = vmatpush1.bf16.xpose.msra.mxu0 0
        %658 = vmatprep.subr.bf16.mxu0 0
        %659 = vmatpush1.bf16.xpose.msra.mxu0 0
        %660 = vmatprep.subr.bf16.mxu0 0
        %661 = vmatpush1.bf16.xpose.msra.mxu0 0
        %662 = vmatprep.subr.bf16.mxu0 0
        %663 = vmatpush1.bf16.xpose.msra.mxu0 0
        %664 = vmatprep.mubr.bf16.mxu0 0
        %665 = vmatmul.mubr.bf16.gmra.mrb[0].mxu0 %v382
        %v666 = vpop.f32.mrb[0].mxu0
        %v667 = vadd.f32 0.0, %v666
        %v668 = vpop.f32.mrb[0].mxu0
        %v669 = vpop.f32.mrb[0].mxu0
        %v670 = vadd.f32 0.0, %v669
        %v671 = vpop.f32.mrb[0].mxu0
        %672 = vdwg.mxu0
        %v675 = vunpack.c.l.b16 %v318
        %v676 = vunpack.c.l.b16 %v319
        %v677 = vpack.c.b16 %v676, %v675
        %v679 = vsel %vm380, %v677, 0
        %681 = vmatprep.subr.bf16.mxu0 0
        %682 = vmatpush1.bf16.xpose.msra.mxu0 %v679
        %683 = vmatprep.subr.bf16.mxu0 0
        %684 = vmatpush1.bf16.xpose.msra.mxu0 0
        %685 = vmatprep.subr.bf16.mxu0 0
        %686 = vmatpush1.bf16.xpose.msra.mxu0 0
        %687 = vmatprep.subr.bf16.mxu0 0
        %688 = vmatpush1.bf16.xpose.msra.mxu0 0
        %689 = vmatprep.subr.bf16.mxu0 0
        %690 = vmatpush1.bf16.xpose.msra.mxu0 0
        %691 = vmatprep.subr.bf16.mxu0 0
        %692 = vmatpush1.bf16.xpose.msra.mxu0 0
        %693 = vmatprep.subr.bf16.mxu0 0
        %694 = vmatpush1.bf16.xpose.msra.mxu0 0
        %695 = vmatprep.subr.bf16.mxu0 0
        %696 = vmatpush1.bf16.xpose.msra.mxu0 0
        %697 = vmatprep.subr.bf16.mxu0 0
        %698 = vmatpush1.bf16.xpose.msra.mxu0 0
        %699 = vmatprep.subr.bf16.mxu0 0
        %700 = vmatpush1.bf16.xpose.msra.mxu0 0
        %701 = vmatprep.subr.bf16.mxu0 0
        %702 = vmatpush1.bf16.xpose.msra.mxu0 0
        %703 = vmatprep.subr.bf16.mxu0 0
        %704 = vmatpush1.bf16.xpose.msra.mxu0 0
        %705 = vmatprep.subr.bf16.mxu0 0
        %706 = vmatpush1.bf16.xpose.msra.mxu0 0
        %707 = vmatprep.subr.bf16.mxu0 0
        %708 = vmatpush1.bf16.xpose.msra.mxu0 0
        %709 = vmatprep.subr.bf16.mxu0 0
        %710 = vmatpush1.bf16.xpose.msra.mxu0 0
        %711 = vmatprep.subr.bf16.mxu0 0
        %712 = vmatpush1.bf16.xpose.msra.mxu0 0
        %713 = vmatprep.mubr.bf16.mxu0 0
        %714 = vmatmul.mubr.bf16.gmra.mrb[0].mxu0 %v382
        %v715 = vpop.f32.mrb[0].mxu0
        %v716 = vadd.f32 0.0, %v715
        %v717 = vpop.f32.mrb[0].mxu0
        %v718 = vpop.f32.mrb[0].mxu0
        %v719 = vadd.f32 0.0, %v718
        %v720 = vpop.f32.mrb[0].mxu0
        %721 = vdwg.mxu0
        %v724 = vunpack.c.l.b16 %v320
        %v725 = vunpack.c.l.b16 %v321
        %v726 = vpack.c.b16 %v725, %v724
        %v728 = vsel %vm380, %v726, 0
        %730 = vmatprep.subr.bf16.mxu0 0
        %731 = vmatpush1.bf16.xpose.msra.mxu0 %v728
        %732 = vmatprep.subr.bf16.mxu0 0
        %733 = vmatpush1.bf16.xpose.msra.mxu0 0
        %734 = vmatprep.subr.bf16.mxu0 0
        %735 = vmatpush1.bf16.xpose.msra.mxu0 0
        %736 = vmatprep.subr.bf16.mxu0 0
        %737 = vmatpush1.bf16.xpose.msra.mxu0 0
        %738 = vmatprep.subr.bf16.mxu0 0
        %739 = vmatpush1.bf16.xpose.msra.mxu0 0
        %740 = vmatprep.subr.bf16.mxu0 0
        %741 = vmatpush1.bf16.xpose.msra.mxu0 0
        %742 = vmatprep.subr.bf16.mxu0 0
        %743 = vmatpush1.bf16.xpose.msra.mxu0 0
        %744 = vmatprep.subr.bf16.mxu0 0
        %745 = vmatpush1.bf16.xpose.msra.mxu0 0
        %746 = vmatprep.subr.bf16.mxu0 0
        %747 = vmatpush1.bf16.xpose.msra.mxu0 0
        %748 = vmatprep.subr.bf16.mxu0 0
        %749 = vmatpush1.bf16.xpose.msra.mxu0 0
        %750 = vmatprep.subr.bf16.mxu0 0
        %751 = vmatpush1.bf16.xpose.msra.mxu0 0
        %752 = vmatprep.subr.bf16.mxu0 0
        %753 = vmatpush1.bf16.xpose.msra.mxu0 0
        %754 = vmatprep.subr.bf16.mxu0 0
        %755 = vmatpush1.bf16.xpose.msra.mxu0 0
        %756 = vmatprep.subr.bf16.mxu0 0
        %757 = vmatpush1.bf16.xpose.msra.mxu0 0
        %758 = vmatprep.subr.bf16.mxu0 0
        %759 = vmatpush1.bf16.xpose.msra.mxu0 0
        %760 = vmatprep.subr.bf16.mxu0 0
        %761 = vmatpush1.bf16.xpose.msra.mxu0 0
        %762 = vmatprep.mubr.bf16.mxu0 0
        %763 = vmatmul.mubr.bf16.gmra.mrb[0].mxu0 %v382
        %v764 = vpop.f32.mrb[0].mxu0
        %v765 = vadd.f32 0.0, %v764
        %v766 = vpop.f32.mrb[0].mxu0
        %v767 = vpop.f32.mrb[0].mxu0
        %v768 = vadd.f32 0.0, %v767
        %v769 = vpop.f32.mrb[0].mxu0
        %770 = vdwg.mxu0
        %v773 = vunpack.c.l.b16 %v322
        %v774 = vunpack.c.l.b16 %v323
        %v775 = vpack.c.b16 %v774, %v773
        %v777 = vsel %vm380, %v775, 0
        %779 = vmatprep.subr.bf16.mxu0 0
        %780 = vmatpush1.bf16.xpose.msra.mxu0 %v777
        %781 = vmatprep.subr.bf16.mxu0 0
        %782 = vmatpush1.bf16.xpose.msra.mxu0 0
        %783 = vmatprep.subr.bf16.mxu0 0
        %784 = vmatpush1.bf16.xpose.msra.mxu0 0
        %785 = vmatprep.subr.bf16.mxu0 0
        %786 = vmatpush1.bf16.xpose.msra.mxu0 0
        %787 = vmatprep.subr.bf16.mxu0 0
        %788 = vmatpush1.bf16.xpose.msra.mxu0 0
        %789 = vmatprep.subr.bf16.mxu0 0
        %790 = vmatpush1.bf16.xpose.msra.mxu0 0
        %791 = vmatprep.subr.bf16.mxu0 0
        %792 = vmatpush1.bf16.xpose.msra.mxu0 0
        %793 = vmatprep.subr.bf16.mxu0 0
        %794 = vmatpush1.bf16.xpose.msra.mxu0 0
        %795 = vmatprep.subr.bf16.mxu0 0
        %796 = vmatpush1.bf16.xpose.msra.mxu0 0
        %797 = vmatprep.subr.bf16.mxu0 0
        %798 = vmatpush1.bf16.xpose.msra.mxu0 0
        %799 = vmatprep.subr.bf16.mxu0 0
        %800 = vmatpush1.bf16.xpose.msra.mxu0 0
        %801 = vmatprep.subr.bf16.mxu0 0
        %802 = vmatpush1.bf16.xpose.msra.mxu0 0
        %803 = vmatprep.subr.bf16.mxu0 0
        %804 = vmatpush1.bf16.xpose.msra.mxu0 0
        %805 = vmatprep.subr.bf16.mxu0 0
        %806 = vmatpush1.bf16.xpose.msra.mxu0 0
        %807 = vmatprep.subr.bf16.mxu0 0
        %808 = vmatpush1.bf16.xpose.msra.mxu0 0
        %809 = vmatprep.subr.bf16.mxu0 0
        %810 = vmatpush1.bf16.xpose.msra.mxu0 0
        %811 = vmatprep.mubr.bf16.mxu0 0
        %812 = vmatmul.mubr.bf16.gmra.mrb[0].mxu0 %v382
        %v813 = vpop.f32.mrb[0].mxu0
        %v814 = vadd.f32 0.0, %v813
        %v815 = vpop.f32.mrb[0].mxu0
        %v816 = vpop.f32.mrb[0].mxu0
        %v817 = vadd.f32 0.0, %v816
        %v818 = vpop.f32.mrb[0].mxu0
        %819 = vdwg.mxu0
        %v822 = vunpack.c.l.b16 %v324
        %v823 = vunpack.c.l.b16 %v325
        %v824 = vpack.c.b16 %v823, %v822
        %v826 = vsel %vm380, %v824, 0
        %828 = vmatprep.subr.bf16.mxu0 0
        %829 = vmatpush1.bf16.xpose.msra.mxu0 %v826
        %830 = vmatprep.subr.bf16.mxu0 0
        %831 = vmatpush1.bf16.xpose.msra.mxu0 0
        %832 = vmatprep.subr.bf16.mxu0 0
        %833 = vmatpush1.bf16.xpose.msra.mxu0 0
        %834 = vmatprep.subr.bf16.mxu0 0
        %835 = vmatpush1.bf16.xpose.msra.mxu0 0
        %836 = vmatprep.subr.bf16.mxu0 0
        %837 = vmatpush1.bf16.xpose.msra.mxu0 0
        %838 = vmatprep.subr.bf16.mxu0 0
        %839 = vmatpush1.bf16.xpose.msra.mxu0 0
        %840 = vmatprep.subr.bf16.mxu0 0
        %841 = vmatpush1.bf16.xpose.msra.mxu0 0
        %842 = vmatprep.subr.bf16.mxu0 0
        %843 = vmatpush1.bf16.xpose.msra.mxu0 0
        %844 = vmatprep.subr.bf16.mxu0 0
        %845 = vmatpush1.bf16.xpose.msra.mxu0 0
        %846 = vmatprep.subr.bf16.mxu0 0
        %847 = vmatpush1.bf16.xpose.msra.mxu0 0
        %848 = vmatprep.subr.bf16.mxu0 0
        %849 = vmatpush1.bf16.xpose.msra.mxu0 0
        %850 = vmatprep.subr.bf16.mxu0 0
        %851 = vmatpush1.bf16.xpose.msra.mxu0 0
        %852 = vmatprep.subr.bf16.mxu0 0
        %853 = vmatpush1.bf16.xpose.msra.mxu0 0
        %854 = vmatprep.subr.bf16.mxu0 0
        %855 = vmatpush1.bf16.xpose.msra.mxu0 0
        %856 = vmatprep.subr.bf16.mxu0 0
        %857 = vmatpush1.bf16.xpose.msra.mxu0 0
        %858 = vmatprep.subr.bf16.mxu0 0
        %859 = vmatpush1.bf16.xpose.msra.mxu0 0
        %860 = vmatprep.mubr.bf16.mxu0 0
        %861 = vmatmul.mubr.bf16.gmra.mrb[0].mxu0 %v382
        %v862 = vpop.f32.mrb[0].mxu0
        %v863 = vadd.f32 0.0, %v862
        %v864 = vpop.f32.mrb[0].mxu0
        %v865 = vpop.f32.mrb[0].mxu0
        %v866 = vadd.f32 0.0, %v865
        %v867 = vpop.f32.mrb[0].mxu0
        %868 = vdwg.mxu0
        %v871 = vunpack.c.l.b16 %v326
        %v872 = vunpack.c.l.b16 %v327
        %v873 = vpack.c.b16 %v872, %v871
        %v875 = vsel %vm380, %v873, 0
        %877 = vmatprep.subr.bf16.mxu0 0
        %878 = vmatpush1.bf16.xpose.msra.mxu0 %v875
        %879 = vmatprep.subr.bf16.mxu0 0
        %880 = vmatpush1.bf16.xpose.msra.mxu0 0
        %881 = vmatprep.subr.bf16.mxu0 0
        %882 = vmatpush1.bf16.xpose.msra.mxu0 0
        %883 = vmatprep.subr.bf16.mxu0 0
        %884 = vmatpush1.bf16.xpose.msra.mxu0 0
        %885 = vmatprep.subr.bf16.mxu0 0
        %886 = vmatpush1.bf16.xpose.msra.mxu0 0
        %887 = vmatprep.subr.bf16.mxu0 0
        %888 = vmatpush1.bf16.xpose.msra.mxu0 0
        %889 = vmatprep.subr.bf16.mxu0 0
        %890 = vmatpush1.bf16.xpose.msra.mxu0 0
        %891 = vmatprep.subr.bf16.mxu0 0
        %892 = vmatpush1.bf16.xpose.msra.mxu0 0
        %893 = vmatprep.subr.bf16.mxu0 0
        %894 = vmatpush1.bf16.xpose.msra.mxu0 0
        %895 = vmatprep.subr.bf16.mxu0 0
        %896 = vmatpush1.bf16.xpose.msra.mxu0 0
        %897 = vmatprep.subr.bf16.mxu0 0
        %898 = vmatpush1.bf16.xpose.msra.mxu0 0
        %899 = vmatprep.subr.bf16.mxu0 0
        %900 = vmatpush1.bf16.xpose.msra.mxu0 0
        %901 = vmatprep.subr.bf16.mxu0 0
        %902 = vmatpush1.bf16.xpose.msra.mxu0 0
        %903 = vmatprep.subr.bf16.mxu0 0
        %904 = vmatpush1.bf16.xpose.msra.mxu0 0
        %905 = vmatprep.subr.bf16.mxu0 0
        %906 = vmatpush1.bf16.xpose.msra.mxu0 0
        %907 = vmatprep.subr.bf16.mxu0 0
        %908 = vmatpush1.bf16.xpose.msra.mxu0 0
        %909 = vmatprep.mubr.bf16.mxu0 0
        %910 = vmatmul.mubr.bf16.gmra.mrb[0].mxu0 %v382
        %v911 = vpop.f32.mrb[0].mxu0
        %v912 = vadd.f32 0.0, %v911
        %v913 = vpop.f32.mrb[0].mxu0
        %v914 = vpop.f32.mrb[0].mxu0
        %v915 = vadd.f32 0.0, %v914
        %v916 = vpop.f32.mrb[0].mxu0
        %917 = vdwg.mxu0
        %v920 = vunpack.c.l.b16 %v328
        %v921 = vunpack.c.l.b16 %v329
        %v922 = vpack.c.b16 %v921, %v920
        %v924 = vsel %vm380, %v922, 0
        %926 = vmatprep.subr.bf16.mxu0 0
        %927 = vmatpush1.bf16.xpose.msra.mxu0 %v924
        %928 = vmatprep.subr.bf16.mxu0 0
        %929 = vmatpush1.bf16.xpose.msra.mxu0 0
        %930 = vmatprep.subr.bf16.mxu0 0
        %931 = vmatpush1.bf16.xpose.msra.mxu0 0
        %932 = vmatprep.subr.bf16.mxu0 0
        %933 = vmatpush1.bf16.xpose.msra.mxu0 0
        %934 = vmatprep.subr.bf16.mxu0 0
        %935 = vmatpush1.bf16.xpose.msra.mxu0 0
        %936 = vmatprep.subr.bf16.mxu0 0
        %937 = vmatpush1.bf16.xpose.msra.mxu0 0
        %938 = vmatprep.subr.bf16.mxu0 0
        %939 = vmatpush1.bf16.xpose.msra.mxu0 0
        %940 = vmatprep.subr.bf16.mxu0 0
        %941 = vmatpush1.bf16.xpose.msra.mxu0 0
        %942 = vmatprep.subr.bf16.mxu0 0
        %943 = vmatpush1.bf16.xpose.msra.mxu0 0
        %944 = vmatprep.subr.bf16.mxu0 0
        %945 = vmatpush1.bf16.xpose.msra.mxu0 0
        %946 = vmatprep.subr.bf16.mxu0 0
        %947 = vmatpush1.bf16.xpose.msra.mxu0 0
        %948 = vmatprep.subr.bf16.mxu0 0
        %949 = vmatpush1.bf16.xpose.msra.mxu0 0
        %950 = vmatprep.subr.bf16.mxu0 0
        %951 = vmatpush1.bf16.xpose.msra.mxu0 0
        %952 = vmatprep.subr.bf16.mxu0 0
        %953 = vmatpush1.bf16.xpose.msra.mxu0 0
        %954 = vmatprep.subr.bf16.mxu0 0
        %955 = vmatpush1.bf16.xpose.msra.mxu0 0
        %956 = vmatprep.subr.bf16.mxu0 0
        %957 = vmatpush1.bf16.xpose.msra.mxu0 0
        %958 = vmatprep.mubr.bf16.mxu0 0
        %959 = vmatmul.mubr.bf16.gmra.mrb[0].mxu0 %v382
        %v960 = vpop.f32.mrb[0].mxu0
        %v961 = vadd.f32 0.0, %v960
        %v962 = vpop.f32.mrb[0].mxu0
        %v963 = vpop.f32.mrb[0].mxu0
        %v964 = vadd.f32 0.0, %v963
        %v965 = vpop.f32.mrb[0].mxu0
        %966 = vdwg.mxu0
        %v969 = vunpack.c.l.b16 %v330
        %v970 = vunpack.c.l.b16 %v331
        %v971 = vpack.c.b16 %v970, %v969
        %v973 = vsel %vm380, %v971, 0
        %975 = vmatprep.subr.bf16.mxu0 0
        %976 = vmatpush1.bf16.xpose.msra.mxu0 %v973
        %977 = vmatprep.subr.bf16.mxu0 0
        %978 = vmatpush1.bf16.xpose.msra.mxu0 0
        %979 = vmatprep.subr.bf16.mxu0 0
        %980 = vmatpush1.bf16.xpose.msra.mxu0 0
        %981 = vmatprep.subr.bf16.mxu0 0
        %982 = vmatpush1.bf16.xpose.msra.mxu0 0
        %983 = vmatprep.subr.bf16.mxu0 0
        %984 = vmatpush1.bf16.xpose.msra.mxu0 0
        %985 = vmatprep.subr.bf16.mxu0 0
        %986 = vmatpush1.bf16.xpose.msra.mxu0 0
        %987 = vmatprep.subr.bf16.mxu0 0
        %988 = vmatpush1.bf16.xpose.msra.mxu0 0
        %989 = vmatprep.subr.bf16.mxu0 0
        %990 = vmatpush1.bf16.xpose.msra.mxu0 0
        %991 = vmatprep.subr.bf16.mxu0 0
        %992 = vmatpush1.bf16.xpose.msra.mxu0 0
        %993 = vmatprep.subr.bf16.mxu0 0
        %994 = vmatpush1.bf16.xpose.msra.mxu0 0
        %995 = vmatprep.subr.bf16.mxu0 0
        %996 = vmatpush1.bf16.xpose.msra.mxu0 0
        %997 = vmatprep.subr.bf16.mxu0 0
        %998 = vmatpush1.bf16.xpose.msra.mxu0 0
        %999 = vmatprep.subr.bf16.mxu0 0
        %1000 = vmatpush1.bf16.xpose.msra.mxu0 0
        %1001 = vmatprep.subr.bf16.mxu0 0
        %1002 = vmatpush1.bf16.xpose.msra.mxu0 0
        %1003 = vmatprep.subr.bf16.mxu0 0
        %1004 = vmatpush1.bf16.xpose.msra.mxu0 0
        %1005 = vmatprep.subr.bf16.mxu0 0
        %1006 = vmatpush1.bf16.xpose.msra.mxu0 0
        %1007 = vmatprep.mubr.bf16.mxu0 0
        %1008 = vmatmul.mubr.bf16.gmra.mrb[0].mxu0 %v382
        %v1009 = vpop.f32.mrb[0].mxu0
        %v1010 = vadd.f32 0.0, %v1009
        %v1011 = vpop.f32.mrb[0].mxu0
        %v1012 = vpop.f32.mrb[0].mxu0
        %v1013 = vadd.f32 0.0, %v1012
        %v1014 = vpop.f32.mrb[0].mxu0
        %1015 = vdwg.mxu0
        %v1018 = vunpack.c.l.b16 %v332
        %v1019 = vunpack.c.l.b16 %v333
        %v1020 = vpack.c.b16 %v1019, %v1018
        %v1022 = vsel %vm380, %v1020, 0
        %1024 = vmatprep.subr.bf16.mxu0 0
        %1025 = vmatpush1.bf16.xpose.msra.mxu0 %v1022
        %1026 = vmatprep.subr.bf16.mxu0 0
        %1027 = vmatpush1.bf16.xpose.msra.mxu0 0
        %1028 = vmatprep.subr.bf16.mxu0 0
        %1029 = vmatpush1.bf16.xpose.msra.mxu0 0
        %1030 = vmatprep.subr.bf16.mxu0 0
        %1031 = vmatpush1.bf16.xpose.msra.mxu0 0
        %1032 = vmatprep.subr.bf16.mxu0 0
        %1033 = vmatpush1.bf16.xpose.msra.mxu0 0
        %1034 = vmatprep.subr.bf16.mxu0 0
        %1035 = vmatpush1.bf16.xpose.msra.mxu0 0
        %1036 = vmatprep.subr.bf16.mxu0 0
        %1037 = vmatpush1.bf16.xpose.msra.mxu0 0
        %1038 = vmatprep.subr.bf16.mxu0 0
        %1039 = vmatpush1.bf16.xpose.msra.mxu0 0
        %1040 = vmatprep.subr.bf16.mxu0 0
        %1041 = vmatpush1.bf16.xpose.msra.mxu0 0
        %1042 = vmatprep.subr.bf16.mxu0 0
        %1043 = vmatpush1.bf16.xpose.msra.mxu0 0
        %1044 = vmatprep.subr.bf16.mxu0 0
        %1045 = vmatpush1.bf16.xpose.msra.mxu0 0
        %1046 = vmatprep.subr.bf16.mxu0 0
        %1047 = vmatpush1.bf16.xpose.msra.mxu0 0
        %1048 = vmatprep.subr.bf16.mxu0 0
        %1049 = vmatpush1.bf16.xpose.msra.mxu0 0
        %1050 = vmatprep.subr.bf16.mxu0 0
        %1051 = vmatpush1.bf16.xpose.msra.mxu0 0
        %1052 = vmatprep.subr.bf16.mxu0 0
        %1053 = vmatpush1.bf16.xpose.msra.mxu0 0
        %1054 = vmatprep.subr.bf16.mxu0 0
        %1055 = vmatpush1.bf16.xpose.msra.mxu0 0
        %1056 = vmatprep.mubr.bf16.mxu0 0
        %1057 = vmatmul.mubr.bf16.gmra.mrb[0].mxu0 %v382
        %v1058 = vpop.f32.mrb[0].mxu0
        %v1059 = vadd.f32 0.0, %v1058
        %v1060 = vpop.f32.mrb[0].mxu0
        %v1061 = vpop.f32.mrb[0].mxu0
        %v1062 = vadd.f32 0.0, %v1061
        %v1063 = vpop.f32.mrb[0].mxu0
        %1064 = vdwg.mxu0
        %v1067 = vunpack.c.l.b16 %v334
        %v1068 = vunpack.c.l.b16 %v335
        %v1069 = vpack.c.b16 %v1068, %v1067
        %v1071 = vsel %vm380, %v1069, 0
        %1073 = vmatprep.subr.bf16.mxu0 0
        %1074 = vmatpush1.bf16.xpose.msra.mxu0 %v1071
        %1075 = vmatprep.subr.bf16.mxu0 0
        %1076 = vmatpush1.bf16.xpose.msra.mxu0 0
        %1077 = vmatprep.subr.bf16.mxu0 0
        %1078 = vmatpush1.bf16.xpose.msra.mxu0 0
        %1079 = vmatprep.subr.bf16.mxu0 0
        %1080 = vmatpush1.bf16.xpose.msra.mxu0 0
        %1081 = vmatprep.subr.bf16.mxu0 0
        %1082 = vmatpush1.bf16.xpose.msra.mxu0 0
        %1083 = vmatprep.subr.bf16.mxu0 0
        %1084 = vmatpush1.bf16.xpose.msra.mxu0 0
        %1085 = vmatprep.subr.bf16.mxu0 0
        %1086 = vmatpush1.bf16.xpose.msra.mxu0 0
        %1087 = vmatprep.subr.bf16.mxu0 0
        %1088 = vmatpush1.bf16.xpose.msra.mxu0 0
        %1089 = vmatprep.subr.bf16.mxu0 0
        %1090 = vmatpush1.bf16.xpose.msra.mxu0 0
        %1091 = vmatprep.subr.bf16.mxu0 0
        %1092 = vmatpush1.bf16.xpose.msra.mxu0 0
        %1093 = vmatprep.subr.bf16.mxu0 0
        %1094 = vmatpush1.bf16.xpose.msra.mxu0 0
        %1095 = vmatprep.subr.bf16.mxu0 0
        %1096 = vmatpush1.bf16.xpose.msra.mxu0 0
        %1097 = vmatprep.subr.bf16.mxu0 0
        %1098 = vmatpush1.bf16.xpose.msra.mxu0 0
        %1099 = vmatprep.subr.bf16.mxu0 0
        %1100 = vmatpush1.bf16.xpose.msra.mxu0 0
        %1101 = vmatprep.subr.bf16.mxu0 0
        %1102 = vmatpush1.bf16.xpose.msra.mxu0 0
        %1103 = vmatprep.subr.bf16.mxu0 0
        %1104 = vmatpush1.bf16.xpose.msra.mxu0 0
        %1105 = vmatprep.mubr.bf16.mxu0 0
        %1106 = vmatmul.mubr.bf16.gmra.mrb[0].mxu0 %v382
        %v1107 = vpop.f32.mrb[0].mxu0
        %v1108 = vadd.f32 0.0, %v1107
        %v1109 = vpop.f32.mrb[0].mxu0
        %v1110 = vpop.f32.mrb[0].mxu0
        %v1111 = vadd.f32 0.0, %v1110
        %v1112 = vpop.f32.mrb[0].mxu0
        %1113 = vdwg.mxu0
        %v1116 = vunpack.c.l.b16 %v336
        %v1117 = vunpack.c.l.b16 %v337
        %v1118 = vpack.c.b16 %v1117, %v1116
        %v1120 = vsel %vm380, %v1118, 0
        %1122 = vmatprep.subr.bf16.mxu0 0
        %1123 = vmatpush1.bf16.xpose.msra.mxu0 %v1120
        %1124 = vmatprep.subr.bf16.mxu0 0
        %1125 = vmatpush1.bf16.xpose.msra.mxu0 0
        %1126 = vmatprep.subr.bf16.mxu0 0
        %1127 = vmatpush1.bf16.xpose.msra.mxu0 0
        %1128 = vmatprep.subr.bf16.mxu0 0
        %1129 = vmatpush1.bf16.xpose.msra.mxu0 0
        %1130 = vmatprep.subr.bf16.mxu0 0
        %1131 = vmatpush1.bf16.xpose.msra.mxu0 0
        %1132 = vmatprep.subr.bf16.mxu0 0
        %1133 = vmatpush1.bf16.xpose.msra.mxu0 0
        %1134 = vmatprep.subr.bf16.mxu0 0
        %1135 = vmatpush1.bf16.xpose.msra.mxu0 0
        %1136 = vmatprep.subr.bf16.mxu0 0
        %1137 = vmatpush1.bf16.xpose.msra.mxu0 0
        %1138 = vmatprep.subr.bf16.mxu0 0
        %1139 = vmatpush1.bf16.xpose.msra.mxu0 0
        %1140 = vmatprep.subr.bf16.mxu0 0
        %1141 = vmatpush1.bf16.xpose.msra.mxu0 0
        %1142 = vmatprep.subr.bf16.mxu0 0
        %1143 = vmatpush1.bf16.xpose.msra.mxu0 0
        %1144 = vmatprep.subr.bf16.mxu0 0
        %1145 = vmatpush1.bf16.xpose.msra.mxu0 0
        %1146 = vmatprep.subr.bf16.mxu0 0
        %1147 = vmatpush1.bf16.xpose.msra.mxu0 0
        %1148 = vmatprep.subr.bf16.mxu0 0
        %1149 = vmatpush1.bf16.xpose.msra.mxu0 0
        %1150 = vmatprep.subr.bf16.mxu0 0
        %1151 = vmatpush1.bf16.xpose.msra.mxu0 0
        %1152 = vmatprep.subr.bf16.mxu0 0
        %1153 = vmatpush1.bf16.xpose.msra.mxu0 0
        %1154 = vmatprep.mubr.bf16.mxu0 0
        %1155 = vmatmul.mubr.bf16.gmra.mrb[0].mxu0 %v382
        %v1156 = vpop.f32.mrb[0].mxu0
        %v1157 = vadd.f32 0.0, %v1156
        %v1158 = vpop.f32.mrb[0].mxu0
        %v1159 = vpop.f32.mrb[0].mxu0
        %v1160 = vadd.f32 0.0, %v1159
        %v1161 = vpop.f32.mrb[0].mxu0
        %1162 = vdwg.mxu0
        %v1165 = vunpack.c.l.b16 %v338
        %v1166 = vunpack.c.l.b16 %v339
        %v1167 = vpack.c.b16 %v1166, %v1165
        %v1169 = vsel %vm380, %v1167, 0
        %1171 = vmatprep.subr.bf16.mxu0 0
        %1172 = vmatpush1.bf16.xpose.msra.mxu0 %v1169
        %1173 = vmatprep.subr.bf16.mxu0 0
        %1174 = vmatpush1.bf16.xpose.msra.mxu0 0
        %1175 = vmatprep.subr.bf16.mxu0 0
        %1176 = vmatpush1.bf16.xpose.msra.mxu0 0
        %1177 = vmatprep.subr.bf16.mxu0 0
        %1178 = vmatpush1.bf16.xpose.msra.mxu0 0
        %1179 = vmatprep.subr.bf16.mxu0 0
        %1180 = vmatpush1.bf16.xpose.msra.mxu0 0
        %1181 = vmatprep.subr.bf16.mxu0 0
        %1182 = vmatpush1.bf16.xpose.msra.mxu0 0
        %1183 = vmatprep.subr.bf16.mxu0 0
        %1184 = vmatpush1.bf16.xpose.msra.mxu0 0
        %1185 = vmatprep.subr.bf16.mxu0 0
        %1186 = vmatpush1.bf16.xpose.msra.mxu0 0
        %1187 = vmatprep.subr.bf16.mxu0 0
        %1188 = vmatpush1.bf16.xpose.msra.mxu0 0
        %1189 = vmatprep.subr.bf16.mxu0 0
        %1190 = vmatpush1.bf16.xpose.msra.mxu0 0
        %1191 = vmatprep.subr.bf16.mxu0 0
        %1192 = vmatpush1.bf16.xpose.msra.mxu0 0
        %1193 = vmatprep.subr.bf16.mxu0 0
        %1194 = vmatpush1.bf16.xpose.msra.mxu0 0
        %1195 = vmatprep.subr.bf16.mxu0 0
        %1196 = vmatpush1.bf16.xpose.msra.mxu0 0
        %1197 = vmatprep.subr.bf16.mxu0 0
        %1198 = vmatpush1.bf16.xpose.msra.mxu0 0
        %1199 = vmatprep.subr.bf16.mxu0 0
        %1200 = vmatpush1.bf16.xpose.msra.mxu0 0
        %1201 = vmatprep.subr.bf16.mxu0 0
        %1202 = vmatpush1.bf16.xpose.msra.mxu0 0
        %1203 = vmatprep.mubr.bf16.mxu0 0
        %1204 = vmatmul.mubr.bf16.gmra.mrb[0].mxu0 %v382
        %v1205 = vpop.f32.mrb[0].mxu0
        %v1206 = vadd.f32 0.0, %v1205
        %v1207 = vpop.f32.mrb[0].mxu0
        %v1208 = vpop.f32.mrb[0].mxu0
        %v1209 = vadd.f32 0.0, %v1208
        %v1210 = vpop.f32.mrb[0].mxu0
        %1211 = vdwg.mxu0
        %v1214 = vunpack.c.l.b16 %v340
        %v1215 = vunpack.c.l.b16 %v341
        %v1216 = vpack.c.b16 %v1215, %v1214
        %v1218 = vsel %vm380, %v1216, 0
        %1220 = vmatprep.subr.bf16.mxu0 0
        %1221 = vmatpush1.bf16.xpose.msra.mxu0 %v1218
        %1222 = vmatprep.subr.bf16.mxu0 0
        %1223 = vmatpush1.bf16.xpose.msra.mxu0 0
        %1224 = vmatprep.subr.bf16.mxu0 0
        %1225 = vmatpush1.bf16.xpose.msra.mxu0 0
        %1226 = vmatprep.subr.bf16.mxu0 0
        %1227 = vmatpush1.bf16.xpose.msra.mxu0 0
        %1228 = vmatprep.subr.bf16.mxu0 0
        %1229 = vmatpush1.bf16.xpose.msra.mxu0 0
        %1230 = vmatprep.subr.bf16.mxu0 0
        %1231 = vmatpush1.bf16.xpose.msra.mxu0 0
        %1232 = vmatprep.subr.bf16.mxu0 0
        %1233 = vmatpush1.bf16.xpose.msra.mxu0 0
        %1234 = vmatprep.subr.bf16.mxu0 0
        %1235 = vmatpush1.bf16.xpose.msra.mxu0 0
        %1236 = vmatprep.subr.bf16.mxu0 0
        %1237 = vmatpush1.bf16.xpose.msra.mxu0 0
        %1238 = vmatprep.subr.bf16.mxu0 0
        %1239 = vmatpush1.bf16.xpose.msra.mxu0 0
        %1240 = vmatprep.subr.bf16.mxu0 0
        %1241 = vmatpush1.bf16.xpose.msra.mxu0 0
        %1242 = vmatprep.subr.bf16.mxu0 0
        %1243 = vmatpush1.bf16.xpose.msra.mxu0 0
        %1244 = vmatprep.subr.bf16.mxu0 0
        %1245 = vmatpush1.bf16.xpose.msra.mxu0 0
        %1246 = vmatprep.subr.bf16.mxu0 0
        %1247 = vmatpush1.bf16.xpose.msra.mxu0 0
        %1248 = vmatprep.subr.bf16.mxu0 0
        %1249 = vmatpush1.bf16.xpose.msra.mxu0 0
        %1250 = vmatprep.subr.bf16.mxu0 0
        %1251 = vmatpush1.bf16.xpose.msra.mxu0 0
        %1252 = vmatprep.mubr.bf16.mxu0 0
        %1253 = vmatmul.mubr.bf16.gmra.mrb[0].mxu0 %v382
        %v1254 = vpop.f32.mrb[0].mxu0
        %v1255 = vadd.f32 0.0, %v1254
        %v1256 = vpop.f32.mrb[0].mxu0
        %v1257 = vpop.f32.mrb[0].mxu0
        %v1258 = vadd.f32 0.0, %v1257
        %v1259 = vpop.f32.mrb[0].mxu0
        %1260 = vdwg.mxu0
        %v1263 = vunpack.c.l.b16 %v342
        %v1264 = vunpack.c.l.b16 %v343
        %v1265 = vpack.c.b16 %v1264, %v1263
        %v1267 = vsel %vm380, %v1265, 0
        %1269 = vmatprep.subr.bf16.mxu0 0
        %1270 = vmatpush1.bf16.xpose.msra.mxu0 %v1267
        %1271 = vmatprep.subr.bf16.mxu0 0
        %1272 = vmatpush1.bf16.xpose.msra.mxu0 0
        %1273 = vmatprep.subr.bf16.mxu0 0
        %1274 = vmatpush1.bf16.xpose.msra.mxu0 0
        %1275 = vmatprep.subr.bf16.mxu0 0
        %1276 = vmatpush1.bf16.xpose.msra.mxu0 0
        %1277 = vmatprep.subr.bf16.mxu0 0
        %1278 = vmatpush1.bf16.xpose.msra.mxu0 0
        %1279 = vmatprep.subr.bf16.mxu0 0
        %1280 = vmatpush1.bf16.xpose.msra.mxu0 0
        %1281 = vmatprep.subr.bf16.mxu0 0
        %1282 = vmatpush1.bf16.xpose.msra.mxu0 0
        %1283 = vmatprep.subr.bf16.mxu0 0
        %1284 = vmatpush1.bf16.xpose.msra.mxu0 0
        %1285 = vmatprep.subr.bf16.mxu0 0
        %1286 = vmatpush1.bf16.xpose.msra.mxu0 0
        %1287 = vmatprep.subr.bf16.mxu0 0
        %1288 = vmatpush1.bf16.xpose.msra.mxu0 0
        %1289 = vmatprep.subr.bf16.mxu0 0
        %1290 = vmatpush1.bf16.xpose.msra.mxu0 0
        %1291 = vmatprep.subr.bf16.mxu0 0
        %1292 = vmatpush1.bf16.xpose.msra.mxu0 0
        %1293 = vmatprep.subr.bf16.mxu0 0
        %1294 = vmatpush1.bf16.xpose.msra.mxu0 0
        %1295 = vmatprep.subr.bf16.mxu0 0
        %1296 = vmatpush1.bf16.xpose.msra.mxu0 0
        %1297 = vmatprep.subr.bf16.mxu0 0
        %1298 = vmatpush1.bf16.xpose.msra.mxu0 0
        %1299 = vmatprep.subr.bf16.mxu0 0
        %1300 = vmatpush1.bf16.xpose.msra.mxu0 0
        %1301 = vmatprep.mubr.bf16.mxu0 0
        %1302 = vmatmul.mubr.bf16.gmra.mrb[0].mxu0 %v382
        %v1303 = vpop.f32.mrb[0].mxu0
        %v1304 = vadd.f32 0.0, %v1303
        %v1305 = vpop.f32.mrb[0].mxu0
        %v1306 = vpop.f32.mrb[0].mxu0
        %v1307 = vadd.f32 0.0, %v1306
        %v1308 = vpop.f32.mrb[0].mxu0
        %1309 = vdwg.mxu0
        %v1312 = vunpack.c.l.b16 %v344
        %v1313 = vunpack.c.l.b16 %v345
        %v1314 = vpack.c.b16 %v1313, %v1312
        %v1316 = vsel %vm380, %v1314, 0
        %1318 = vmatprep.subr.bf16.mxu0 0
        %1319 = vmatpush1.bf16.xpose.msra.mxu0 %v1316
        %1320 = vmatprep.subr.bf16.mxu0 0
        %1321 = vmatpush1.bf16.xpose.msra.mxu0 0
        %1322 = vmatprep.subr.bf16.mxu0 0
        %1323 = vmatpush1.bf16.xpose.msra.mxu0 0
        %1324 = vmatprep.subr.bf16.mxu0 0
        %1325 = vmatpush1.bf16.xpose.msra.mxu0 0
        %1326 = vmatprep.subr.bf16.mxu0 0
        %1327 = vmatpush1.bf16.xpose.msra.mxu0 0
        %1328 = vmatprep.subr.bf16.mxu0 0
        %1329 = vmatpush1.bf16.xpose.msra.mxu0 0
        %1330 = vmatprep.subr.bf16.mxu0 0
        %1331 = vmatpush1.bf16.xpose.msra.mxu0 0
        %1332 = vmatprep.subr.bf16.mxu0 0
        %1333 = vmatpush1.bf16.xpose.msra.mxu0 0
        %1334 = vmatprep.subr.bf16.mxu0 0
        %1335 = vmatpush1.bf16.xpose.msra.mxu0 0
        %1336 = vmatprep.subr.bf16.mxu0 0
        %1337 = vmatpush1.bf16.xpose.msra.mxu0 0
        %1338 = vmatprep.subr.bf16.mxu0 0
        %1339 = vmatpush1.bf16.xpose.msra.mxu0 0
        %1340 = vmatprep.subr.bf16.mxu0 0
        %1341 = vmatpush1.bf16.xpose.msra.mxu0 0
        %1342 = vmatprep.subr.bf16.mxu0 0
        %1343 = vmatpush1.bf16.xpose.msra.mxu0 0
        %1344 = vmatprep.subr.bf16.mxu0 0
        %1345 = vmatpush1.bf16.xpose.msra.mxu0 0
        %1346 = vmatprep.subr.bf16.mxu0 0
        %1347 = vmatpush1.bf16.xpose.msra.mxu0 0
        %1348 = vmatprep.subr.bf16.mxu0 0
        %1349 = vmatpush1.bf16.xpose.msra.mxu0 0
        %1350 = vmatprep.mubr.bf16.mxu0 0
        %1351 = vmatmul.mubr.bf16.gmra.mrb[0].mxu0 %v382
        %v1352 = vpop.f32.mrb[0].mxu0
        %v1353 = vadd.f32 0.0, %v1352
        %v1354 = vpop.f32.mrb[0].mxu0
        %v1355 = vpop.f32.mrb[0].mxu0
        %v1356 = vadd.f32 0.0, %v1355
        %v1357 = vpop.f32.mrb[0].mxu0
        %1358 = vdwg.mxu0
        %v1361 = vunpack.c.l.b16 %v346
        %v1362 = vunpack.c.l.b16 %v347
        %v1363 = vpack.c.b16 %v1362, %v1361
        %v1365 = vsel %vm380, %v1363, 0
        %1367 = vmatprep.subr.bf16.mxu0 0
        %1368 = vmatpush1.bf16.xpose.msra.mxu0 %v1365
        %1369 = vmatprep.subr.bf16.mxu0 0
        %1370 = vmatpush1.bf16.xpose.msra.mxu0 0
        %1371 = vmatprep.subr.bf16.mxu0 0
        %1372 = vmatpush1.bf16.xpose.msra.mxu0 0
        %1373 = vmatprep.subr.bf16.mxu0 0
        %1374 = vmatpush1.bf16.xpose.msra.mxu0 0
        %1375 = vmatprep.subr.bf16.mxu0 0
        %1376 = vmatpush1.bf16.xpose.msra.mxu0 0
        %1377 = vmatprep.subr.bf16.mxu0 0
        %1378 = vmatpush1.bf16.xpose.msra.mxu0 0
        %1379 = vmatprep.subr.bf16.mxu0 0
        %1380 = vmatpush1.bf16.xpose.msra.mxu0 0
        %1381 = vmatprep.subr.bf16.mxu0 0
        %1382 = vmatpush1.bf16.xpose.msra.mxu0 0
        %1383 = vmatprep.subr.bf16.mxu0 0
        %1384 = vmatpush1.bf16.xpose.msra.mxu0 0
        %1385 = vmatprep.subr.bf16.mxu0 0
        %1386 = vmatpush1.bf16.xpose.msra.mxu0 0
        %1387 = vmatprep.subr.bf16.mxu0 0
        %1388 = vmatpush1.bf16.xpose.msra.mxu0 0
        %1389 = vmatprep.subr.bf16.mxu0 0
        %1390 = vmatpush1.bf16.xpose.msra.mxu0 0
        %1391 = vmatprep.subr.bf16.mxu0 0
        %1392 = vmatpush1.bf16.xpose.msra.mxu0 0
        %1393 = vmatprep.subr.bf16.mxu0 0
        %1394 = vmatpush1.bf16.xpose.msra.mxu0 0
        %1395 = vmatprep.subr.bf16.mxu0 0
        %1396 = vmatpush1.bf16.xpose.msra.mxu0 0
        %1397 = vmatprep.subr.bf16.mxu0 0
        %1398 = vmatpush1.bf16.xpose.msra.mxu0 0
        %1399 = vmatprep.mubr.bf16.mxu0 0
        %1400 = vmatmul.mubr.bf16.gmra.mrb[0].mxu0 %v382
        %v1401 = vpop.f32.mrb[0].mxu0
        %v1402 = vadd.f32 0.0, %v1401
        %v1403 = vpop.f32.mrb[0].mxu0
        %v1404 = vpop.f32.mrb[0].mxu0
        %v1405 = vadd.f32 0.0, %v1404
        %v1406 = vpop.f32.mrb[0].mxu0
        %1407 = vdwg.mxu0
        %v1410 = vunpack.c.l.b16 %v348
        %v1411 = vunpack.c.l.b16 %v349
        %v1412 = vpack.c.b16 %v1411, %v1410
        %v1414 = vsel %vm380, %v1412, 0
        %1416 = vmatprep.subr.bf16.mxu0 0
        %1417 = vmatpush1.bf16.xpose.msra.mxu0 %v1414
        %1418 = vmatprep.subr.bf16.mxu0 0
        %1419 = vmatpush1.bf16.xpose.msra.mxu0 0
        %1420 = vmatprep.subr.bf16.mxu0 0
        %1421 = vmatpush1.bf16.xpose.msra.mxu0 0
        %1422 = vmatprep.subr.bf16.mxu0 0
        %1423 = vmatpush1.bf16.xpose.msra.mxu0 0
        %1424 = vmatprep.subr.bf16.mxu0 0
        %1425 = vmatpush1.bf16.xpose.msra.mxu0 0
        %1426 = vmatprep.subr.bf16.mxu0 0
        %1427 = vmatpush1.bf16.xpose.msra.mxu0 0
        %1428 = vmatprep.subr.bf16.mxu0 0
        %1429 = vmatpush1.bf16.xpose.msra.mxu0 0
        %1430 = vmatprep.subr.bf16.mxu0 0
        %1431 = vmatpush1.bf16.xpose.msra.mxu0 0
        %1432 = vmatprep.subr.bf16.mxu0 0
        %1433 = vmatpush1.bf16.xpose.msra.mxu0 0
        %1434 = vmatprep.subr.bf16.mxu0 0
        %1435 = vmatpush1.bf16.xpose.msra.mxu0 0
        %1436 = vmatprep.subr.bf16.mxu0 0
        %1437 = vmatpush1.bf16.xpose.msra.mxu0 0
        %1438 = vmatprep.subr.bf16.mxu0 0
        %1439 = vmatpush1.bf16.xpose.msra.mxu0 0
        %1440 = vmatprep.subr.bf16.mxu0 0
        %1441 = vmatpush1.bf16.xpose.msra.mxu0 0
        %1442 = vmatprep.subr.bf16.mxu0 0
        %1443 = vmatpush1.bf16.xpose.msra.mxu0 0
        %1444 = vmatprep.subr.bf16.mxu0 0
        %1445 = vmatpush1.bf16.xpose.msra.mxu0 0
        %1446 = vmatprep.subr.bf16.mxu0 0
        %1447 = vmatpush1.bf16.xpose.msra.mxu0 0
        %1448 = vmatprep.mubr.bf16.mxu0 0
        %1449 = vmatmul.mubr.bf16.gmra.mrb[0].mxu0 %v382
        %v1450 = vpop.f32.mrb[0].mxu0
        %v1451 = vadd.f32 0.0, %v1450
        %v1452 = vpop.f32.mrb[0].mxu0
        %v1453 = vpop.f32.mrb[0].mxu0
        %v1454 = vadd.f32 0.0, %v1453
        %v1455 = vpop.f32.mrb[0].mxu0
        %1456 = vdwg.mxu0
        %v1459 = vunpack.c.l.b16 %v350
        %v1460 = vunpack.c.l.b16 %v351
        %v1461 = vpack.c.b16 %v1460, %v1459
        %v1463 = vsel %vm380, %v1461, 0
        %1465 = vmatprep.subr.bf16.mxu0 0
        %1466 = vmatpush1.bf16.xpose.msra.mxu0 %v1463
        %1467 = vmatprep.subr.bf16.mxu0 0
        %1468 = vmatpush1.bf16.xpose.msra.mxu0 0
        %1469 = vmatprep.subr.bf16.mxu0 0
        %1470 = vmatpush1.bf16.xpose.msra.mxu0 0
        %1471 = vmatprep.subr.bf16.mxu0 0
        %1472 = vmatpush1.bf16.xpose.msra.mxu0 0
        %1473 = vmatprep.subr.bf16.mxu0 0
        %1474 = vmatpush1.bf16.xpose.msra.mxu0 0
        %1475 = vmatprep.subr.bf16.mxu0 0
        %1476 = vmatpush1.bf16.xpose.msra.mxu0 0
        %1477 = vmatprep.subr.bf16.mxu0 0
        %1478 = vmatpush1.bf16.xpose.msra.mxu0 0
        %1479 = vmatprep.subr.bf16.mxu0 0
        %1480 = vmatpush1.bf16.xpose.msra.mxu0 0
        %1481 = vmatprep.subr.bf16.mxu0 0
        %1482 = vmatpush1.bf16.xpose.msra.mxu0 0
        %1483 = vmatprep.subr.bf16.mxu0 0
        %1484 = vmatpush1.bf16.xpose.msra.mxu0 0
        %1485 = vmatprep.subr.bf16.mxu0 0
        %1486 = vmatpush1.bf16.xpose.msra.mxu0 0
        %1487 = vmatprep.subr.bf16.mxu0 0
        %1488 = vmatpush1.bf16.xpose.msra.mxu0 0
        %1489 = vmatprep.subr.bf16.mxu0 0
        %1490 = vmatpush1.bf16.xpose.msra.mxu0 0
        %1491 = vmatprep.subr.bf16.mxu0 0
        %1492 = vmatpush1.bf16.xpose.msra.mxu0 0
        %1493 = vmatprep.subr.bf16.mxu0 0
        %1494 = vmatpush1.bf16.xpose.msra.mxu0 0
        %1495 = vmatprep.subr.bf16.mxu0 0
        %1496 = vmatpush1.bf16.xpose.msra.mxu0 0
        %1497 = vmatprep.mubr.bf16.mxu0 0
        %1498 = vmatmul.mubr.bf16.gmra.mrb[0].mxu0 %v382
        %v1499 = vpop.f32.mrb[0].mxu0
        %v1500 = vadd.f32 0.0, %v1499
        %v1501 = vpop.f32.mrb[0].mxu0
        %v1502 = vpop.f32.mrb[0].mxu0
        %v1503 = vadd.f32 0.0, %v1502
        %v1504 = vpop.f32.mrb[0].mxu0
        %1505 = vdwg.mxu0
        %v1508 = vunpack.c.l.b16 %v352
        %v1509 = vunpack.c.l.b16 %v353
        %v1510 = vpack.c.b16 %v1509, %v1508
        %v1512 = vsel %vm380, %v1510, 0
        %1514 = vmatprep.subr.bf16.mxu0 0
        %1515 = vmatpush1.bf16.xpose.msra.mxu0 %v1512
        %1516 = vmatprep.subr.bf16.mxu0 0
        %1517 = vmatpush1.bf16.xpose.msra.mxu0 0
        %1518 = vmatprep.subr.bf16.mxu0 0
        %1519 = vmatpush1.bf16.xpose.msra.mxu0 0
        %1520 = vmatprep.subr.bf16.mxu0 0
        %1521 = vmatpush1.bf16.xpose.msra.mxu0 0
        %1522 = vmatprep.subr.bf16.mxu0 0
        %1523 = vmatpush1.bf16.xpose.msra.mxu0 0
        %1524 = vmatprep.subr.bf16.mxu0 0
        %1525 = vmatpush1.bf16.xpose.msra.mxu0 0
        %1526 = vmatprep.subr.bf16.mxu0 0
        %1527 = vmatpush1.bf16.xpose.msra.mxu0 0
        %1528 = vmatprep.subr.bf16.mxu0 0
        %1529 = vmatpush1.bf16.xpose.msra.mxu0 0
        %1530 = vmatprep.subr.bf16.mxu0 0
        %1531 = vmatpush1.bf16.xpose.msra.mxu0 0
        %1532 = vmatprep.subr.bf16.mxu0 0
        %1533 = vmatpush1.bf16.xpose.msra.mxu0 0
        %1534 = vmatprep.subr.bf16.mxu0 0
        %1535 = vmatpush1.bf16.xpose.msra.mxu0 0
        %1536 = vmatprep.subr.bf16.mxu0 0
        %1537 = vmatpush1.bf16.xpose.msra.mxu0 0
        %1538 = vmatprep.subr.bf16.mxu0 0
        %1539 = vmatpush1.bf16.xpose.msra.mxu0 0
        %1540 = vmatprep.subr.bf16.mxu0 0
        %1541 = vmatpush1.bf16.xpose.msra.mxu0 0
        %1542 = vmatprep.subr.bf16.mxu0 0
        %1543 = vmatpush1.bf16.xpose.msra.mxu0 0
        %1544 = vmatprep.subr.bf16.mxu0 0
        %1545 = vmatpush1.bf16.xpose.msra.mxu0 0
        %1546 = vmatprep.mubr.bf16.mxu0 0
        %1547 = vmatmul.mubr.bf16.gmra.mrb[0].mxu0 %v382
        %v1548 = vpop.f32.mrb[0].mxu0
        %v1549 = vadd.f32 0.0, %v1548
        %v1550 = vpop.f32.mrb[0].mxu0
        %v1551 = vpop.f32.mrb[0].mxu0
        %v1552 = vadd.f32 0.0, %v1551
        %v1553 = vpop.f32.mrb[0].mxu0
        %1554 = vdwg.mxu0
        %vm1555 = vcmask 97280
        %v1557 = vsel %vm1555, %v814, 0
        %v1560 = vsel %vm1555, %v817, 0
        %v1563 = vsel %vm1555, %v422, 0
        %v1566 = vsel %vm1555, %v425, 0
        %1568 = vmatprep.subr.mxu0 0.0
        %1569 = vmatpush1.xpose.msra.mxu0 %v1563
        %1570 = vmatprep.subr.mxu0 0.0
        %1571 = vmatpush1.xpose.msra.mxu0 %v1566
        %1572 = vmatprep.subr.mxu0 0.0
        %1573 = vmatpush1.xpose.msra.mxu0 0.0
        %1574 = vmatprep.subr.mxu0 0.0
        %1575 = vmatpush1.xpose.msra.mxu0 0.0
        %1576 = vmatprep.subr.mxu0 0.0
        %1577 = vmatpush1.xpose.msra.mxu0 0.0
        %1578 = vmatprep.subr.mxu0 0.0
        %1579 = vmatpush1.xpose.msra.mxu0 0.0
        %1580 = vmatprep.subr.mxu0 0.0
        %1581 = vmatpush1.xpose.msra.mxu0 0.0
        %1582 = vmatprep.subr.mxu0 0.0
        %1583 = vmatpush1.xpose.msra.mxu0 0.0
        %1584 = vmatprep.subr.mxu0 0.0
        %1585 = vmatpush1.xpose.msra.mxu0 0.0
        %1586 = vmatprep.subr.mxu0 0.0
        %1587 = vmatpush1.xpose.msra.mxu0 0.0
        %1588 = vmatprep.subr.mxu0 0.0
        %1589 = vmatpush1.xpose.msra.mxu0 0.0
        %1590 = vmatprep.subr.mxu0 0.0
        %1591 = vmatpush1.xpose.msra.mxu0 0.0
        %1592 = vmatprep.subr.mxu0 0.0
        %1593 = vmatpush1.xpose.msra.mxu0 0.0
        %1594 = vmatprep.subr.mxu0 0.0
        %1595 = vmatpush1.xpose.msra.mxu0 0.0
        %1596 = vmatprep.subr.mxu0 0.0
        %1597 = vmatpush1.xpose.msra.mxu0 0.0
        %1598 = vmatprep.subr.mxu0 0.0
        %1599 = vmatpush1.xpose.msra.mxu0 0.0
        %1600 = vmatprep.subr.mxu0 0.0
        %1601 = vmatpush1.xpose.msra.mxu0 0.0
        %1602 = vmatprep.subr.mxu0 0.0
        %1603 = vmatpush1.xpose.msra.mxu0 0.0
        %1604 = vmatprep.subr.mxu0 0.0
        %1605 = vmatpush1.xpose.msra.mxu0 0.0
        %1606 = vmatprep.subr.mxu0 0.0
        %1607 = vmatpush1.xpose.msra.mxu0 0.0
        %1608 = vmatprep.subr.mxu0 0.0
        %1609 = vmatpush1.xpose.msra.mxu0 0.0
        %1610 = vmatprep.subr.mxu0 0.0
        %1611 = vmatpush1.xpose.msra.mxu0 0.0
        %1612 = vmatprep.subr.mxu0 0.0
        %1613 = vmatpush1.xpose.msra.mxu0 0.0
        %1614 = vmatprep.subr.mxu0 0.0
        %1615 = vmatpush1.xpose.msra.mxu0 0.0
        %1616 = vmatprep.subr.mxu0 0.0
        %1617 = vmatpush1.xpose.msra.mxu0 0.0
        %1618 = vmatprep.subr.mxu0 0.0
        %1619 = vmatpush1.xpose.msra.mxu0 0.0
        %1620 = vmatprep.subr.mxu0 0.0
        %1621 = vmatpush1.xpose.msra.mxu0 0.0
        %1622 = vmatprep.subr.mxu0 0.0
        %1623 = vmatpush1.xpose.msra.mxu0 0.0
        %1624 = vmatprep.subr.mxu0 0.0
        %1625 = vmatpush1.xpose.msra.mxu0 0.0
        %1626 = vmatprep.subr.mxu0 0.0
        %1627 = vmatpush1.xpose.msra.mxu0 0.0
        %1628 = vmatprep.subr.mxu0 0.0
        %1629 = vmatpush1.xpose.msra.mxu0 0.0
        %1630 = vmatprep.subr.mxu0 0.0
        %1631 = vmatpush1.xpose.msra.mxu0 0.0
        %1632 = vmatprep.mubr.f32.mxu0 0.0
        %1633 = vmatmul.mubr.f32.gmra.mrb[0].mxu0 %v1557
        %v1634 = vpop.f32.mrb[0].mxu0
        %v1635 = vadd.f32 0.0, %v1634
        %v1636 = vpop.f32.mrb[0].mxu0
        %1637 = vmatprep.mubr.f32.mxu0 0.0
        %1638 = vmatmul.mubr.f32.gmra.mrb[0].mxu0 %v1560
        %v1639 = vpop.f32.mrb[0].mxu0
        %v1640 = vadd.f32 0.0, %v1639
        %v1641 = vpop.f32.mrb[0].mxu0
        %1642 = vdwg.mxu0
        %v1644 = vsel %vm1555, %v863, 0
        %v1647 = vsel %vm1555, %v866, 0
        %v1650 = vsel %vm1555, %v471, 0
        %v1653 = vsel %vm1555, %v474, 0
        %1655 = vmatprep.subr.mxu0 0.0
        %1656 = vmatpush1.xpose.msra.mxu0 %v1650
        %1657 = vmatprep.subr.mxu0 0.0
        %1658 = vmatpush1.xpose.msra.mxu0 %v1653
        %1659 = vmatprep.subr.mxu0 0.0
        %1660 = vmatpush1.xpose.msra.mxu0 0.0
        %1661 = vmatprep.subr.mxu0 0.0
        %1662 = vmatpush1.xpose.msra.mxu0 0.0
        %1663 = vmatprep.subr.mxu0 0.0
        %1664 = vmatpush1.xpose.msra.mxu0 0.0
        %1665 = vmatprep.subr.mxu0 0.0
        %1666 = vmatpush1.xpose.msra.mxu0 0.0
        %1667 = vmatprep.subr.mxu0 0.0
        %1668 = vmatpush1.xpose.msra.mxu0 0.0
        %1669 = vmatprep.subr.mxu0 0.0
        %1670 = vmatpush1.xpose.msra.mxu0 0.0
        %1671 = vmatprep.subr.mxu0 0.0
        %1672 = vmatpush1.xpose.msra.mxu0 0.0
        %1673 = vmatprep.subr.mxu0 0.0
        %1674 = vmatpush1.xpose.msra.mxu0 0.0
        %1675 = vmatprep.subr.mxu0 0.0
        %1676 = vmatpush1.xpose.msra.mxu0 0.0
        %1677 = vmatprep.subr.mxu0 0.0
        %1678 = vmatpush1.xpose.msra.mxu0 0.0
        %1679 = vmatprep.subr.mxu0 0.0
        %1680 = vmatpush1.xpose.msra.mxu0 0.0
        %1681 = vmatprep.subr.mxu0 0.0
        %1682 = vmatpush1.xpose.msra.mxu0 0.0
        %1683 = vmatprep.subr.mxu0 0.0
        %1684 = vmatpush1.xpose.msra.mxu0 0.0
        %1685 = vmatprep.subr.mxu0 0.0
        %1686 = vmatpush1.xpose.msra.mxu0 0.0
        %1687 = vmatprep.subr.mxu0 0.0
        %1688 = vmatpush1.xpose.msra.mxu0 0.0
        %1689 = vmatprep.subr.mxu0 0.0
        %1690 = vmatpush1.xpose.msra.mxu0 0.0
        %1691 = vmatprep.subr.mxu0 0.0
        %1692 = vmatpush1.xpose.msra.mxu0 0.0
        %1693 = vmatprep.subr.mxu0 0.0
        %1694 = vmatpush1.xpose.msra.mxu0 0.0
        %1695 = vmatprep.subr.mxu0 0.0
        %1696 = vmatpush1.xpose.msra.mxu0 0.0
        %1697 = vmatprep.subr.mxu0 0.0
        %1698 = vmatpush1.xpose.msra.mxu0 0.0
        %1699 = vmatprep.subr.mxu0 0.0
        %1700 = vmatpush1.xpose.msra.mxu0 0.0
        %1701 = vmatprep.subr.mxu0 0.0
        %1702 = vmatpush1.xpose.msra.mxu0 0.0
        %1703 = vmatprep.subr.mxu0 0.0
        %1704 = vmatpush1.xpose.msra.mxu0 0.0
        %1705 = vmatprep.subr.mxu0 0.0
        %1706 = vmatpush1.xpose.msra.mxu0 0.0
        %1707 = vmatprep.subr.mxu0 0.0
        %1708 = vmatpush1.xpose.msra.mxu0 0.0
        %1709 = vmatprep.subr.mxu0 0.0
        %1710 = vmatpush1.xpose.msra.mxu0 0.0
        %1711 = vmatprep.subr.mxu0 0.0
        %1712 = vmatpush1.xpose.msra.mxu0 0.0
        %1713 = vmatprep.subr.mxu0 0.0
        %1714 = vmatpush1.xpose.msra.mxu0 0.0
        %1715 = vmatprep.subr.mxu0 0.0
        %1716 = vmatpush1.xpose.msra.mxu0 0.0
        %1717 = vmatprep.subr.mxu0 0.0
        %1718 = vmatpush1.xpose.msra.mxu0 0.0
        %1719 = vmatprep.mubr.f32.mxu0 0.0
        %1720 = vmatmul.mubr.f32.gmra.mrb[0].mxu0 %v1644
        %v1721 = vpop.f32.mrb[0].mxu0
        %v1722 = vadd.f32 0.0, %v1721
        %v1723 = vpop.f32.mrb[0].mxu0
        %1724 = vmatprep.mubr.f32.mxu0 0.0
        %1725 = vmatmul.mubr.f32.gmra.mrb[0].mxu0 %v1647
        %v1726 = vpop.f32.mrb[0].mxu0
        %v1727 = vadd.f32 0.0, %v1726
        %v1728 = vpop.f32.mrb[0].mxu0
        %1729 = vdwg.mxu0
        %v1731 = vsel %vm1555, %v912, 0
        %v1734 = vsel %vm1555, %v915, 0
        %v1737 = vsel %vm1555, %v520, 0
        %v1740 = vsel %vm1555, %v523, 0
        %1742 = vmatprep.subr.mxu0 0.0
        %1743 = vmatpush1.xpose.msra.mxu0 %v1737
        %1744 = vmatprep.subr.mxu0 0.0
        %1745 = vmatpush1.xpose.msra.mxu0 %v1740
        %1746 = vmatprep.subr.mxu0 0.0
        %1747 = vmatpush1.xpose.msra.mxu0 0.0
        %1748 = vmatprep.subr.mxu0 0.0
        %1749 = vmatpush1.xpose.msra.mxu0 0.0
        %1750 = vmatprep.subr.mxu0 0.0
        %1751 = vmatpush1.xpose.msra.mxu0 0.0
        %1752 = vmatprep.subr.mxu0 0.0
        %1753 = vmatpush1.xpose.msra.mxu0 0.0
        %1754 = vmatprep.subr.mxu0 0.0
        %1755 = vmatpush1.xpose.msra.mxu0 0.0
        %1756 = vmatprep.subr.mxu0 0.0
        %1757 = vmatpush1.xpose.msra.mxu0 0.0
        %1758 = vmatprep.subr.mxu0 0.0
        %1759 = vmatpush1.xpose.msra.mxu0 0.0
        %1760 = vmatprep.subr.mxu0 0.0
        %1761 = vmatpush1.xpose.msra.mxu0 0.0
        %1762 = vmatprep.subr.mxu0 0.0
        %1763 = vmatpush1.xpose.msra.mxu0 0.0
        %1764 = vmatprep.subr.mxu0 0.0
        %1765 = vmatpush1.xpose.msra.mxu0 0.0
        %1766 = vmatprep.subr.mxu0 0.0
        %1767 = vmatpush1.xpose.msra.mxu0 0.0
        %1768 = vmatprep.subr.mxu0 0.0
        %1769 = vmatpush1.xpose.msra.mxu0 0.0
        %1770 = vmatprep.subr.mxu0 0.0
        %1771 = vmatpush1.xpose.msra.mxu0 0.0
        %1772 = vmatprep.subr.mxu0 0.0
        %1773 = vmatpush1.xpose.msra.mxu0 0.0
        %1774 = vmatprep.subr.mxu0 0.0
        %1775 = vmatpush1.xpose.msra.mxu0 0.0
        %1776 = vmatprep.subr.mxu0 0.0
        %1777 = vmatpush1.xpose.msra.mxu0 0.0
        %1778 = vmatprep.subr.mxu0 0.0
        %1779 = vmatpush1.xpose.msra.mxu0 0.0
        %1780 = vmatprep.subr.mxu0 0.0
        %1781 = vmatpush1.xpose.msra.mxu0 0.0
        %1782 = vmatprep.subr.mxu0 0.0
        %1783 = vmatpush1.xpose.msra.mxu0 0.0
        %1784 = vmatprep.subr.mxu0 0.0
        %1785 = vmatpush1.xpose.msra.mxu0 0.0
        %1786 = vmatprep.subr.mxu0 0.0
        %1787 = vmatpush1.xpose.msra.mxu0 0.0
        %1788 = vmatprep.subr.mxu0 0.0
        %1789 = vmatpush1.xpose.msra.mxu0 0.0
        %1790 = vmatprep.subr.mxu0 0.0
        %1791 = vmatpush1.xpose.msra.mxu0 0.0
        %1792 = vmatprep.subr.mxu0 0.0
        %1793 = vmatpush1.xpose.msra.mxu0 0.0
        %1794 = vmatprep.subr.mxu0 0.0
        %1795 = vmatpush1.xpose.msra.mxu0 0.0
        %1796 = vmatprep.subr.mxu0 0.0
        %1797 = vmatpush1.xpose.msra.mxu0 0.0
        %1798 = vmatprep.subr.mxu0 0.0
        %1799 = vmatpush1.xpose.msra.mxu0 0.0
        %1800 = vmatprep.subr.mxu0 0.0
        %1801 = vmatpush1.xpose.msra.mxu0 0.0
        %1802 = vmatprep.subr.mxu0 0.0
        %1803 = vmatpush1.xpose.msra.mxu0 0.0
        %1804 = vmatprep.subr.mxu0 0.0
        %1805 = vmatpush1.xpose.msra.mxu0 0.0
        %1806 = vmatprep.mubr.f32.mxu0 0.0
        %1807 = vmatmul.mubr.f32.gmra.mrb[0].mxu0 %v1731
        %v1808 = vpop.f32.mrb[0].mxu0
        %v1809 = vadd.f32 0.0, %v1808
        %v1810 = vpop.f32.mrb[0].mxu0
        %1811 = vmatprep.mubr.f32.mxu0 0.0
        %1812 = vmatmul.mubr.f32.gmra.mrb[0].mxu0 %v1734
        %v1813 = vpop.f32.mrb[0].mxu0
        %v1814 = vadd.f32 0.0, %v1813
        %v1815 = vpop.f32.mrb[0].mxu0
        %1816 = vdwg.mxu0
        %v1818 = vsel %vm1555, %v961, 0
        %v1821 = vsel %vm1555, %v964, 0
        %v1824 = vsel %vm1555, %v569, 0
        %v1827 = vsel %vm1555, %v572, 0
        %1829 = vmatprep.subr.mxu0 0.0
        %1830 = vmatpush1.xpose.msra.mxu0 %v1824
        %1831 = vmatprep.subr.mxu0 0.0
        %1832 = vmatpush1.xpose.msra.mxu0 %v1827
        %1833 = vmatprep.subr.mxu0 0.0
        %1834 = vmatpush1.xpose.msra.mxu0 0.0
        %1835 = vmatprep.subr.mxu0 0.0
        %1836 = vmatpush1.xpose.msra.mxu0 0.0
        %1837 = vmatprep.subr.mxu0 0.0
        %1838 = vmatpush1.xpose.msra.mxu0 0.0
        %1839 = vmatprep.subr.mxu0 0.0
        %1840 = vmatpush1.xpose.msra.mxu0 0.0
        %1841 = vmatprep.subr.mxu0 0.0
        %1842 = vmatpush1.xpose.msra.mxu0 0.0
        %1843 = vmatprep.subr.mxu0 0.0
        %1844 = vmatpush1.xpose.msra.mxu0 0.0
        %1845 = vmatprep.subr.mxu0 0.0
        %1846 = vmatpush1.xpose.msra.mxu0 0.0
        %1847 = vmatprep.subr.mxu0 0.0
        %1848 = vmatpush1.xpose.msra.mxu0 0.0
        %1849 = vmatprep.subr.mxu0 0.0
        %1850 = vmatpush1.xpose.msra.mxu0 0.0
        %1851 = vmatprep.subr.mxu0 0.0
        %1852 = vmatpush1.xpose.msra.mxu0 0.0
        %1853 = vmatprep.subr.mxu0 0.0
        %1854 = vmatpush1.xpose.msra.mxu0 0.0
        %1855 = vmatprep.subr.mxu0 0.0
        %1856 = vmatpush1.xpose.msra.mxu0 0.0
        %1857 = vmatprep.subr.mxu0 0.0
        %1858 = vmatpush1.xpose.msra.mxu0 0.0
        %1859 = vmatprep.subr.mxu0 0.0
        %1860 = vmatpush1.xpose.msra.mxu0 0.0
        %1861 = vmatprep.subr.mxu0 0.0
        %1862 = vmatpush1.xpose.msra.mxu0 0.0
        %1863 = vmatprep.subr.mxu0 0.0
        %1864 = vmatpush1.xpose.msra.mxu0 0.0
        %1865 = vmatprep.subr.mxu0 0.0
        %1866 = vmatpush1.xpose.msra.mxu0 0.0
        %1867 = vmatprep.subr.mxu0 0.0
        %1868 = vmatpush1.xpose.msra.mxu0 0.0
        %1869 = vmatprep.subr.mxu0 0.0
        %1870 = vmatpush1.xpose.msra.mxu0 0.0
        %1871 = vmatprep.subr.mxu0 0.0
        %1872 = vmatpush1.xpose.msra.mxu0 0.0
        %1873 = vmatprep.subr.mxu0 0.0
        %1874 = vmatpush1.xpose.msra.mxu0 0.0
        %1875 = vmatprep.subr.mxu0 0.0
        %1876 = vmatpush1.xpose.msra.mxu0 0.0
        %1877 = vmatprep.subr.mxu0 0.0
        %1878 = vmatpush1.xpose.msra.mxu0 0.0
        %1879 = vmatprep.subr.mxu0 0.0
        %1880 = vmatpush1.xpose.msra.mxu0 0.0
        %1881 = vmatprep.subr.mxu0 0.0
        %1882 = vmatpush1.xpose.msra.mxu0 0.0
        %1883 = vmatprep.subr.mxu0 0.0
        %1884 = vmatpush1.xpose.msra.mxu0 0.0
        %1885 = vmatprep.subr.mxu0 0.0
        %1886 = vmatpush1.xpose.msra.mxu0 0.0
        %1887 = vmatprep.subr.mxu0 0.0
        %1888 = vmatpush1.xpose.msra.mxu0 0.0
        %1889 = vmatprep.subr.mxu0 0.0
        %1890 = vmatpush1.xpose.msra.mxu0 0.0
        %1891 = vmatprep.subr.mxu0 0.0
        %1892 = vmatpush1.xpose.msra.mxu0 0.0
        %1893 = vmatprep.mubr.f32.mxu0 0.0
        %1894 = vmatmul.mubr.f32.gmra.mrb[0].mxu0 %v1818
        %v1895 = vpop.f32.mrb[0].mxu0
        %v1896 = vadd.f32 0.0, %v1895
        %v1897 = vpop.f32.mrb[0].mxu0
        %1898 = vmatprep.mubr.f32.mxu0 0.0
        %1899 = vmatmul.mubr.f32.gmra.mrb[0].mxu0 %v1821
        %v1900 = vpop.f32.mrb[0].mxu0
        %v1901 = vadd.f32 0.0, %v1900
        %v1902 = vpop.f32.mrb[0].mxu0
        %1903 = vdwg.mxu0
        %v1905 = vsel %vm1555, %v1010, 0
        %v1908 = vsel %vm1555, %v1013, 0
        %v1911 = vsel %vm1555, %v618, 0
        %v1914 = vsel %vm1555, %v621, 0
        %1916 = vmatprep.subr.mxu0 0.0
        %1917 = vmatpush1.xpose.msra.mxu0 %v1911
        %1918 = vmatprep.subr.mxu0 0.0
        %1919 = vmatpush1.xpose.msra.mxu0 %v1914
        %1920 = vmatprep.subr.mxu0 0.0
        %1921 = vmatpush1.xpose.msra.mxu0 0.0
        %1922 = vmatprep.subr.mxu0 0.0
        %1923 = vmatpush1.xpose.msra.mxu0 0.0
        %1924 = vmatprep.subr.mxu0 0.0
        %1925 = vmatpush1.xpose.msra.mxu0 0.0
        %1926 = vmatprep.subr.mxu0 0.0
        %1927 = vmatpush1.xpose.msra.mxu0 0.0
        %1928 = vmatprep.subr.mxu0 0.0
        %1929 = vmatpush1.xpose.msra.mxu0 0.0
        %1930 = vmatprep.subr.mxu0 0.0
        %1931 = vmatpush1.xpose.msra.mxu0 0.0
        %1932 = vmatprep.subr.mxu0 0.0
        %1933 = vmatpush1.xpose.msra.mxu0 0.0
        %1934 = vmatprep.subr.mxu0 0.0
        %1935 = vmatpush1.xpose.msra.mxu0 0.0
        %1936 = vmatprep.subr.mxu0 0.0
        %1937 = vmatpush1.xpose.msra.mxu0 0.0
        %1938 = vmatprep.subr.mxu0 0.0
        %1939 = vmatpush1.xpose.msra.mxu0 0.0
        %1940 = vmatprep.subr.mxu0 0.0
        %1941 = vmatpush1.xpose.msra.mxu0 0.0
        %1942 = vmatprep.subr.mxu0 0.0
        %1943 = vmatpush1.xpose.msra.mxu0 0.0
        %1944 = vmatprep.subr.mxu0 0.0
        %1945 = vmatpush1.xpose.msra.mxu0 0.0
        %1946 = vmatprep.subr.mxu0 0.0
        %1947 = vmatpush1.xpose.msra.mxu0 0.0
        %1948 = vmatprep.subr.mxu0 0.0
        %1949 = vmatpush1.xpose.msra.mxu0 0.0
        %1950 = vmatprep.subr.mxu0 0.0
        %1951 = vmatpush1.xpose.msra.mxu0 0.0
        %1952 = vmatprep.subr.mxu0 0.0
        %1953 = vmatpush1.xpose.msra.mxu0 0.0
        %1954 = vmatprep.subr.mxu0 0.0
        %1955 = vmatpush1.xpose.msra.mxu0 0.0
        %1956 = vmatprep.subr.mxu0 0.0
        %1957 = vmatpush1.xpose.msra.mxu0 0.0
        %1958 = vmatprep.subr.mxu0 0.0
        %1959 = vmatpush1.xpose.msra.mxu0 0.0
        %1960 = vmatprep.subr.mxu0 0.0
        %1961 = vmatpush1.xpose.msra.mxu0 0.0
        %1962 = vmatprep.subr.mxu0 0.0
        %1963 = vmatpush1.xpose.msra.mxu0 0.0
        %1964 = vmatprep.subr.mxu0 0.0
        %1965 = vmatpush1.xpose.msra.mxu0 0.0
        %1966 = vmatprep.subr.mxu0 0.0
        %1967 = vmatpush1.xpose.msra.mxu0 0.0
        %1968 = vmatprep.subr.mxu0 0.0
        %1969 = vmatpush1.xpose.msra.mxu0 0.0
        %1970 = vmatprep.subr.mxu0 0.0
        %1971 = vmatpush1.xpose.msra.mxu0 0.0
        %1972 = vmatprep.subr.mxu0 0.0
        %1973 = vmatpush1.xpose.msra.mxu0 0.0
        %1974 = vmatprep.subr.mxu0 0.0
        %1975 = vmatpush1.xpose.msra.mxu0 0.0
        %1976 = vmatprep.subr.mxu0 0.0
        %1977 = vmatpush1.xpose.msra.mxu0 0.0
        %1978 = vmatprep.subr.mxu0 0.0
        %1979 = vmatpush1.xpose.msra.mxu0 0.0
        %1980 = vmatprep.mubr.f32.mxu0 0.0
        %1981 = vmatmul.mubr.f32.gmra.mrb[0].mxu0 %v1905
        %v1982 = vpop.f32.mrb[0].mxu0
        %v1983 = vadd.f32 0.0, %v1982
        %v1984 = vpop.f32.mrb[0].mxu0
        %1985 = vmatprep.mubr.f32.mxu0 0.0
        %1986 = vmatmul.mubr.f32.gmra.mrb[0].mxu0 %v1908
        %v1987 = vpop.f32.mrb[0].mxu0
        %v1988 = vadd.f32 0.0, %v1987
        %v1989 = vpop.f32.mrb[0].mxu0
        %1990 = vdwg.mxu0
        %v1992 = vsel %vm1555, %v1059, 0
        %v1995 = vsel %vm1555, %v1062, 0
        %v1998 = vsel %vm1555, %v667, 0
        %v2001 = vsel %vm1555, %v670, 0
        %2003 = vmatprep.subr.mxu0 0.0
        %2004 = vmatpush1.xpose.msra.mxu0 %v1998
        %2005 = vmatprep.subr.mxu0 0.0
        %2006 = vmatpush1.xpose.msra.mxu0 %v2001
        %2007 = vmatprep.subr.mxu0 0.0
        %2008 = vmatpush1.xpose.msra.mxu0 0.0
        %2009 = vmatprep.subr.mxu0 0.0
        %2010 = vmatpush1.xpose.msra.mxu0 0.0
        %2011 = vmatprep.subr.mxu0 0.0
        %2012 = vmatpush1.xpose.msra.mxu0 0.0
        %2013 = vmatprep.subr.mxu0 0.0
        %2014 = vmatpush1.xpose.msra.mxu0 0.0
        %2015 = vmatprep.subr.mxu0 0.0
        %2016 = vmatpush1.xpose.msra.mxu0 0.0
        %2017 = vmatprep.subr.mxu0 0.0
        %2018 = vmatpush1.xpose.msra.mxu0 0.0
        %2019 = vmatprep.subr.mxu0 0.0
        %2020 = vmatpush1.xpose.msra.mxu0 0.0
        %2021 = vmatprep.subr.mxu0 0.0
        %2022 = vmatpush1.xpose.msra.mxu0 0.0
        %2023 = vmatprep.subr.mxu0 0.0
        %2024 = vmatpush1.xpose.msra.mxu0 0.0
        %2025 = vmatprep.subr.mxu0 0.0
        %2026 = vmatpush1.xpose.msra.mxu0 0.0
        %2027 = vmatprep.subr.mxu0 0.0
        %2028 = vmatpush1.xpose.msra.mxu0 0.0
        %2029 = vmatprep.subr.mxu0 0.0
        %2030 = vmatpush1.xpose.msra.mxu0 0.0
        %2031 = vmatprep.subr.mxu0 0.0
        %2032 = vmatpush1.xpose.msra.mxu0 0.0
        %2033 = vmatprep.subr.mxu0 0.0
        %2034 = vmatpush1.xpose.msra.mxu0 0.0
        %2035 = vmatprep.subr.mxu0 0.0
        %2036 = vmatpush1.xpose.msra.mxu0 0.0
        %2037 = vmatprep.subr.mxu0 0.0
        %2038 = vmatpush1.xpose.msra.mxu0 0.0
        %2039 = vmatprep.subr.mxu0 0.0
        %2040 = vmatpush1.xpose.msra.mxu0 0.0
        %2041 = vmatprep.subr.mxu0 0.0
        %2042 = vmatpush1.xpose.msra.mxu0 0.0
        %2043 = vmatprep.subr.mxu0 0.0
        %2044 = vmatpush1.xpose.msra.mxu0 0.0
        %2045 = vmatprep.subr.mxu0 0.0
        %2046 = vmatpush1.xpose.msra.mxu0 0.0
        %2047 = vmatprep.subr.mxu0 0.0
        %2048 = vmatpush1.xpose.msra.mxu0 0.0
        %2049 = vmatprep.subr.mxu0 0.0
        %2050 = vmatpush1.xpose.msra.mxu0 0.0
        %2051 = vmatprep.subr.mxu0 0.0
        %2052 = vmatpush1.xpose.msra.mxu0 0.0
        %2053 = vmatprep.subr.mxu0 0.0
        %2054 = vmatpush1.xpose.msra.mxu0 0.0
        %2055 = vmatprep.subr.mxu0 0.0
        %2056 = vmatpush1.xpose.msra.mxu0 0.0
        %2057 = vmatprep.subr.mxu0 0.0
        %2058 = vmatpush1.xpose.msra.mxu0 0.0
        %2059 = vmatprep.subr.mxu0 0.0
        %2060 = vmatpush1.xpose.msra.mxu0 0.0
        %2061 = vmatprep.subr.mxu0 0.0
        %2062 = vmatpush1.xpose.msra.mxu0 0.0
        %2063 = vmatprep.subr.mxu0 0.0
        %2064 = vmatpush1.xpose.msra.mxu0 0.0
        %2065 = vmatprep.subr.mxu0 0.0
        %2066 = vmatpush1.xpose.msra.mxu0 0.0
        %2067 = vmatprep.mubr.f32.mxu0 0.0
        %2068 = vmatmul.mubr.f32.gmra.mrb[0].mxu0 %v1992
        %v2069 = vpop.f32.mrb[0].mxu0
        %v2070 = vadd.f32 0.0, %v2069
        %v2071 = vpop.f32.mrb[0].mxu0
        %2072 = vmatprep.mubr.f32.mxu0 0.0
        %2073 = vmatmul.mubr.f32.gmra.mrb[0].mxu0 %v1995
        %v2074 = vpop.f32.mrb[0].mxu0
        %v2075 = vadd.f32 0.0, %v2074
        %v2076 = vpop.f32.mrb[0].mxu0
        %2077 = vdwg.mxu0
        %v2079 = vsel %vm1555, %v1108, 0
        %v2082 = vsel %vm1555, %v1111, 0
        %v2085 = vsel %vm1555, %v716, 0
        %v2088 = vsel %vm1555, %v719, 0
        %2090 = vmatprep.subr.mxu0 0.0
        %2091 = vmatpush1.xpose.msra.mxu0 %v2085
        %2092 = vmatprep.subr.mxu0 0.0
        %2093 = vmatpush1.xpose.msra.mxu0 %v2088
        %2094 = vmatprep.subr.mxu0 0.0
        %2095 = vmatpush1.xpose.msra.mxu0 0.0
        %2096 = vmatprep.subr.mxu0 0.0
        %2097 = vmatpush1.xpose.msra.mxu0 0.0
        %2098 = vmatprep.subr.mxu0 0.0
        %2099 = vmatpush1.xpose.msra.mxu0 0.0
        %2100 = vmatprep.subr.mxu0 0.0
        %2101 = vmatpush1.xpose.msra.mxu0 0.0
        %2102 = vmatprep.subr.mxu0 0.0
        %2103 = vmatpush1.xpose.msra.mxu0 0.0
        %2104 = vmatprep.subr.mxu0 0.0
        %2105 = vmatpush1.xpose.msra.mxu0 0.0
        %2106 = vmatprep.subr.mxu0 0.0
        %2107 = vmatpush1.xpose.msra.mxu0 0.0
        %2108 = vmatprep.subr.mxu0 0.0
        %2109 = vmatpush1.xpose.msra.mxu0 0.0
        %2110 = vmatprep.subr.mxu0 0.0
        %2111 = vmatpush1.xpose.msra.mxu0 0.0
        %2112 = vmatprep.subr.mxu0 0.0
        %2113 = vmatpush1.xpose.msra.mxu0 0.0
        %2114 = vmatprep.subr.mxu0 0.0
        %2115 = vmatpush1.xpose.msra.mxu0 0.0
        %2116 = vmatprep.subr.mxu0 0.0
        %2117 = vmatpush1.xpose.msra.mxu0 0.0
        %2118 = vmatprep.subr.mxu0 0.0
        %2119 = vmatpush1.xpose.msra.mxu0 0.0
        %2120 = vmatprep.subr.mxu0 0.0
        %2121 = vmatpush1.xpose.msra.mxu0 0.0
        %2122 = vmatprep.subr.mxu0 0.0
        %2123 = vmatpush1.xpose.msra.mxu0 0.0
        %2124 = vmatprep.subr.mxu0 0.0
        %2125 = vmatpush1.xpose.msra.mxu0 0.0
        %2126 = vmatprep.subr.mxu0 0.0
        %2127 = vmatpush1.xpose.msra.mxu0 0.0
        %2128 = vmatprep.subr.mxu0 0.0
        %2129 = vmatpush1.xpose.msra.mxu0 0.0
        %2130 = vmatprep.subr.mxu0 0.0
        %2131 = vmatpush1.xpose.msra.mxu0 0.0
        %2132 = vmatprep.subr.mxu0 0.0
        %2133 = vmatpush1.xpose.msra.mxu0 0.0
        %2134 = vmatprep.subr.mxu0 0.0
        %2135 = vmatpush1.xpose.msra.mxu0 0.0
        %2136 = vmatprep.subr.mxu0 0.0
        %2137 = vmatpush1.xpose.msra.mxu0 0.0
        %2138 = vmatprep.subr.mxu0 0.0
        %2139 = vmatpush1.xpose.msra.mxu0 0.0
        %2140 = vmatprep.subr.mxu0 0.0
        %2141 = vmatpush1.xpose.msra.mxu0 0.0
        %2142 = vmatprep.subr.mxu0 0.0
        %2143 = vmatpush1.xpose.msra.mxu0 0.0
        %2144 = vmatprep.subr.mxu0 0.0
        %2145 = vmatpush1.xpose.msra.mxu0 0.0
        %2146 = vmatprep.subr.mxu0 0.0
        %2147 = vmatpush1.xpose.msra.mxu0 0.0
        %2148 = vmatprep.subr.mxu0 0.0
        %2149 = vmatpush1.xpose.msra.mxu0 0.0
        %2150 = vmatprep.subr.mxu0 0.0
        %2151 = vmatpush1.xpose.msra.mxu0 0.0
        %2152 = vmatprep.subr.mxu0 0.0
        %2153 = vmatpush1.xpose.msra.mxu0 0.0
        %2154 = vmatprep.mubr.f32.mxu0 0.0
        %2155 = vmatmul.mubr.f32.gmra.mrb[0].mxu0 %v2079
        %v2156 = vpop.f32.mrb[0].mxu0
        %v2157 = vadd.f32 0.0, %v2156
        %v2158 = vpop.f32.mrb[0].mxu0
        %2159 = vmatprep.mubr.f32.mxu0 0.0
        %2160 = vmatmul.mubr.f32.gmra.mrb[0].mxu0 %v2082
        %v2161 = vpop.f32.mrb[0].mxu0
        %v2162 = vadd.f32 0.0, %v2161
        %v2163 = vpop.f32.mrb[0].mxu0
        %2164 = vdwg.mxu0
        %v2166 = vsel %vm1555, %v1157, 0
        %v2169 = vsel %vm1555, %v1160, 0
        %v2172 = vsel %vm1555, %v765, 0
        %v2175 = vsel %vm1555, %v768, 0
        %2177 = vmatprep.subr.mxu0 0.0
        %2178 = vmatpush1.xpose.msra.mxu0 %v2172
        %2179 = vmatprep.subr.mxu0 0.0
        %2180 = vmatpush1.xpose.msra.mxu0 %v2175
        %2181 = vmatprep.subr.mxu0 0.0
        %2182 = vmatpush1.xpose.msra.mxu0 0.0
        %2183 = vmatprep.subr.mxu0 0.0
        %2184 = vmatpush1.xpose.msra.mxu0 0.0
        %2185 = vmatprep.subr.mxu0 0.0
        %2186 = vmatpush1.xpose.msra.mxu0 0.0
        %2187 = vmatprep.subr.mxu0 0.0
        %2188 = vmatpush1.xpose.msra.mxu0 0.0
        %2189 = vmatprep.subr.mxu0 0.0
        %2190 = vmatpush1.xpose.msra.mxu0 0.0
        %2191 = vmatprep.subr.mxu0 0.0
        %2192 = vmatpush1.xpose.msra.mxu0 0.0
        %2193 = vmatprep.subr.mxu0 0.0
        %2194 = vmatpush1.xpose.msra.mxu0 0.0
        %2195 = vmatprep.subr.mxu0 0.0
        %2196 = vmatpush1.xpose.msra.mxu0 0.0
        %2197 = vmatprep.subr.mxu0 0.0
        %2198 = vmatpush1.xpose.msra.mxu0 0.0
        %2199 = vmatprep.subr.mxu0 0.0
        %2200 = vmatpush1.xpose.msra.mxu0 0.0
        %2201 = vmatprep.subr.mxu0 0.0
        %2202 = vmatpush1.xpose.msra.mxu0 0.0
        %2203 = vmatprep.subr.mxu0 0.0
        %2204 = vmatpush1.xpose.msra.mxu0 0.0
        %2205 = vmatprep.subr.mxu0 0.0
        %2206 = vmatpush1.xpose.msra.mxu0 0.0
        %2207 = vmatprep.subr.mxu0 0.0
        %2208 = vmatpush1.xpose.msra.mxu0 0.0
        %2209 = vmatprep.subr.mxu0 0.0
        %2210 = vmatpush1.xpose.msra.mxu0 0.0
        %2211 = vmatprep.subr.mxu0 0.0
        %2212 = vmatpush1.xpose.msra.mxu0 0.0
        %2213 = vmatprep.subr.mxu0 0.0
        %2214 = vmatpush1.xpose.msra.mxu0 0.0
        %2215 = vmatprep.subr.mxu0 0.0
        %2216 = vmatpush1.xpose.msra.mxu0 0.0
        %2217 = vmatprep.subr.mxu0 0.0
        %2218 = vmatpush1.xpose.msra.mxu0 0.0
        %2219 = vmatprep.subr.mxu0 0.0
        %2220 = vmatpush1.xpose.msra.mxu0 0.0
        %2221 = vmatprep.subr.mxu0 0.0
        %2222 = vmatpush1.xpose.msra.mxu0 0.0
        %2223 = vmatprep.subr.mxu0 0.0
        %2224 = vmatpush1.xpose.msra.mxu0 0.0
        %2225 = vmatprep.subr.mxu0 0.0
        %2226 = vmatpush1.xpose.msra.mxu0 0.0
        %2227 = vmatprep.subr.mxu0 0.0
        %2228 = vmatpush1.xpose.msra.mxu0 0.0
        %2229 = vmatprep.subr.mxu0 0.0
        %2230 = vmatpush1.xpose.msra.mxu0 0.0
        %2231 = vmatprep.subr.mxu0 0.0
        %2232 = vmatpush1.xpose.msra.mxu0 0.0
        %2233 = vmatprep.subr.mxu0 0.0
        %2234 = vmatpush1.xpose.msra.mxu0 0.0
        %2235 = vmatprep.subr.mxu0 0.0
        %2236 = vmatpush1.xpose.msra.mxu0 0.0
        %2237 = vmatprep.subr.mxu0 0.0
        %2238 = vmatpush1.xpose.msra.mxu0 0.0
        %2239 = vmatprep.subr.mxu0 0.0
        %2240 = vmatpush1.xpose.msra.mxu0 0.0
        %2241 = vmatprep.mubr.f32.mxu0 0.0
        %2242 = vmatmul.mubr.f32.gmra.mrb[0].mxu0 %v2166
        %v2243 = vpop.f32.mrb[0].mxu0
        %v2244 = vadd.f32 0.0, %v2243
        %v2245 = vpop.f32.mrb[0].mxu0
        %2246 = vmatprep.mubr.f32.mxu0 0.0
        %2247 = vmatmul.mubr.f32.gmra.mrb[0].mxu0 %v2169
        %v2248 = vpop.f32.mrb[0].mxu0
        %v2249 = vadd.f32 0.0, %v2248
        %v2250 = vpop.f32.mrb[0].mxu0
        %2251 = vdwg.mxu0
        %v2252 = vmul.f32 %v1635, 0.28867513
        %v2253 = vmul.f32 %v1640, 0.28867513
        %v2254 = vmul.f32 %v1722, 0.28867513
        %v2255 = vmul.f32 %v1727, 0.28867513
        %v2256 = vmul.f32 %v1809, 0.28867513
        %v2257 = vmul.f32 %v1814, 0.28867513
        %v2258 = vmul.f32 %v1896, 0.28867513
        %v2259 = vmul.f32 %v1901, 0.28867513
        %v2260 = vmul.f32 %v1983, 0.28867513
        %v2261 = vmul.f32 %v1988, 0.28867513
        %v2262 = vmul.f32 %v2070, 0.28867513
        %v2263 = vmul.f32 %v2075, 0.28867513
        %v2264 = vmul.f32 %v2157, 0.28867513
        %v2265 = vmul.f32 %v2162, 0.28867513
        %v2266 = vmul.f32 %v2244, 0.28867513
        %v2267 = vmul.f32 %v2249, 0.28867513
        %vm2268 = vcmask 130048
        %v2269 = vsel %vm2268, %v2252, -inf
        %2270 = vmax.xlane.f32.xlu0 %v2269
        %v2271 = vpop.xlane.xlu0 %2270
        %v2272 = vsel %vm2268, %v2253, -inf
        %2273 = vmax.xlane.f32.xlu0 %v2272
        %v2274 = vpop.xlane.xlu0 %2273
        %v2275 = vsel %vm2268, %v2254, -inf
        %2276 = vmax.xlane.f32.xlu0 %v2275
        %v2277 = vpop.xlane.xlu0 %2276
        %v2278 = vsel %vm2268, %v2255, -inf
        %2279 = vmax.xlane.f32.xlu0 %v2278
        %v2280 = vpop.xlane.xlu0 %2279
        %v2281 = vsel %vm2268, %v2256, -inf
        %2282 = vmax.xlane.f32.xlu0 %v2281
        %v2283 = vpop.xlane.xlu0 %2282
        %v2284 = vsel %vm2268, %v2257, -inf
        %2285 = vmax.xlane.f32.xlu0 %v2284
        %v2286 = vpop.xlane.xlu0 %2285
        %v2287 = vsel %vm2268, %v2258, -inf
        %2288 = vmax.xlane.f32.xlu0 %v2287
        %v2289 = vpop.xlane.xlu0 %2288
        %v2290 = vsel %vm2268, %v2259, -inf
        %2291 = vmax.xlane.f32.xlu0 %v2290
        %v2292 = vpop.xlane.xlu0 %2291
        %v2293 = vsel %vm2268, %v2260, -inf
        %2294 = vmax.xlane.f32.xlu0 %v2293
        %v2295 = vpop.xlane.xlu0 %2294
        %v2296 = vsel %vm2268, %v2261, -inf
        %2297 = vmax.xlane.f32.xlu0 %v2296
        %v2298 = vpop.xlane.xlu0 %2297
        %v2299 = vsel %vm2268, %v2262, -inf
        %2300 = vmax.xlane.f32.xlu0 %v2299
        %v2301 = vpop.xlane.xlu0 %2300
        %v2302 = vsel %vm2268, %v2263, -inf
        %2303 = vmax.xlane.f32.xlu0 %v2302
        %v2304 = vpop.xlane.xlu0 %2303
        %v2305 = vsel %vm2268, %v2264, -inf
        %2306 = vmax.xlane.f32.xlu0 %v2305
        %v2307 = vpop.xlane.xlu0 %2306
        %v2308 = vsel %vm2268, %v2265, -inf
        %2309 = vmax.xlane.f32.xlu0 %v2308
        %v2310 = vpop.xlane.xlu0 %2309
        %v2311 = vsel %vm2268, %v2266, -inf
        %2312 = vmax.xlane.f32.xlu0 %v2311
        %v2313 = vpop.xlane.xlu0 %2312
        %v2314 = vsel %vm2268, %v2267, -inf
        %2315 = vmax.xlane.f32.xlu0 %v2314
        %v2316 = vpop.xlane.xlu0 %2315
        %v2317 = vsub.f32 %v2252, %v2271
        %v2318 = vsub.f32 %v2253, %v2274
        %v2319 = vsub.f32 %v2254, %v2277
        %v2320 = vsub.f32 %v2255, %v2280
        %v2321 = vsub.f32 %v2256, %v2283
        %v2322 = vsub.f32 %v2257, %v2286
        %v2323 = vsub.f32 %v2258, %v2289
        %v2324 = vsub.f32 %v2259, %v2292
        %v2325 = vsub.f32 %v2260, %v2295
        %v2326 = vsub.f32 %v2261, %v2298
        %v2327 = vsub.f32 %v2262, %v2301
        %v2328 = vsub.f32 %v2263, %v2304
        %v2329 = vsub.f32 %v2264, %v2307
        %v2330 = vsub.f32 %v2265, %v2310
        %v2331 = vsub.f32 %v2266, %v2313
        %v2332 = vsub.f32 %v2267, %v2316
        %v2333 = vmul.f32 %v2317, 1.442695
        %v2334 = vpow.pop %v2333
        %v2335 = vmul.f32 %v2318, 1.442695
        %v2336 = vpow.pop %v2335
        %v2337 = vmul.f32 %v2319, 1.442695
        %v2338 = vpow.pop %v2337
        %v2339 = vmul.f32 %v2320, 1.442695
        %v2340 = vpow.pop %v2339
        %v2341 = vmul.f32 %v2321, 1.442695
        %v2342 = vpow.pop %v2341
        %v2343 = vmul.f32 %v2322, 1.442695
        %v2344 = vpow.pop %v2343
        %v2345 = vmul.f32 %v2323, 1.442695
        %v2346 = vpow.pop %v2345
        %v2347 = vmul.f32 %v2324, 1.442695
        %v2348 = vpow.pop %v2347
        %v2349 = vmul.f32 %v2325, 1.442695
        %v2350 = vpow.pop %v2349
        %v2351 = vmul.f32 %v2326, 1.442695
        %v2352 = vpow.pop %v2351
        %v2353 = vmul.f32 %v2327, 1.442695
        %v2354 = vpow.pop %v2353
        %v2355 = vmul.f32 %v2328, 1.442695
        %v2356 = vpow.pop %v2355
        %v2357 = vmul.f32 %v2329, 1.442695
        %v2358 = vpow.pop %v2357
        %v2359 = vmul.f32 %v2330, 1.442695
        %v2360 = vpow.pop %v2359
        %v2361 = vmul.f32 %v2331, 1.442695
        %v2362 = vpow.pop %v2361
        %v2363 = vmul.f32 %v2332, 1.442695
        %v2364 = vpow.pop %v2363
        %v2365 = vsel %vm2268, %v2334, 0.0
        %2366 = vadd.xlane.f32.xlu0 %v2365
        %v2367 = vpop.xlane.xlu0 %2366
        %v2368 = vsel %vm2268, %v2336, 0.0
        %2369 = vadd.xlane.f32.xlu0 %v2368
        %v2370 = vpop.xlane.xlu0 %2369
        %v2371 = vsel %vm2268, %v2338, 0.0
        %2372 = vadd.xlane.f32.xlu0 %v2371
        %v2373 = vpop.xlane.xlu0 %2372
        %v2374 = vsel %vm2268, %v2340, 0.0
        %2375 = vadd.xlane.f32.xlu0 %v2374
        %v2376 = vpop.xlane.xlu0 %2375
        %v2377 = vsel %vm2268, %v2342, 0.0
        %2378 = vadd.xlane.f32.xlu0 %v2377
        %v2379 = vpop.xlane.xlu0 %2378
        %v2380 = vsel %vm2268, %v2344, 0.0
        %2381 = vadd.xlane.f32.xlu0 %v2380
        %v2382 = vpop.xlane.xlu0 %2381
        %v2383 = vsel %vm2268, %v2346, 0.0
        %2384 = vadd.xlane.f32.xlu0 %v2383
        %v2385 = vpop.xlane.xlu0 %2384
        %v2386 = vsel %vm2268, %v2348, 0.0
        %2387 = vadd.xlane.f32.xlu0 %v2386
        %v2388 = vpop.xlane.xlu0 %2387
        %v2389 = vsel %vm2268, %v2350, 0.0
        %2390 = vadd.xlane.f32.xlu0 %v2389
        %v2391 = vpop.xlane.xlu0 %2390
        %v2392 = vsel %vm2268, %v2352, 0.0
        %2393 = vadd.xlane.f32.xlu0 %v2392
        %v2394 = vpop.xlane.xlu0 %2393
        %v2395 = vsel %vm2268, %v2354, 0.0
        %2396 = vadd.xlane.f32.xlu0 %v2395
        %v2397 = vpop.xlane.xlu0 %2396
        %v2398 = vsel %vm2268, %v2356, 0.0
        %2399 = vadd.xlane.f32.xlu0 %v2398
        %v2400 = vpop.xlane.xlu0 %2399
        %v2401 = vsel %vm2268, %v2358, 0.0
        %2402 = vadd.xlane.f32.xlu0 %v2401
        %v2403 = vpop.xlane.xlu0 %2402
        %v2404 = vsel %vm2268, %v2360, 0.0
        %2405 = vadd.xlane.f32.xlu0 %v2404
        %v2406 = vpop.xlane.xlu0 %2405
        %v2407 = vsel %vm2268, %v2362, 0.0
        %2408 = vadd.xlane.f32.xlu0 %v2407
        %v2409 = vpop.xlane.xlu0 %2408
        %v2410 = vsel %vm2268, %v2364, 0.0
        %2411 = vadd.xlane.f32.xlu0 %v2410
        %v2412 = vpop.xlane.xlu0 %2411
        %v2413 = vrcp.pop %v2367
        %v2414 = vrcp.pop %v2370
        %v2415 = vrcp.pop %v2373
        %v2416 = vrcp.pop %v2376
        %v2417 = vrcp.pop %v2379
        %v2418 = vrcp.pop %v2382
        %v2419 = vrcp.pop %v2385
        %v2420 = vrcp.pop %v2388
        %v2421 = vrcp.pop %v2391
        %v2422 = vrcp.pop %v2394
        %v2423 = vrcp.pop %v2397
        %v2424 = vrcp.pop %v2400
        %v2425 = vrcp.pop %v2403
        %v2426 = vrcp.pop %v2406
        %v2427 = vrcp.pop %v2409
        %v2428 = vrcp.pop %v2412
        %v2429 = vmul.f32 %v2334, %v2413
        %v2430 = vmul.f32 %v2336, %v2414
        %v2431 = vmul.f32 %v2338, %v2415
        %v2432 = vmul.f32 %v2340, %v2416
        %v2433 = vmul.f32 %v2342, %v2417
        %v2434 = vmul.f32 %v2344, %v2418
        %v2435 = vmul.f32 %v2346, %v2419
        %v2436 = vmul.f32 %v2348, %v2420
        %v2437 = vmul.f32 %v2350, %v2421
        %v2438 = vmul.f32 %v2352, %v2422
        %v2439 = vmul.f32 %v2354, %v2423
        %v2440 = vmul.f32 %v2356, %v2424
        %v2441 = vmul.f32 %v2358, %v2425
        %v2442 = vmul.f32 %v2360, %v2426
        %v2443 = vmul.f32 %v2362, %v2427
        %v2444 = vmul.f32 %v2364, %v2428
        %v2445 = vpack.c.bf16 %v2430, %v2429
        %v2446 = vpack.c.bf16 %v2432, %v2431
        %v2447 = vpack.c.bf16 %v2434, %v2433
        %v2448 = vpack.c.bf16 %v2436, %v2435
        %v2449 = vpack.c.bf16 %v2438, %v2437
        %v2450 = vpack.c.bf16 %v2440, %v2439
        %v2451 = vpack.c.bf16 %v2442, %v2441
        %v2452 = vpack.c.bf16 %v2444, %v2443
        %v2453 = vpack.c.bf16 %v1209, %v1206
        %v2454 = vpack.c.bf16 %v1258, %v1255
        %v2455 = vpack.c.bf16 %v1307, %v1304
        %v2456 = vpack.c.bf16 %v1356, %v1353
        %v2457 = vpack.c.bf16 %v1405, %v1402
        %v2458 = vpack.c.bf16 %v1454, %v1451
        %v2459 = vpack.c.bf16 %v1503, %v1500
        %v2460 = vpack.c.bf16 %v1552, %v1549
        %v2462 = vsel %vm2268, %v2445, 0
        %2464 = vmatprep.subr.bf16.mxu0 0
        %2465 = vmatpush1.bf16.msra.mxu0 %v2453
        %2466 = vmatprep.subr.bf16.mxu0 0
        %2467 = vmatpush1.bf16.msra.mxu0 0
        %2468 = vmatprep.subr.bf16.mxu0 0
        %2469 = vmatpush1.bf16.msra.mxu0 0
        %2470 = vmatprep.subr.bf16.mxu0 0
        %2471 = vmatpush1.bf16.msra.mxu0 0
        %2472 = vmatprep.subr.bf16.mxu0 0
        %2473 = vmatpush1.bf16.msra.mxu0 0
        %2474 = vmatprep.subr.bf16.mxu0 0
        %2475 = vmatpush1.bf16.msra.mxu0 0
        %2476 = vmatprep.subr.bf16.mxu0 0
        %2477 = vmatpush1.bf16.msra.mxu0 0
        %2478 = vmatprep.subr.bf16.mxu0 0
        %2479 = vmatpush1.bf16.msra.mxu0 0
        %2480 = vmatprep.subr.bf16.mxu0 0
        %2481 = vmatpush1.bf16.msra.mxu0 0
        %2482 = vmatprep.subr.bf16.mxu0 0
        %2483 = vmatpush1.bf16.msra.mxu0 0
        %2484 = vmatprep.subr.bf16.mxu0 0
        %2485 = vmatpush1.bf16.msra.mxu0 0
        %2486 = vmatprep.subr.bf16.mxu0 0
        %2487 = vmatpush1.bf16.msra.mxu0 0
        %2488 = vmatprep.subr.bf16.mxu0 0
        %2489 = vmatpush1.bf16.msra.mxu0 0
        %2490 = vmatprep.subr.bf16.mxu0 0
        %2491 = vmatpush1.bf16.msra.mxu0 0
        %2492 = vmatprep.subr.bf16.mxu0 0
        %2493 = vmatpush1.bf16.msra.mxu0 0
        %2494 = vmatprep.subr.bf16.mxu0 0
        %2495 = vmatpush1.bf16.msra.mxu0 0
        %2496 = vmatprep.mubr.bf16.mxu0 0
        %2497 = vmatmul.mubr.bf16.gmra.mrb[0].mxu0 %v2462
        %v2498 = vpop.f32.mrb[0].mxu0
        %v2499 = vadd.f32 0.0, %v2498
        %v2500 = vpop.f32.mrb[0].mxu0
        %v2501 = vpop.f32.mrb[0].mxu0
        %v2502 = vadd.f32 0.0, %v2501
        %v2503 = vpop.f32.mrb[0].mxu0
        %2504 = vdwg.mxu0
        %v2506 = vsel %vm2268, %v2446, 0
        %2508 = vmatprep.subr.bf16.mxu0 0
        %2509 = vmatpush1.bf16.msra.mxu0 %v2454
        %2510 = vmatprep.subr.bf16.mxu0 0
        %2511 = vmatpush1.bf16.msra.mxu0 0
        %2512 = vmatprep.subr.bf16.mxu0 0
        %2513 = vmatpush1.bf16.msra.mxu0 0
        %2514 = vmatprep.subr.bf16.mxu0 0
        %2515 = vmatpush1.bf16.msra.mxu0 0
        %2516 = vmatprep.subr.bf16.mxu0 0
        %2517 = vmatpush1.bf16.msra.mxu0 0
        %2518 = vmatprep.subr.bf16.mxu0 0
        %2519 = vmatpush1.bf16.msra.mxu0 0
        %2520 = vmatprep.subr.bf16.mxu0 0
        %2521 = vmatpush1.bf16.msra.mxu0 0
        %2522 = vmatprep.subr.bf16.mxu0 0
        %2523 = vmatpush1.bf16.msra.mxu0 0
        %2524 = vmatprep.subr.bf16.mxu0 0
        %2525 = vmatpush1.bf16.msra.mxu0 0
        %2526 = vmatprep.subr.bf16.mxu0 0
        %2527 = vmatpush1.bf16.msra.mxu0 0
        %2528 = vmatprep.subr.bf16.mxu0 0
        %2529 = vmatpush1.bf16.msra.mxu0 0
        %2530 = vmatprep.subr.bf16.mxu0 0
        %2531 = vmatpush1.bf16.msra.mxu0 0
        %2532 = vmatprep.subr.bf16.mxu0 0
        %2533 = vmatpush1.bf16.msra.mxu0 0
        %2534 = vmatprep.subr.bf16.mxu0 0
        %2535 = vmatpush1.bf16.msra.mxu0 0
        %2536 = vmatprep.subr.bf16.mxu0 0
        %2537 = vmatpush1.bf16.msra.mxu0 0
        %2538 = vmatprep.subr.bf16.mxu0 0
        %2539 = vmatpush1.bf16.msra.mxu0 0
        %2540 = vmatprep.mubr.bf16.mxu0 0
        %2541 = vmatmul.mubr.bf16.gmra.mrb[0].mxu0 %v2506
        %v2542 = vpop.f32.mrb[0].mxu0
        %v2543 = vadd.f32 0.0, %v2542
        %v2544 = vpop.f32.mrb[0].mxu0
        %v2545 = vpop.f32.mrb[0].mxu0
        %v2546 = vadd.f32 0.0, %v2545
        %v2547 = vpop.f32.mrb[0].mxu0
        %2548 = vdwg.mxu0
        %v2550 = vsel %vm2268, %v2447, 0
        %2552 = vmatprep.subr.bf16.mxu0 0
        %2553 = vmatpush1.bf16.msra.mxu0 %v2455
        %2554 = vmatprep.subr.bf16.mxu0 0
        %2555 = vmatpush1.bf16.msra.mxu0 0
        %2556 = vmatprep.subr.bf16.mxu0 0
        %2557 = vmatpush1.bf16.msra.mxu0 0
        %2558 = vmatprep.subr.bf16.mxu0 0
        %2559 = vmatpush1.bf16.msra.mxu0 0
        %2560 = vmatprep.subr.bf16.mxu0 0
        %2561 = vmatpush1.bf16.msra.mxu0 0
        %2562 = vmatprep.subr.bf16.mxu0 0
        %2563 = vmatpush1.bf16.msra.mxu0 0
        %2564 = vmatprep.subr.bf16.mxu0 0
        %2565 = vmatpush1.bf16.msra.mxu0 0
        %2566 = vmatprep.subr.bf16.mxu0 0
        %2567 = vmatpush1.bf16.msra.mxu0 0
        %2568 = vmatprep.subr.bf16.mxu0 0
        %2569 = vmatpush1.bf16.msra.mxu0 0
        %2570 = vmatprep.subr.bf16.mxu0 0
        %2571 = vmatpush1.bf16.msra.mxu0 0
        %2572 = vmatprep.subr.bf16.mxu0 0
        %2573 = vmatpush1.bf16.msra.mxu0 0
        %2574 = vmatprep.subr.bf16.mxu0 0
        %2575 = vmatpush1.bf16.msra.mxu0 0
        %2576 = vmatprep.subr.bf16.mxu0 0
        %2577 = vmatpush1.bf16.msra.mxu0 0
        %2578 = vmatprep.subr.bf16.mxu0 0
        %2579 = vmatpush1.bf16.msra.mxu0 0
        %2580 = vmatprep.subr.bf16.mxu0 0
        %2581 = vmatpush1.bf16.msra.mxu0 0
        %2582 = vmatprep.subr.bf16.mxu0 0
        %2583 = vmatpush1.bf16.msra.mxu0 0
        %2584 = vmatprep.mubr.bf16.mxu0 0
        %2585 = vmatmul.mubr.bf16.gmra.mrb[0].mxu0 %v2550
        %v2586 = vpop.f32.mrb[0].mxu0
        %v2587 = vadd.f32 0.0, %v2586
        %v2588 = vpop.f32.mrb[0].mxu0
        %v2589 = vpop.f32.mrb[0].mxu0
        %v2590 = vadd.f32 0.0, %v2589
        %v2591 = vpop.f32.mrb[0].mxu0
        %2592 = vdwg.mxu0
        %v2594 = vsel %vm2268, %v2448, 0
        %2596 = vmatprep.subr.bf16.mxu0 0
        %2597 = vmatpush1.bf16.msra.mxu0 %v2456
        %2598 = vmatprep.subr.bf16.mxu0 0
        %2599 = vmatpush1.bf16.msra.mxu0 0
        %2600 = vmatprep.subr.bf16.mxu0 0
        %2601 = vmatpush1.bf16.msra.mxu0 0
        %2602 = vmatprep.subr.bf16.mxu0 0
        %2603 = vmatpush1.bf16.msra.mxu0 0
        %2604 = vmatprep.subr.bf16.mxu0 0
        %2605 = vmatpush1.bf16.msra.mxu0 0
        %2606 = vmatprep.subr.bf16.mxu0 0
        %2607 = vmatpush1.bf16.msra.mxu0 0
        %2608 = vmatprep.subr.bf16.mxu0 0
        %2609 = vmatpush1.bf16.msra.mxu0 0
        %2610 = vmatprep.subr.bf16.mxu0 0
        %2611 = vmatpush1.bf16.msra.mxu0 0
        %2612 = vmatprep.subr.bf16.mxu0 0
        %2613 = vmatpush1.bf16.msra.mxu0 0
        %2614 = vmatprep.subr.bf16.mxu0 0
        %2615 = vmatpush1.bf16.msra.mxu0 0
        %2616 = vmatprep.subr.bf16.mxu0 0
        %2617 = vmatpush1.bf16.msra.mxu0 0
        %2618 = vmatprep.subr.bf16.mxu0 0
        %2619 = vmatpush1.bf16.msra.mxu0 0
        %2620 = vmatprep.subr.bf16.mxu0 0
        %2621 = vmatpush1.bf16.msra.mxu0 0
        %2622 = vmatprep.subr.bf16.mxu0 0
        %2623 = vmatpush1.bf16.msra.mxu0 0
        %2624 = vmatprep.subr.bf16.mxu0 0
        %2625 = vmatpush1.bf16.msra.mxu0 0
        %2626 = vmatprep.subr.bf16.mxu0 0
        %2627 = vmatpush1.bf16.msra.mxu0 0
        %2628 = vmatprep.mubr.bf16.mxu0 0
        %2629 = vmatmul.mubr.bf16.gmra.mrb[0].mxu0 %v2594
        %v2630 = vpop.f32.mrb[0].mxu0
        %v2631 = vadd.f32 0.0, %v2630
        %v2632 = vpop.f32.mrb[0].mxu0
        %v2633 = vpop.f32.mrb[0].mxu0
        %v2634 = vadd.f32 0.0, %v2633
        %v2635 = vpop.f32.mrb[0].mxu0
        %2636 = vdwg.mxu0
        %v2638 = vsel %vm2268, %v2449, 0
        %2640 = vmatprep.subr.bf16.mxu0 0
        %2641 = vmatpush1.bf16.msra.mxu0 %v2457
        %2642 = vmatprep.subr.bf16.mxu0 0
        %2643 = vmatpush1.bf16.msra.mxu0 0
        %2644 = vmatprep.subr.bf16.mxu0 0
        %2645 = vmatpush1.bf16.msra.mxu0 0
        %2646 = vmatprep.subr.bf16.mxu0 0
        %2647 = vmatpush1.bf16.msra.mxu0 0
        %2648 = vmatprep.subr.bf16.mxu0 0
        %2649 = vmatpush1.bf16.msra.mxu0 0
        %2650 = vmatprep.subr.bf16.mxu0 0
        %2651 = vmatpush1.bf16.msra.mxu0 0
        %2652 = vmatprep.subr.bf16.mxu0 0
        %2653 = vmatpush1.bf16.msra.mxu0 0
        %2654 = vmatprep.subr.bf16.mxu0 0
        %2655 = vmatpush1.bf16.msra.mxu0 0
        %2656 = vmatprep.subr.bf16.mxu0 0
        %2657 = vmatpush1.bf16.msra.mxu0 0
        %2658 = vmatprep.subr.bf16.mxu0 0
        %2659 = vmatpush1.bf16.msra.mxu0 0
        %2660 = vmatprep.subr.bf16.mxu0 0
        %2661 = vmatpush1.bf16.msra.mxu0 0
        %2662 = vmatprep.subr.bf16.mxu0 0
        %2663 = vmatpush1.bf16.msra.mxu0 0
        %2664 = vmatprep.subr.bf16.mxu0 0
        %2665 = vmatpush1.bf16.msra.mxu0 0
        %2666 = vmatprep.subr.bf16.mxu0 0
        %2667 = vmatpush1.bf16.msra.mxu0 0
        %2668 = vmatprep.subr.bf16.mxu0 0
        %2669 = vmatpush1.bf16.msra.mxu0 0
        %2670 = vmatprep.subr.bf16.mxu0 0
        %2671 = vmatpush1.bf16.msra.mxu0 0
        %2672 = vmatprep.mubr.bf16.mxu0 0
        %2673 = vmatmul.mubr.bf16.gmra.mrb[0].mxu0 %v2638
        %v2674 = vpop.f32.mrb[0].mxu0
        %v2675 = vadd.f32 0.0, %v2674
        %v2676 = vpop.f32.mrb[0].mxu0
        %v2677 = vpop.f32.mrb[0].mxu0
        %v2678 = vadd.f32 0.0, %v2677
        %v2679 = vpop.f32.mrb[0].mxu0
        %2680 = vdwg.mxu0
        %v2682 = vsel %vm2268, %v2450, 0
        %2684 = vmatprep.subr.bf16.mxu0 0
        %2685 = vmatpush1.bf16.msra.mxu0 %v2458
        %2686 = vmatprep.subr.bf16.mxu0 0
        %2687 = vmatpush1.bf16.msra.mxu0 0
        %2688 = vmatprep.subr.bf16.mxu0 0
        %2689 = vmatpush1.bf16.msra.mxu0 0
        %2690 = vmatprep.subr.bf16.mxu0 0
        %2691 = vmatpush1.bf16.msra.mxu0 0
        %2692 = vmatprep.subr.bf16.mxu0 0
        %2693 = vmatpush1.bf16.msra.mxu0 0
        %2694 = vmatprep.subr.bf16.mxu0 0
        %2695 = vmatpush1.bf16.msra.mxu0 0
        %2696 = vmatprep.subr.bf16.mxu0 0
        %2697 = vmatpush1.bf16.msra.mxu0 0
        %2698 = vmatprep.subr.bf16.mxu0 0
        %2699 = vmatpush1.bf16.msra.mxu0 0
        %2700 = vmatprep.subr.bf16.mxu0 0
        %2701 = vmatpush1.bf16.msra.mxu0 0
        %2702 = vmatprep.subr.bf16.mxu0 0
        %2703 = vmatpush1.bf16.msra.mxu0 0
        %2704 = vmatprep.subr.bf16.mxu0 0
        %2705 = vmatpush1.bf16.msra.mxu0 0
        %2706 = vmatprep.subr.bf16.mxu0 0
        %2707 = vmatpush1.bf16.msra.mxu0 0
        %2708 = vmatprep.subr.bf16.mxu0 0
        %2709 = vmatpush1.bf16.msra.mxu0 0
        %2710 = vmatprep.subr.bf16.mxu0 0
        %2711 = vmatpush1.bf16.msra.mxu0 0
        %2712 = vmatprep.subr.bf16.mxu0 0
        %2713 = vmatpush1.bf16.msra.mxu0 0
        %2714 = vmatprep.subr.bf16.mxu0 0
        %2715 = vmatpush1.bf16.msra.mxu0 0
        %2716 = vmatprep.mubr.bf16.mxu0 0
        %2717 = vmatmul.mubr.bf16.gmra.mrb[0].mxu0 %v2682
        %v2718 = vpop.f32.mrb[0].mxu0
        %v2719 = vadd.f32 0.0, %v2718
        %v2720 = vpop.f32.mrb[0].mxu0
        %v2721 = vpop.f32.mrb[0].mxu0
        %v2722 = vadd.f32 0.0, %v2721
        %v2723 = vpop.f32.mrb[0].mxu0
        %2724 = vdwg.mxu0
        %v2726 = vsel %vm2268, %v2451, 0
        %2728 = vmatprep.subr.bf16.mxu0 0
        %2729 = vmatpush1.bf16.msra.mxu0 %v2459
        %2730 = vmatprep.subr.bf16.mxu0 0
        %2731 = vmatpush1.bf16.msra.mxu0 0
        %2732 = vmatprep.subr.bf16.mxu0 0
        %2733 = vmatpush1.bf16.msra.mxu0 0
        %2734 = vmatprep.subr.bf16.mxu0 0
        %2735 = vmatpush1.bf16.msra.mxu0 0
        %2736 = vmatprep.subr.bf16.mxu0 0
        %2737 = vmatpush1.bf16.msra.mxu0 0
        %2738 = vmatprep.subr.bf16.mxu0 0
        %2739 = vmatpush1.bf16.msra.mxu0 0
        %2740 = vmatprep.subr.bf16.mxu0 0
        %2741 = vmatpush1.bf16.msra.mxu0 0
        %2742 = vmatprep.subr.bf16.mxu0 0
        %2743 = vmatpush1.bf16.msra.mxu0 0
        %2744 = vmatprep.subr.bf16.mxu0 0
        %2745 = vmatpush1.bf16.msra.mxu0 0
        %2746 = vmatprep.subr.bf16.mxu0 0
        %2747 = vmatpush1.bf16.msra.mxu0 0
        %2748 = vmatprep.subr.bf16.mxu0 0
        %2749 = vmatpush1.bf16.msra.mxu0 0
        %2750 = vmatprep.subr.bf16.mxu0 0
        %2751 = vmatpush1.bf16.msra.mxu0 0
        %2752 = vmatprep.subr.bf16.mxu0 0
        %2753 = vmatpush1.bf16.msra.mxu0 0
        %2754 = vmatprep.subr.bf16.mxu0 0
        %2755 = vmatpush1.bf16.msra.mxu0 0
        %2756 = vmatprep.subr.bf16.mxu0 0
        %2757 = vmatpush1.bf16.msra.mxu0 0
        %2758 = vmatprep.subr.bf16.mxu0 0
        %2759 = vmatpush1.bf16.msra.mxu0 0
        %2760 = vmatprep.mubr.bf16.mxu0 0
        %2761 = vmatmul.mubr.bf16.gmra.mrb[0].mxu0 %v2726
        %v2762 = vpop.f32.mrb[0].mxu0
        %v2763 = vadd.f32 0.0, %v2762
        %v2764 = vpop.f32.mrb[0].mxu0
        %v2765 = vpop.f32.mrb[0].mxu0
        %v2766 = vadd.f32 0.0, %v2765
        %v2767 = vpop.f32.mrb[0].mxu0
        %2768 = vdwg.mxu0
        %v2770 = vsel %vm2268, %v2452, 0
        %2772 = vmatprep.subr.bf16.mxu0 0
        %2773 = vmatpush1.bf16.msra.mxu0 %v2460
        %2774 = vmatprep.subr.bf16.mxu0 0
        %2775 = vmatpush1.bf16.msra.mxu0 0
        %2776 = vmatprep.subr.bf16.mxu0 0
        %2777 = vmatpush1.bf16.msra.mxu0 0
        %2778 = vmatprep.subr.bf16.mxu0 0
        %2779 = vmatpush1.bf16.msra.mxu0 0
        %2780 = vmatprep.subr.bf16.mxu0 0
        %2781 = vmatpush1.bf16.msra.mxu0 0
        %2782 = vmatprep.subr.bf16.mxu0 0
        %2783 = vmatpush1.bf16.msra.mxu0 0
        %2784 = vmatprep.subr.bf16.mxu0 0
        %2785 = vmatpush1.bf16.msra.mxu0 0
        %2786 = vmatprep.subr.bf16.mxu0 0
        %2787 = vmatpush1.bf16.msra.mxu0 0
        %2788 = vmatprep.subr.bf16.mxu0 0
        %2789 = vmatpush1.bf16.msra.mxu0 0
        %2790 = vmatprep.subr.bf16.mxu0 0
        %2791 = vmatpush1.bf16.msra.mxu0 0
        %2792 = vmatprep.subr.bf16.mxu0 0
        %2793 = vmatpush1.bf16.msra.mxu0 0
        %2794 = vmatprep.subr.bf16.mxu0 0
        %2795 = vmatpush1.bf16.msra.mxu0 0
        %2796 = vmatprep.subr.bf16.mxu0 0
        %2797 = vmatpush1.bf16.msra.mxu0 0
        %2798 = vmatprep.subr.bf16.mxu0 0
        %2799 = vmatpush1.bf16.msra.mxu0 0
        %2800 = vmatprep.subr.bf16.mxu0 0
        %2801 = vmatpush1.bf16.msra.mxu0 0
        %2802 = vmatprep.subr.bf16.mxu0 0
        %2803 = vmatpush1.bf16.msra.mxu0 0
        %2804 = vmatprep.mubr.bf16.mxu0 0
        %2805 = vmatmul.mubr.bf16.gmra.mrb[0].mxu0 %v2770
        %v2806 = vpop.f32.mrb[0].mxu0
        %v2807 = vadd.f32 0.0, %v2806
        %v2808 = vpop.f32.mrb[0].mxu0
        %v2809 = vpop.f32.mrb[0].mxu0
        %v2810 = vadd.f32 0.0, %v2809
        %v2811 = vpop.f32.mrb[0].mxu0
        %2812 = vdwg.mxu0
        %v2813 = vpack.c.bf16 %v2502, %v2499
        %v2814 = vpack.c.bf16 %v2546, %v2543
        %v2815 = vpack.c.bf16 %v2590, %v2587
        %v2816 = vpack.c.bf16 %v2634, %v2631
        %v2817 = vpack.c.bf16 %v2678, %v2675
        %v2818 = vpack.c.bf16 %v2722, %v2719
        %v2819 = vpack.c.bf16 %v2766, %v2763
        %v2820 = vpack.c.bf16 %v2810, %v2807
        %v2823 = vunpack.c.l.b16 %v354
        %v2824 = vunpack.c.l.b16 %v355
        %v2825 = vpack.c.b16 %v2824, %v2823
        %v2827 = vsel %vm1555, %v2813, 0
        %vm2829 = vcmask 1045504
        %v2831 = vsel %vm2829, %v2825, 0
        %2833 = vmatprep.subr.bf16.mxu0 0
        %2834 = vmatpush1.bf16.msra.mxu0 %v2831
        %2835 = vmatprep.subr.bf16.mxu0 0
        %2836 = vmatpush1.bf16.msra.mxu0 0
        %2837 = vmatprep.subr.bf16.mxu0 0
        %2838 = vmatpush1.bf16.msra.mxu0 0
        %2839 = vmatprep.subr.bf16.mxu0 0
        %2840 = vmatpush1.bf16.msra.mxu0 0
        %2841 = vmatprep.subr.bf16.mxu0 0
        %2842 = vmatpush1.bf16.msra.mxu0 0
        %2843 = vmatprep.subr.bf16.mxu0 0
        %2844 = vmatpush1.bf16.msra.mxu0 0
        %2845 = vmatprep.subr.bf16.mxu0 0
        %2846 = vmatpush1.bf16.msra.mxu0 0
        %2847 = vmatprep.subr.bf16.mxu0 0
        %2848 = vmatpush1.bf16.msra.mxu0 0
        %2849 = vmatprep.subr.bf16.mxu0 0
        %2850 = vmatpush1.bf16.msra.mxu0 0
        %2851 = vmatprep.subr.bf16.mxu0 0
        %2852 = vmatpush1.bf16.msra.mxu0 0
        %2853 = vmatprep.subr.bf16.mxu0 0
        %2854 = vmatpush1.bf16.msra.mxu0 0
        %2855 = vmatprep.subr.bf16.mxu0 0
        %2856 = vmatpush1.bf16.msra.mxu0 0
        %2857 = vmatprep.subr.bf16.mxu0 0
        %2858 = vmatpush1.bf16.msra.mxu0 0
        %2859 = vmatprep.subr.bf16.mxu0 0
        %2860 = vmatpush1.bf16.msra.mxu0 0
        %2861 = vmatprep.subr.bf16.mxu0 0
        %2862 = vmatpush1.bf16.msra.mxu0 0
        %2863 = vmatprep.subr.bf16.mxu0 0
        %2864 = vmatpush1.bf16.msra.mxu0 0
        %2865 = vmatprep.mubr.bf16.mxu0 0
        %2866 = vmatmul.mubr.bf16.gmra.mrb[0].mxu0 %v2827
        %v2867 = vpop.f32.mrb[0].mxu0
        %v2868 = vadd.f32 0.0, %v2867
        %v2869 = vpop.f32.mrb[0].mxu0
        %v2870 = vpop.f32.mrb[0].mxu0
        %v2871 = vadd.f32 0.0, %v2870
        %v2872 = vpop.f32.mrb[0].mxu0
        %2873 = vdwg.mxu0
        %v2876 = vunpack.c.l.b16 %v356
        %v2877 = vunpack.c.l.b16 %v357
        %v2878 = vpack.c.b16 %v2877, %v2876
        %v2880 = vsel %vm1555, %v2814, 0
        %v2883 = vsel %vm2829, %v2878, 0
        %2885 = vmatprep.subr.bf16.mxu0 0
        %2886 = vmatpush1.bf16.msra.mxu0 %v2883
        %2887 = vmatprep.subr.bf16.mxu0 0
        %2888 = vmatpush1.bf16.msra.mxu0 0
        %2889 = vmatprep.subr.bf16.mxu0 0
        %2890 = vmatpush1.bf16.msra.mxu0 0
        %2891 = vmatprep.subr.bf16.mxu0 0
        %2892 = vmatpush1.bf16.msra.mxu0 0
        %2893 = vmatprep.subr.bf16.mxu0 0
        %2894 = vmatpush1.bf16.msra.mxu0 0
        %2895 = vmatprep.subr.bf16.mxu0 0
        %2896 = vmatpush1.bf16.msra.mxu0 0
        %2897 = vmatprep.subr.bf16.mxu0 0
        %2898 = vmatpush1.bf16.msra.mxu0 0
        %2899 = vmatprep.subr.bf16.mxu0 0
        %2900 = vmatpush1.bf16.msra.mxu0 0
        %2901 = vmatprep.subr.bf16.mxu0 0
        %2902 = vmatpush1.bf16.msra.mxu0 0
        %2903 = vmatprep.subr.bf16.mxu0 0
        %2904 = vmatpush1.bf16.msra.mxu0 0
        %2905 = vmatprep.subr.bf16.mxu0 0
        %2906 = vmatpush1.bf16.msra.mxu0 0
        %2907 = vmatprep.subr.bf16.mxu0 0
        %2908 = vmatpush1.bf16.msra.mxu0 0
        %2909 = vmatprep.subr.bf16.mxu0 0
        %2910 = vmatpush1.bf16.msra.mxu0 0
        %2911 = vmatprep.subr.bf16.mxu0 0
        %2912 = vmatpush1.bf16.msra.mxu0 0
        %2913 = vmatprep.subr.bf16.mxu0 0
        %2914 = vmatpush1.bf16.msra.mxu0 0
        %2915 = vmatprep.subr.bf16.mxu0 0
        %2916 = vmatpush1.bf16.msra.mxu0 0
        %2917 = vmatprep.mubr.bf16.mxu0 0
        %2918 = vmatmul.mubr.bf16.gmra.mrb[0].mxu0 %v2880
        %v2919 = vpop.f32.mrb[0].mxu0
        %v2920 = vadd.f32 0.0, %v2919
        %v2921 = vpop.f32.mrb[0].mxu0
        %v2922 = vpop.f32.mrb[0].mxu0
        %v2923 = vadd.f32 0.0, %v2922
        %v2924 = vpop.f32.mrb[0].mxu0
        %2925 = vdwg.mxu0
        %v2928 = vunpack.c.l.b16 %v358
        %v2929 = vunpack.c.l.b16 %v359
        %v2930 = vpack.c.b16 %v2929, %v2928
        %v2932 = vsel %vm1555, %v2815, 0
        %v2935 = vsel %vm2829, %v2930, 0
        %2937 = vmatprep.subr.bf16.mxu0 0
        %2938 = vmatpush1.bf16.msra.mxu0 %v2935
        %2939 = vmatprep.subr.bf16.mxu0 0
        %2940 = vmatpush1.bf16.msra.mxu0 0
        %2941 = vmatprep.subr.bf16.mxu0 0
        %2942 = vmatpush1.bf16.msra.mxu0 0
        %2943 = vmatprep.subr.bf16.mxu0 0
        %2944 = vmatpush1.bf16.msra.mxu0 0
        %2945 = vmatprep.subr.bf16.mxu0 0
        %2946 = vmatpush1.bf16.msra.mxu0 0
        %2947 = vmatprep.subr.bf16.mxu0 0
        %2948 = vmatpush1.bf16.msra.mxu0 0
        %2949 = vmatprep.subr.bf16.mxu0 0
        %2950 = vmatpush1.bf16.msra.mxu0 0
        %2951 = vmatprep.subr.bf16.mxu0 0
        %2952 = vmatpush1.bf16.msra.mxu0 0
        %2953 = vmatprep.subr.bf16.mxu0 0
        %2954 = vmatpush1.bf16.msra.mxu0 0
        %2955 = vmatprep.subr.bf16.mxu0 0
        %2956 = vmatpush1.bf16.msra.mxu0 0
        %2957 = vmatprep.subr.bf16.mxu0 0
        %2958 = vmatpush1.bf16.msra.mxu0 0
        %2959 = vmatprep.subr.bf16.mxu0 0
        %2960 = vmatpush1.bf16.msra.mxu0 0
        %2961 = vmatprep.subr.bf16.mxu0 0
        %2962 = vmatpush1.bf16.msra.mxu0 0
        %2963 = vmatprep.subr.bf16.mxu0 0
        %2964 = vmatpush1.bf16.msra.mxu0 0
        %2965 = vmatprep.subr.bf16.mxu0 0
        %2966 = vmatpush1.bf16.msra.mxu0 0
        %2967 = vmatprep.subr.bf16.mxu0 0
        %2968 = vmatpush1.bf16.msra.mxu0 0
        %2969 = vmatprep.mubr.bf16.mxu0 0
        %2970 = vmatmul.mubr.bf16.gmra.mrb[0].mxu0 %v2932
        %v2971 = vpop.f32.mrb[0].mxu0
        %v2972 = vadd.f32 0.0, %v2971
        %v2973 = vpop.f32.mrb[0].mxu0
        %v2974 = vpop.f32.mrb[0].mxu0
        %v2975 = vadd.f32 0.0, %v2974
        %v2976 = vpop.f32.mrb[0].mxu0
        %2977 = vdwg.mxu0
        %v2980 = vunpack.c.l.b16 %v360
        %v2981 = vunpack.c.l.b16 %v361
        %v2982 = vpack.c.b16 %v2981, %v2980
        %v2984 = vsel %vm1555, %v2816, 0
        %v2987 = vsel %vm2829, %v2982, 0
        %2989 = vmatprep.subr.bf16.mxu0 0
        %2990 = vmatpush1.bf16.msra.mxu0 %v2987
        %2991 = vmatprep.subr.bf16.mxu0 0
        %2992 = vmatpush1.bf16.msra.mxu0 0
        %2993 = vmatprep.subr.bf16.mxu0 0
        %2994 = vmatpush1.bf16.msra.mxu0 0
        %2995 = vmatprep.subr.bf16.mxu0 0
        %2996 = vmatpush1.bf16.msra.mxu0 0
        %2997 = vmatprep.subr.bf16.mxu0 0
        %2998 = vmatpush1.bf16.msra.mxu0 0
        %2999 = vmatprep.subr.bf16.mxu0 0
        %3000 = vmatpush1.bf16.msra.mxu0 0
        %3001 = vmatprep.subr.bf16.mxu0 0
        %3002 = vmatpush1.bf16.msra.mxu0 0
        %3003 = vmatprep.subr.bf16.mxu0 0
        %3004 = vmatpush1.bf16.msra.mxu0 0
        %3005 = vmatprep.subr.bf16.mxu0 0
        %3006 = vmatpush1.bf16.msra.mxu0 0
        %3007 = vmatprep.subr.bf16.mxu0 0
        %3008 = vmatpush1.bf16.msra.mxu0 0
        %3009 = vmatprep.subr.bf16.mxu0 0
        %3010 = vmatpush1.bf16.msra.mxu0 0
        %3011 = vmatprep.subr.bf16.mxu0 0
        %3012 = vmatpush1.bf16.msra.mxu0 0
        %3013 = vmatprep.subr.bf16.mxu0 0
        %3014 = vmatpush1.bf16.msra.mxu0 0
        %3015 = vmatprep.subr.bf16.mxu0 0
        %3016 = vmatpush1.bf16.msra.mxu0 0
        %3017 = vmatprep.subr.bf16.mxu0 0
        %3018 = vmatpush1.bf16.msra.mxu0 0
        %3019 = vmatprep.subr.bf16.mxu0 0
        %3020 = vmatpush1.bf16.msra.mxu0 0
        %3021 = vmatprep.mubr.bf16.mxu0 0
        %3022 = vmatmul.mubr.bf16.gmra.mrb[0].mxu0 %v2984
        %v3023 = vpop.f32.mrb[0].mxu0
        %v3024 = vadd.f32 0.0, %v3023
        %v3025 = vpop.f32.mrb[0].mxu0
        %v3026 = vpop.f32.mrb[0].mxu0
        %v3027 = vadd.f32 0.0, %v3026
        %v3028 = vpop.f32.mrb[0].mxu0
        %3029 = vdwg.mxu0
        %v3032 = vunpack.c.l.b16 %v362
        %v3033 = vunpack.c.l.b16 %v363
        %v3034 = vpack.c.b16 %v3033, %v3032
        %v3036 = vsel %vm1555, %v2817, 0
        %v3039 = vsel %vm2829, %v3034, 0
        %3041 = vmatprep.subr.bf16.mxu0 0
        %3042 = vmatpush1.bf16.msra.mxu0 %v3039
        %3043 = vmatprep.subr.bf16.mxu0 0
        %3044 = vmatpush1.bf16.msra.mxu0 0
        %3045 = vmatprep.subr.bf16.mxu0 0
        %3046 = vmatpush1.bf16.msra.mxu0 0
        %3047 = vmatprep.subr.bf16.mxu0 0
        %3048 = vmatpush1.bf16.msra.mxu0 0
        %3049 = vmatprep.subr.bf16.mxu0 0
        %3050 = vmatpush1.bf16.msra.mxu0 0
        %3051 = vmatprep.subr.bf16.mxu0 0
        %3052 = vmatpush1.bf16.msra.mxu0 0
        %3053 = vmatprep.subr.bf16.mxu0 0
        %3054 = vmatpush1.bf16.msra.mxu0 0
        %3055 = vmatprep.subr.bf16.mxu0 0
        %3056 = vmatpush1.bf16.msra.mxu0 0
        %3057 = vmatprep.subr.bf16.mxu0 0
        %3058 = vmatpush1.bf16.msra.mxu0 0
        %3059 = vmatprep.subr.bf16.mxu0 0
        %3060 = vmatpush1.bf16.msra.mxu0 0
        %3061 = vmatprep.subr.bf16.mxu0 0
        %3062 = vmatpush1.bf16.msra.mxu0 0
        %3063 = vmatprep.subr.bf16.mxu0 0
        %3064 = vmatpush1.bf16.msra.mxu0 0
        %3065 = vmatprep.subr.bf16.mxu0 0
        %3066 = vmatpush1.bf16.msra.mxu0 0
        %3067 = vmatprep.subr.bf16.mxu0 0
        %3068 = vmatpush1.bf16.msra.mxu0 0
        %3069 = vmatprep.subr.bf16.mxu0 0
        %3070 = vmatpush1.bf16.msra.mxu0 0
        %3071 = vmatprep.subr.bf16.mxu0 0
        %3072 = vmatpush1.bf16.msra.mxu0 0
        %3073 = vmatprep.mubr.bf16.mxu0 0
        %3074 = vmatmul.mubr.bf16.gmra.mrb[0].mxu0 %v3036
        %v3075 = vpop.f32.mrb[0].mxu0
        %v3076 = vadd.f32 0.0, %v3075
        %v3077 = vpop.f32.mrb[0].mxu0
        %v3078 = vpop.f32.mrb[0].mxu0
        %v3079 = vadd.f32 0.0, %v3078
        %v3080 = vpop.f32.mrb[0].mxu0
        %3081 = vdwg.mxu0
        %v3084 = vunpack.c.l.b16 %v364
        %v3085 = vunpack.c.l.b16 %v365
        %v3086 = vpack.c.b16 %v3085, %v3084
        %v3088 = vsel %vm1555, %v2818, 0
        %v3091 = vsel %vm2829, %v3086, 0
        %3093 = vmatprep.subr.bf16.mxu0 0
        %3094 = vmatpush1.bf16.msra.mxu0 %v3091
        %3095 = vmatprep.subr.bf16.mxu0 0
        %3096 = vmatpush1.bf16.msra.mxu0 0
        %3097 = vmatprep.subr.bf16.mxu0 0
        %3098 = vmatpush1.bf16.msra.mxu0 0
        %3099 = vmatprep.subr.bf16.mxu0 0
        %3100 = vmatpush1.bf16.msra.mxu0 0
        %3101 = vmatprep.subr.bf16.mxu0 0
        %3102 = vmatpush1.bf16.msra.mxu0 0
        %3103 = vmatprep.subr.bf16.mxu0 0
        %3104 = vmatpush1.bf16.msra.mxu0 0
        %3105 = vmatprep.subr.bf16.mxu0 0
        %3106 = vmatpush1.bf16.msra.mxu0 0
        %3107 = vmatprep.subr.bf16.mxu0 0
        %3108 = vmatpush1.bf16.msra.mxu0 0
        %3109 = vmatprep.subr.bf16.mxu0 0
        %3110 = vmatpush1.bf16.msra.mxu0 0
        %3111 = vmatprep.subr.bf16.mxu0 0
        %3112 = vmatpush1.bf16.msra.mxu0 0
        %3113 = vmatprep.subr.bf16.mxu0 0
        %3114 = vmatpush1.bf16.msra.mxu0 0
        %3115 = vmatprep.subr.bf16.mxu0 0
        %3116 = vmatpush1.bf16.msra.mxu0 0
        %3117 = vmatprep.subr.bf16.mxu0 0
        %3118 = vmatpush1.bf16.msra.mxu0 0
        %3119 = vmatprep.subr.bf16.mxu0 0
        %3120 = vmatpush1.bf16.msra.mxu0 0
        %3121 = vmatprep.subr.bf16.mxu0 0
        %3122 = vmatpush1.bf16.msra.mxu0 0
        %3123 = vmatprep.subr.bf16.mxu0 0
        %3124 = vmatpush1.bf16.msra.mxu0 0
        %3125 = vmatprep.mubr.bf16.mxu0 0
        %3126 = vmatmul.mubr.bf16.gmra.mrb[0].mxu0 %v3088
        %v3127 = vpop.f32.mrb[0].mxu0
        %v3128 = vadd.f32 0.0, %v3127
        %v3129 = vpop.f32.mrb[0].mxu0
        %v3130 = vpop.f32.mrb[0].mxu0
        %v3131 = vadd.f32 0.0, %v3130
        %v3132 = vpop.f32.mrb[0].mxu0
        %3133 = vdwg.mxu0
        %v3136 = vunpack.c.l.b16 %v366
        %v3137 = vunpack.c.l.b16 %v367
        %v3138 = vpack.c.b16 %v3137, %v3136
        %v3140 = vsel %vm1555, %v2819, 0
        %v3143 = vsel %vm2829, %v3138, 0
        %3145 = vmatprep.subr.bf16.mxu0 0
        %3146 = vmatpush1.bf16.msra.mxu0 %v3143
        %3147 = vmatprep.subr.bf16.mxu0 0
        %3148 = vmatpush1.bf16.msra.mxu0 0
        %3149 = vmatprep.subr.bf16.mxu0 0
        %3150 = vmatpush1.bf16.msra.mxu0 0
        %3151 = vmatprep.subr.bf16.mxu0 0
        %3152 = vmatpush1.bf16.msra.mxu0 0
        %3153 = vmatprep.subr.bf16.mxu0 0
        %3154 = vmatpush1.bf16.msra.mxu0 0
        %3155 = vmatprep.subr.bf16.mxu0 0
        %3156 = vmatpush1.bf16.msra.mxu0 0
        %3157 = vmatprep.subr.bf16.mxu0 0
        %3158 = vmatpush1.bf16.msra.mxu0 0
        %3159 = vmatprep.subr.bf16.mxu0 0
        %3160 = vmatpush1.bf16.msra.mxu0 0
        %3161 = vmatprep.subr.bf16.mxu0 0
        %3162 = vmatpush1.bf16.msra.mxu0 0
        %3163 = vmatprep.subr.bf16.mxu0 0
        %3164 = vmatpush1.bf16.msra.mxu0 0
        %3165 = vmatprep.subr.bf16.mxu0 0
        %3166 = vmatpush1.bf16.msra.mxu0 0
        %3167 = vmatprep.subr.bf16.mxu0 0
        %3168 = vmatpush1.bf16.msra.mxu0 0
        %3169 = vmatprep.subr.bf16.mxu0 0
        %3170 = vmatpush1.bf16.msra.mxu0 0
        %3171 = vmatprep.subr.bf16.mxu0 0
        %3172 = vmatpush1.bf16.msra.mxu0 0
        %3173 = vmatprep.subr.bf16.mxu0 0
        %3174 = vmatpush1.bf16.msra.mxu0 0
        %3175 = vmatprep.subr.bf16.mxu0 0
        %3176 = vmatpush1.bf16.msra.mxu0 0
        %3177 = vmatprep.mubr.bf16.mxu0 0
        %3178 = vmatmul.mubr.bf16.gmra.mrb[0].mxu0 %v3140
        %v3179 = vpop.f32.mrb[0].mxu0
        %v3180 = vadd.f32 0.0, %v3179
        %v3181 = vpop.f32.mrb[0].mxu0
        %v3182 = vpop.f32.mrb[0].mxu0
        %v3183 = vadd.f32 0.0, %v3182
        %v3184 = vpop.f32.mrb[0].mxu0
        %3185 = vdwg.mxu0
        %v3188 = vunpack.c.l.b16 %v368
        %v3189 = vunpack.c.l.b16 %v369
        %v3190 = vpack.c.b16 %v3189, %v3188
        %v3192 = vsel %vm1555, %v2820, 0
        %v3195 = vsel %vm2829, %v3190, 0
        %3197 = vmatprep.subr.bf16.mxu0 0
        %3198 = vmatpush1.bf16.msra.mxu0 %v3195
        %3199 = vmatprep.subr.bf16.mxu0 0
        %3200 = vmatpush1.bf16.msra.mxu0 0
        %3201 = vmatprep.subr.bf16.mxu0 0
        %3202 = vmatpush1.bf16.msra.mxu0 0
        %3203 = vmatprep.subr.bf16.mxu0 0
        %3204 = vmatpush1.bf16.msra.mxu0 0
        %3205 = vmatprep.subr.bf16.mxu0 0
        %3206 = vmatpush1.bf16.msra.mxu0 0
        %3207 = vmatprep.subr.bf16.mxu0 0
        %3208 = vmatpush1.bf16.msra.mxu0 0
        %3209 = vmatprep.subr.bf16.mxu0 0
        %3210 = vmatpush1.bf16.msra.mxu0 0
        %3211 = vmatprep.subr.bf16.mxu0 0
        %3212 = vmatpush1.bf16.msra.mxu0 0
        %3213 = vmatprep.subr.bf16.mxu0 0
        %3214 = vmatpush1.bf16.msra.mxu0 0
        %3215 = vmatprep.subr.bf16.mxu0 0
        %3216 = vmatpush1.bf16.msra.mxu0 0
        %3217 = vmatprep.subr.bf16.mxu0 0
        %3218 = vmatpush1.bf16.msra.mxu0 0
        %3219 = vmatprep.subr.bf16.mxu0 0
        %3220 = vmatpush1.bf16.msra.mxu0 0
        %3221 = vmatprep.subr.bf16.mxu0 0
        %3222 = vmatpush1.bf16.msra.mxu0 0
        %3223 = vmatprep.subr.bf16.mxu0 0
        %3224 = vmatpush1.bf16.msra.mxu0 0
        %3225 = vmatprep.subr.bf16.mxu0 0
        %3226 = vmatpush1.bf16.msra.mxu0 0
        %3227 = vmatprep.subr.bf16.mxu0 0
        %3228 = vmatpush1.bf16.msra.mxu0 0
        %3229 = vmatprep.mubr.bf16.mxu0 0
        %3230 = vmatmul.mubr.bf16.gmra.mrb[0].mxu0 %v3192
        %v3231 = vpop.f32.mrb[0].mxu0
        %v3232 = vadd.f32 0.0, %v3231
        %v3233 = vpop.f32.mrb[0].mxu0
        %v3234 = vpop.f32.mrb[0].mxu0
        %v3235 = vadd.f32 0.0, %v3234
        %v3236 = vpop.f32.mrb[0].mxu0
        %3237 = vdwg.mxu0
        %v3238 = vsel %vm380, %v2868, 0.0
        %v3239 = vsel %vm380, %v2920, 0.0
        %v3240 = vadd.f32 %v3238, %v3239
        %v3241 = vsel %vm380, %v2972, 0.0
        %v3242 = vadd.f32 %v3240, %v3241
        %v3243 = vsel %vm380, %v3024, 0.0
        %v3244 = vadd.f32 %v3242, %v3243
        %v3245 = vsel %vm380, %v3076, 0.0
        %v3246 = vadd.f32 %v3244, %v3245
        %v3247 = vsel %vm380, %v3128, 0.0
        %v3248 = vadd.f32 %v3246, %v3247
        %v3249 = vsel %vm380, %v3180, 0.0
        %v3250 = vadd.f32 %v3248, %v3249
        %v3251 = vsel %vm380, %v3232, 0.0
        %v3252 = vadd.f32 %v3250, %v3251
        %v3253 = vsel %vm380, %v2871, 0.0
        %v3254 = vsel %vm380, %v2923, 0.0
        %v3255 = vadd.f32 %v3253, %v3254
        %v3256 = vsel %vm380, %v2975, 0.0
        %v3257 = vadd.f32 %v3255, %v3256
        %v3258 = vsel %vm380, %v3027, 0.0
        %v3259 = vadd.f32 %v3257, %v3258
        %v3260 = vsel %vm380, %v3079, 0.0
        %v3261 = vadd.f32 %v3259, %v3260
        %v3262 = vsel %vm380, %v3131, 0.0
        %v3263 = vadd.f32 %v3261, %v3262
        %v3264 = vsel %vm380, %v3183, 0.0
        %v3265 = vadd.f32 %v3263, %v3264
        %v3266 = vsel %vm380, %v3235, 0.0
        %v3267 = vadd.f32 %v3265, %v3266
        %3268 = vst.msk [vmem:[%s277] sm:$0xff] %vm380, %v3252
        %3269 = vst.msk [vmem:[%s277 + $0x8] sm:$0xff] %vm380, %v3267
        %s3270 = sand.u32 %s157, 1
        %s3271 = scalar_lea.sflag [#allocation3], %s3270
        %s3272 = sand.u32 %s157, 1
        %s3273 = smul.addr %s3272, 16
        %s3274 = scalar_lea.vmem [#allocation2], %s3273
        // Predicated region
        $region41: #{self_attention.1} parent=39 // pred_check
          %p3275 = pneg %p167
        $region42: #{self_attention.1} parent=39 // pred_check_branch
          %3277 = sbr.rel (%p3275) target = $region44
        $region43: #{self_attention.1} parent=39 // pred_region
          %s3279 = ssub.s32 256, 256
          %3280 = vsyncadd %s3271, %s3279
          %s3281 = smul.addr %s19, 2
          %s3282 = smul.addr %s3281, 128
          %s3283 = scalar_lea.hbm %s5, %s3282
          %s3284 = sshll.u32 %s3274, 4
          %s3285 = int_to_ptr.vmem [resolvable:$true] %s3284
          %3290 = dma.vmem_to_hbm [thread:$0]  %s3285, 256, %s3283, %s3271, 128, 128, 8
        $region44: #{self_attention.1} parent=39 // pred_fallthru
          _
      $region40: #{self_attention.1} parent=5 // pred_fallthru
        _
      %p3291 = scmp.le.s32.totalorder 2, %s14
      // Predicated region
      $region45: #{self_attention.1} parent=5 // pred_check
        %p3292 = pneg %p3291
      $region46: #{self_attention.1} parent=5 // pred_check_branch
        %3294 = sbr.rel (%p3292) target = $region48
      $region47: #{self_attention.1} parent=5 // pred_region
        %s3295 = ssub.s32 %s14, 2
        // Predicated region
        $region49: #{self_attention.1} parent=47 // pred_check
          %p3296 = pneg %p173
        $region50: #{self_attention.1} parent=47 // pred_check_branch
          %3298 = sbr.rel (%p3296) target = $region52
        $region51: #{self_attention.1} parent=47 // pred_region
          %s3299 = sand.u32 %s158, 1
          %s3300 = scalar_lea.sflag [#allocation3], %s3299
          %s3301 = sand.u32 %s158, 1
          %s3302 = smul.addr %s3301, 16
          %s3303 = scalar_lea.vmem [#allocation2], %s3302
          %3304 = dma.done %s3300, 256
        $region52: #{self_attention.1} parent=47 // pred_fallthru
          _
      $region48: #{self_attention.1} parent=5 // pred_fallthru
        _
    $region6: #{self_attention.1} parent=1 // loop_footer
      %s18 = sadd.s32 1, %s14
    $region7: #{self_attention.1} parent=1 // loop_footer_branch
      %13 = sbr.rel target = $region3
    $region8: #{self_attention.1} parent=1 // loop_exit
      _
    %3305 = vsyncpa [#allocation3], 1
    %s3306 = scalar_lea.sflag [#allocation3], 1
    %3307 = vsyncpa %s3306, 1

</llo_original>
